<compile_context>
chip_gen: v7x
topology: tpu7x:2x2x1
jax: 0.10.0
libtpu: 0.0.40
codegen_flags: <defaults>
</compile_context>

<pallas_src>
import math
from functools import partial

import jax
import jax.numpy as jnp
from jax import lax
from jax.experimental import pallas as pl
from jax.experimental.pallas import tpu as pltpu

COMPUTE_DTYPE = jnp.bfloat16   # MXU operand dtype; accumulation stays f32
NEG_INF = -1e9                 # matches masked_fill(mask, float('-1e9'))
LN_EPS = 1e-5                  # nn.LayerNorm default eps


# ---------------------------------------------------------------------------
# Optional single-buffering of constant (weight) blocks
# ---------------------------------------------------------------------------
def _single_buffer_mode():
    """Return pl.Buffered(1) if this Pallas supports it (probed), else None."""
    if not hasattr(pl, "Buffered"):
        return None
    try:
        mode = pl.Buffered(1)

        def k(x_ref, w_ref, o_ref):
            o_ref[...] = x_ref[...] + w_ref[...]

        x = jnp.ones((16, 128), jnp.float32)
        w = jnp.ones((8, 128), jnp.float32)
        out = pl.pallas_call(
            k,
            out_shape=jax.ShapeDtypeStruct((16, 128), jnp.float32),
            grid=(2,),
            in_specs=[pl.BlockSpec((8, 128), lambda i: (i, 0)),
                      pl.BlockSpec((8, 128), lambda i: (0, 0),
                                   pipeline_mode=mode)],
            out_specs=pl.BlockSpec((8, 128), lambda i: (i, 0)),
        )(x, w)
        jax.block_until_ready(out)
        if not bool(jnp.allclose(out, 2.0)):
            return None
        return mode
    except Exception:
        return None


def _const_spec(shape, pipeline_mode=None):
    """BlockSpec for an operand identical at every grid step (1-D grid)."""
    n = len(shape)
    kwargs = {}
    if pipeline_mode is not None:
        kwargs["pipeline_mode"] = pipeline_mode
    return pl.BlockSpec(shape, lambda i: (0,) * n, **kwargs)


def _row_tile(n_rows):
    for t in (256, 128):
        if n_rows % t == 0:
            return t
    return n_rows   # small inputs: single block equal to the full dim


# ---------------------------------------------------------------------------
# Kernel math
# ---------------------------------------------------------------------------
def _attn_math(x, y, mask, wq, bq, wk, bk, wv, bv, wo, bo, g, be, out_dtype):
    """Attention(x, y, y[, mask]) -> + residual(x) -> LayerNorm, one batch elem."""
    xb = x.astype(COMPUTE_DTYPE)
    yb = y.astype(COMPUTE_DTYPE)

    # Linear projections: weights are pre-transposed [in, out] bf16 (no .T here).
    q = jnp.dot(xb, wq, preferred_element_type=jnp.float32) + bq
    k = jnp.dot(yb, wk, preferred_element_type=jnp.float32) + bk
    v = jnp.dot(yb, wv, preferred_element_type=jnp.float32) + bv

    # similarity = Q @ K^T : transpose folded into the MXU operand orientation.
    s = lax.dot_general(q.astype(COMPUTE_DTYPE), k.astype(COMPUTE_DTYPE),
                        dimension_numbers=(((1,), (1,)), ((), ())),
                        preferred_element_type=jnp.float32)       # [Sq, Sk]
    if mask is not None:
        s = jnp.where(mask != 0.0, NEG_INF, s)

    # softmax in f32 (VPU/EUP); normalization deferred past P @ V.
    m = jnp.max(s, axis=-1, keepdims=True)
    p = jnp.exp(s - m)
    denom = jnp.sum(p, axis=-1, keepdims=True)
    attn = jnp.dot(p.astype(COMPUTE_DTYPE), v.astype(COMPUTE_DTYPE),
                   preferred_element_type=jnp.float32)            # [Sq, E]
    attn = attn * pl.reciprocal(denom, approx=True)

    out = jnp.dot(attn.astype(COMPUTE_DTYPE), wo,
                  preferred_element_type=jnp.float32) + bo

    # residual + LayerNorm (x = norm(attn_out + x))
    h = out + x
    mu = jnp.mean(h, axis=-1, keepdims=True)
    var = jnp.mean(jnp.square(h - mu), axis=-1, keepdims=True)
    hn = (h - mu) * lax.rsqrt(var + LN_EPS)
    return (hn * g + be).astype(out_dtype)


def _attn_block_masked_kernel(x_ref, y_ref, mask_ref,
                              wq_ref, bq_ref, wk_ref, bk_ref, wv_ref, bv_ref,
                              wo_ref, bo_ref, g_ref, be_ref, o_ref):
    o_ref[0] = _attn_math(x_ref[0], y_ref[0], mask_ref[0],
                          wq_ref[...], bq_ref[...], wk_ref[...], bk_ref[...],
                          wv_ref[...], bv_ref[...], wo_ref[...], bo_ref[...],
                          g_ref[...], be_ref[...], o_ref.dtype)


def _attn_block_nomask_kernel(x_ref, y_ref,
                              wq_ref, bq_ref, wk_ref, bk_ref, wv_ref, bv_ref,
                              wo_ref, bo_ref, g_ref, be_ref, o_ref):
    o_ref[0] = _attn_math(x_ref[0], y_ref[0], None,
                          wq_ref[...], bq_ref[...], wk_ref[...], bk_ref[...],
                          wv_ref[...], bv_ref[...], wo_ref[...], bo_ref[...],
                          g_ref[...], be_ref[...], o_ref.dtype)


def _ffn_block_kernel(x_ref, w1_ref, b1_ref, w2_ref, b2_ref, g_ref, be_ref, o_ref):
    """relu(x@W1+b1)@W2+b2 -> + residual(x) -> LayerNorm, over a row tile."""
    x = x_ref[...]                                                # [TR, E] f32
    h = jnp.dot(x.astype(COMPUTE_DTYPE), w1_ref[...],
                preferred_element_type=jnp.float32) + b1_ref[...]
    h = jnp.maximum(h, 0.0)
    o = jnp.dot(h.astype(COMPUTE_DTYPE), w2_ref[...],
                preferred_element_type=jnp.float32) + b2_ref[...]
    r = o + x
    mu = jnp.mean(r, axis=-1, keepdims=True)
    var = jnp.mean(jnp.square(r - mu), axis=-1, keepdims=True)
    rn = (r - mu) * lax.rsqrt(var + LN_EPS)
    o_ref[...] = (rn * g_ref[...] + be_ref[...]).astype(o_ref.dtype)


def _linear_kernel(x_ref, w_ref, b_ref, o_ref):
    """Final FC: x @ W + b over a row tile (W pre-transposed to [in, out])."""
    o_ref[...] = (jnp.dot(x_ref[...].astype(COMPUTE_DTYPE), w_ref[...],
                          preferred_element_type=jnp.float32)
                  + b_ref[...]).astype(o_ref.dtype)


# ---------------------------------------------------------------------------
# Pallas wrappers
# ---------------------------------------------------------------------------
def attn_block(x, y, mask_f32, kp, pipeline_mode=None):
    """x:[B,Sq,E] (query + residual), y:[B,Sk,E], mask_f32:[B,Sq,Sk] or None."""
    B, Sq, E = x.shape
    Sk = y.shape[1]

    seq_q = pl.BlockSpec((1, Sq, E), lambda b: (b, 0, 0))
    seq_k = pl.BlockSpec((1, Sk, E), lambda b: (b, 0, 0))
    w_spec = _const_spec((E, E), pipeline_mode)
    v_spec = _const_spec((1, E), pipeline_mode)

    flops = B * (2 * Sq * E * E + 4 * Sk * E * E + 4 * Sq * Sk * E + 2 * Sq * E * E)
    mask_bytes = 0 if mask_f32 is None else int(mask_f32.size) * 4
    bytes_accessed = (int(x.size) * 4 + int(y.size) * 4 + mask_bytes
                      + 4 * E * E * 2 + 6 * E * 4 + B * Sq * E * 4)
    cost = pl.CostEstimate(flops=flops, transcendentals=B * Sq * Sk,
                           bytes_accessed=bytes_accessed)

    weight_args = (kp['q']['w'], kp['q']['b'], kp['k']['w'], kp['k']['b'],
                   kp['v']['w'], kp['v']['b'], kp['o']['w'], kp['o']['b'],
                   kp['norm']['g'], kp['norm']['b'])
    weight_specs = [w_spec, v_spec, w_spec, v_spec, w_spec, v_spec,
                    w_spec, v_spec, v_spec, v_spec]

    if mask_f32 is None:
        kernel = _attn_block_nomask_kernel
        in_specs = [seq_q, seq_k] + weight_specs
        args = (x, y) + weight_args
    else:
        kernel = _attn_block_masked_kernel
        m_spec = pl.BlockSpec((1, Sq, Sk), lambda b: (b, 0, 0))
        in_specs = [seq_q, seq_k, m_spec] + weight_specs
        args = (x, y, mask_f32) + weight_args

    return pl.pallas_call(
        kernel,
        out_shape=jax.ShapeDtypeStruct((B, Sq, E), x.dtype),
        grid_spec=pltpu.PrefetchScalarGridSpec(
            num_scalar_prefetch=0,
            grid=(B,),
            in_specs=in_specs,
            out_specs=seq_q),
        compiler_params=pltpu.CompilerParams(dimension_semantics=("parallel",)),
        cost_estimate=cost,
    )(*args)


def ffn_block(x, kp, pipeline_mode=None):
    """Fused ff1/relu/ff2 + residual + LayerNorm over flattened [B*S, E] rows."""
    B, S, E = x.shape
    F = kp['ff1']['w'].shape[1]
    R = B * S
    TR = _row_tile(R)
    x2 = x.reshape(R, E)   # pack batch rows into the M/sublane dim

    row_spec = pl.BlockSpec((TR, E), lambda i: (i, 0))
    cost = pl.CostEstimate(
        flops=4 * R * E * F, transcendentals=0,
        bytes_accessed=2 * R * E * 4 + 2 * E * F * 2 + (F + 3 * E) * 4)

    out = pl.pallas_call(
        _ffn_block_kernel,
        out_shape=jax.ShapeDtypeStruct((R, E), x.dtype),
        grid_spec=pltpu.PrefetchScalarGridSpec(
            num_scalar_prefetch=0,
            grid=(R // TR,),
            in_specs=[row_spec,
                      _const_spec((E, F), pipeline_mode), _const_spec((1, F), pipeline_mode),
                      _const_spec((F, E), pipeline_mode), _const_spec((1, E), pipeline_mode),
                      _const_spec((1, E), pipeline_mode), _const_spec((1, E), pipeline_mode)],
            out_specs=row_spec),
        compiler_params=pltpu.CompilerParams(dimension_semantics=("parallel",)),
        cost_estimate=cost,
    )(x2, kp['ff1']['w'], kp['ff1']['b'], kp['ff2']['w'], kp['ff2']['b'],
      kp['norm']['g'], kp['norm']['b'])
    return out.reshape(B, S, E)


def fc_out(x, kp, pipeline_mode=None):
    """Final vocabulary projection over flattened rows."""
    B, S, E = x.shape
    V = kp['w'].shape[1]
    R = B * S
    TR = _row_tile(R)
    x2 = x.reshape(R, E)

    cost = pl.CostEstimate(flops=2 * R * E * V, transcendentals=0,
                           bytes_accessed=R * E * 4 + E * V * 2 + V * 4 + R * V * 4)
    out = pl.pallas_call(
        _linear_kernel,
        out_shape=jax.ShapeDtypeStruct((R, V), x.dtype),
        grid_spec=pltpu.PrefetchScalarGridSpec(
            num_scalar_prefetch=0,
            grid=(R // TR,),
            in_specs=[pl.BlockSpec((TR, E), lambda i: (i, 0)),
                      _const_spec((E, V), pipeline_mode),
                      _const_spec((1, V), pipeline_mode)],
            out_specs=pl.BlockSpec((TR, V), lambda i: (i, 0))),
        compiler_params=pltpu.CompilerParams(dimension_semantics=("parallel",)),
        cost_estimate=cost,
    )(x2, kp['w'], kp['b'])
    return out.reshape(B, S, V)


# ---------------------------------------------------------------------------
# Parameters (PyTorch-default init) and kernel-ready preparation
# ---------------------------------------------------------------------------
def positional_encoding(embed_dim, max_seq_len):
    position = jnp.arange(max_seq_len, dtype=jnp.float32)[:, None]
    div_term = jnp.exp(jnp.arange(0, embed_dim, 2, dtype=jnp.float32)
                       * (-math.log(10000.0) / embed_dim))
    pe = jnp.zeros((max_seq_len, embed_dim), jnp.float32)
    pe = pe.at[:, 0::2].set(jnp.sin(position * div_term))
    pe = pe.at[:, 1::2].set(jnp.cos(position * div_term))
    return pe


def init_params(key, src_vocab, tgt_vocab, embed_dim, ff_dim,
                n_enc, n_dec, max_seq_len):
    state = [key]

    def nk():
        state[0], sub = jax.random.split(state[0])
        return sub

    def lin(in_f, out_f):
        bound = 1.0 / math.sqrt(in_f)
        return {'w': jax.random.uniform(nk(), (out_f, in_f), jnp.float32, -bound, bound),
                'b': jax.random.uniform(nk(), (out_f,), jnp.float32, -bound, bound)}

    def norm(d):
        return {'g': jnp.ones((d,), jnp.float32), 'b': jnp.zeros((d,), jnp.float32)}

    def attn():
        return {'q': lin(embed_dim, embed_dim), 'k': lin(embed_dim, embed_dim),
                'v': lin(embed_dim, embed_dim), 'o': lin(embed_dim, embed_dim)}

    encoders = [{'attn': attn(), 'norm1': norm(embed_dim),
                 'ff1': lin(embed_dim, ff_dim), 'ff2': lin(ff_dim, embed_dim),
                 'norm2': norm(embed_dim)} for _ in range(n_enc)]
    decoders = [{'attn': attn(), 'norm1': norm(embed_dim),
                 'cross': attn(), 'norm2': norm(embed_dim),
                 'ff1': lin(embed_dim, ff_dim), 'ff2': lin(ff_dim, embed_dim),
                 'norm3': norm(embed_dim)} for _ in range(n_dec)]
    return {'enc_emb': jax.random.normal(nk(), (src_vocab, embed_dim), jnp.float32),
            'dec_emb': jax.random.normal(nk(), (tgt_vocab, embed_dim), jnp.float32),
            'pe': positional_encoding(embed_dim, max_seq_len),
            'encoders': encoders, 'decoders': decoders,
            'fc': lin(embed_dim, tgt_vocab)}


def prepare_kernel_params(params):
    """Pre-transpose Linear weights to [in,out] bf16; biases/norms as (1,D) f32."""
    def lin(lp):
        return {'w': lp['w'].T.astype(COMPUTE_DTYPE),
                'b': lp['b'].reshape(1, -1).astype(jnp.float32)}

    def norm(np_):
        return {'g': np_['g'].reshape(1, -1).astype(jnp.float32),
                'b': np_['b'].reshape(1, -1).astype(jnp.float32)}

    def attn(ap, np_):
        return {'q': lin(ap['q']), 'k': lin(ap['k']), 'v': lin(ap['v']),
                'o': lin(ap['o']), 'norm': norm(np_)}

    def ffn(f1, f2, np_):
        return {'ff1': lin(f1), 'ff2': lin(f2), 'norm': norm(np_)}

    return {
        'encoders': [{'attn': attn(lp['attn'], lp['norm1']),
                      'ffn': ffn(lp['ff1'], lp['ff2'], lp['norm2'])}
                     for lp in params['encoders']],
        'decoders': [{'self': attn(lp['attn'], lp['norm1']),
                      'cross': attn(lp['cross'], lp['norm2']),
                      'ffn': ffn(lp['ff1'], lp['ff2'], lp['norm3'])}
                     for lp in params['decoders']],
        'fc': lin(params['fc']),
    }


# ---------------------------------------------------------------------------
# Full Transformer forward (Pallas) + shared embedding/mask plumbing
# ---------------------------------------------------------------------------
def _embed_and_masks(params, source_seq, target_seq, src_pad, tgt_pad):
    src_mask = (source_seq == src_pad)[:, None, :]                 # [B,1,Ss]
    tgt_pad_mask = (target_seq == tgt_pad)[:, None, :]             # [B,1,St]
    St = target_seq.shape[1]
    look_ahead = jnp.triu(jnp.ones((St, St), dtype=bool), k=1)
    combined = jnp.logical_or(tgt_pad_mask, look_ahead[None, :, :])  # [B,St,St]
    pe = params['pe']
    src_emb = params['enc_emb'][source_seq] + pe[:source_seq.shape[1]]
    tgt_emb = params['dec_emb'][target_seq] + pe[:St]
    return src_emb, tgt_emb, src_mask, combined


def transformer_forward(params, kparams, source_seq, target_seq,
                        src_pad, tgt_pad, pipeline_mode=None):
    src_emb, tgt_emb, src_mask, tgt_mask = _embed_and_masks(
        params, source_seq, target_seq, src_pad, tgt_pad)
    B, Ss, _ = src_emb.shape

    enc_mask = jnp.broadcast_to(src_mask, (B, Ss, Ss)).astype(jnp.float32)
    dec_self_mask = tgt_mask.astype(jnp.float32)                   # [B,St,St]

    x = src_emb
    for lp in kparams['encoders']:
        x = attn_block(x, x, enc_mask, lp['attn'], pipeline_mode)
        x = ffn_block(x, lp['ffn'], pipeline_mode)
    enc_out = x

    x = tgt_emb
    for lp in kparams['decoders']:
        x = attn_block(x, x, dec_self_mask, lp['self'], pipeline_mode)
        x = attn_block(x, enc_out, None, lp['cross'], pipeline_mode)   # mask=None
        x = ffn_block(x, lp['ffn'], pipeline_mode)

    return fc_out(x, kparams['fc'], pipeline_mode)


# ---------------------------------------------------------------------------
# Pure-JAX reference matching the PyTorch forward
# (compute_dtype=f32 -> exact semantics; bf16 -> matched-precision reference)
# ---------------------------------------------------------------------------
def transformer_reference(params, source_seq, target_seq, src_pad, tgt_pad,
                          compute_dtype=jnp.float32):
    cd = compute_dtype

    def linear(x, lp):
        return (jnp.dot(x.astype(cd), lp['w'].T.astype(cd),
                        preferred_element_type=jnp.float32) + lp['b'])

    def layernorm(x, np_):
        mu = jnp.mean(x, axis=-1, keepdims=True)
        var = jnp.mean(jnp.square(x - mu), axis=-1, keepdims=True)
        return (x - mu) * lax.rsqrt(var + LN_EPS) * np_['g'] + np_['b']

    def attention(x, y, mask, ap):
        q = linear(x, ap['q']); k = linear(y, ap['k']); v = linear(y, ap['v'])
        s = jnp.einsum('bqe,bke->bqk', q.astype(cd), k.astype(cd),
                       preferred_element_type=jnp.float32)
        if mask is not None:
            s = jnp.where(mask, NEG_INF, s)
        m = jnp.max(s, axis=-1, keepdims=True)
        p = jnp.exp(s - m)
        attn = jnp.einsum('bqk,bke->bqe', p.astype(cd), v.astype(cd),
                          preferred_element_type=jnp.float32)
        attn = attn / jnp.sum(p, axis=-1, keepdims=True)
        return linear(attn, ap['o'])

    src_emb, tgt_emb, src_mask, tgt_mask = _embed_and_masks(
        params, source_seq, target_seq, src_pad, tgt_pad)

    x = src_emb
    for lp in params['encoders']:
        x = layernorm(attention(x, x, src_mask, lp['attn']) + x, lp['norm1'])
        h = jnp.maximum(linear(x, lp['ff1']), 0.0)
        x = layernorm(linear(h, lp['ff2']) + x, lp['norm2'])
    enc_out = x

    x = tgt_emb
    for lp in params['decoders']:
        x = layernorm(attention(x, x, tgt_mask, lp['attn']) + x, lp['norm1'])
        x = layernorm(attention(x, enc_out, None, lp['cross']) + x, lp['norm2'])
        h = jnp.maximum(linear(x, lp['ff1']), 0.0)
        x = layernorm(linear(h, lp['ff2']) + x, lp['norm3'])
    return linear(x, params['fc'])


# ---------------------------------------------------------------------------
if __name__ == "__main__":
    # Small but lane-dense shapes (multiples of 128 where it matters).
    SRC_VOCAB, TGT_VOCAB = 256, 256
    EMBED_DIM, FF_DIM = 128, 256
    N_ENC, N_DEC = 2, 2
    MAX_SEQ_LEN = 64
    B, S_SRC, S_TGT = 2, 8, 8
    SRC_PAD, TGT_PAD = 0, 0

    key = jax.random.PRNGKey(0)
    k_params, k_src, k_tgt = jax.random.split(key, 3)
    params = init_params(k_params, SRC_VOCAB, TGT_VOCAB, EMBED_DIM, FF_DIM,
                         N_ENC, N_DEC, MAX_SEQ_LEN)
    kparams = prepare_kernel_params(params)

    source_seq = jax.random.randint(k_src, (B, S_SRC), 1, SRC_VOCAB)
    target_seq = jax.random.randint(k_tgt, (B, S_TGT), 1, TGT_VOCAB)
    # Make the padding masks non-trivial.
    source_seq = source_seq.at[0, -2:].set(SRC_PAD)
    target_seq = target_seq.at[1, -1].set(TGT_PAD)

    pipeline_mode = _single_buffer_mode()   # single-buffer constant weights if supported

    forward_jit = jax.jit(partial(transformer_forward,
                                  src_pad=SRC_PAD, tgt_pad=TGT_PAD,
                                  pipeline_mode=pipeline_mode))

    out = forward_jit(params, kparams, source_seq, target_seq)
    out = jax.block_until_ready(out)
    assert out.shape == (B, S_TGT, TGT_VOCAB)

    # Tight check vs a matched-precision (bf16 MXU operands, f32 accumulation) ref.
    ref_matched = transformer_reference(params, source_seq, target_seq,
                                        SRC_PAD, TGT_PAD, compute_dtype=COMPUTE_DTYPE)
    assert jnp.allclose(out, ref_matched, atol=2e-2, rtol=2e-2), \
        "mismatch vs matched-precision reference"

    # Looser semantic check vs the exact f32 (PyTorch-equivalent) forward; slack
    # accounts for bf16 matmul operands + approx reciprocal in the kernels.
    ref_f32 = transformer_reference(params, source_seq, target_seq,
                                    SRC_PAD, TGT_PAD, compute_dtype=jnp.float32)
    assert jnp.allclose(out, ref_f32, atol=0.25, rtol=0.25), \
        "mismatch vs f32 reference"

    print("KERNEL_OK")
</pallas_src>

<mosaic_0001>
module attributes {stable_mosaic.version = 11 : i64} {
  func.func @k(%arg0: i32, %arg1: memref<8x128xf32, #tpu.memory_space<vmem>>, %arg2: memref<8x128xf32, #tpu.memory_space<vmem>>, %arg3: memref<8x128xf32, #tpu.memory_space<vmem>>) attributes {dimension_semantics = [#tpu.dimension_semantics<arbitrary>], iteration_bounds = array<i64: 2>, scalar_prefetch = 0 : i64, scratch_operands = 0 : i64, tpu.core_type = #tpu.core_type<tc>, window_params = [{transform_indices = @transform_0, window_bounds = array<i64: 8, 128>}, {pipeline_mode = #tpu.pipeline_mode<synchronous>, transform_indices = @transform_1, window_bounds = array<i64: 8, 128>}, {transform_indices = @transform_2, window_bounds = array<i64: 8, 128>}]} {
    %c0 = arith.constant 0 : index
    %c0_0 = arith.constant 0 : index
    %0 = vector.load %arg1[%c0, %c0_0] : memref<8x128xf32, #tpu.memory_space<vmem>>, vector<8x128xf32>
    %c0_1 = arith.constant 0 : index
    %c0_2 = arith.constant 0 : index
    %1 = vector.load %arg2[%c0_1, %c0_2] : memref<8x128xf32, #tpu.memory_space<vmem>>, vector<8x128xf32>
    %2 = arith.addf %0, %1 : vector<8x128xf32>
    %c0_3 = arith.constant 0 : index
    %c0_4 = arith.constant 0 : index
    %3 = vector.load %arg3[%c0_3, %c0_4] : memref<8x128xf32, #tpu.memory_space<vmem>>, vector<8x128xf32>
    tpu.vector_store %arg3[%c0_3, %c0_4], %2 {strides = array<i32>} : memref<8x128xf32, #tpu.memory_space<vmem>>, vector<8x128xf32>,
    return
  }
  func.func @transform_0(%arg0: i32) -> (i32, i32) {
    %c0_i32 = arith.constant 0 : i32
    %c0_i32_0 = arith.constant 0 : i32
    return %arg0, %c0_i32 : i32, i32
  }
  func.func @transform_1(%arg0: i32) -> (i32, i32) {
    %c0_i32 = arith.constant 0 : i32
    %c0_i32_0 = arith.constant 0 : i32
    %c0_i32_1 = arith.constant 0 : i32
    return %c0_i32, %c0_i32_0 : i32, i32
  }
  func.func @transform_2(%arg0: i32) -> (i32, i32) {
    %c0_i32 = arith.constant 0 : i32
    %c0_i32_0 = arith.constant 0 : i32
    return %arg0, %c0_i32 : i32, i32
  }
}

module attributes {stable_mosaic.version = 11 : i64} {
  func.func @_ffn_block_kernel(%arg0: i32, %arg1: memref<16x128xf32, #tpu.memory_space<vmem>>, %arg2: memref<128x256xbf16, #tpu.memory_space<vmem>>, %arg3: memref<1x256xf32, #tpu.memory_space<vmem>>, %arg4: memref<256x128xbf16, #tpu.memory_space<vmem>>, %arg5: memref<1x128xf32, #tpu.memory_space<vmem>>, %arg6: memref<1x128xf32, #tpu.memory_space<vmem>>, %arg7: memref<1x128xf32, #tpu.memory_space<vmem>>, %arg8: memref<16x128xf32, #tpu.memory_space<vmem>>) attributes {dimension_semantics = [#tpu.dimension_semantics<parallel>], iteration_bounds = array<i64: 1>, scalar_prefetch = 0 : i64, scratch_operands = 0 : i64, tpu.core_type = #tpu.core_type<tc>, window_params = [{transform_indices = @transform_0, window_bounds = array<i64: 16, 128>}, {pipeline_mode = #tpu.pipeline_mode<synchronous>, transform_indices = @transform_1, window_bounds = array<i64: 128, 256>}, {pipeline_mode = #tpu.pipeline_mode<synchronous>, transform_indices = @transform_2, window_bounds = array<i64: 1, 256>}, {pipeline_mode = #tpu.pipeline_mode<synchronous>, transform_indices = @transform_3, window_bounds = array<i64: 256, 128>}, {pipeline_mode = #tpu.pipeline_mode<synchronous>, transform_indices = @transform_4, window_bounds = array<i64: 1, 128>}, {pipeline_mode = #tpu.pipeline_mode<synchronous>, transform_indices = @transform_5, window_bounds = array<i64: 1, 128>}, {pipeline_mode = #tpu.pipeline_mode<synchronous>, transform_indices = @transform_6, window_bounds = array<i64: 1, 128>}, {transform_indices = @transform_7, window_bounds = array<i64: 16, 128>}]} {
    %c0 = arith.constant 0 : index
    %c0_0 = arith.constant 0 : index
    %0 = vector.load %arg1[%c0, %c0_0] : memref<16x128xf32, #tpu.memory_space<vmem>>, vector<16x128xf32>
    %1 = arith.truncf %0 : vector<16x128xf32> to vector<16x128xbf16>
    %c0_1 = arith.constant 0 : index
    %c0_2 = arith.constant 0 : index
    %2 = vector.load %arg2[%c0_1, %c0_2] : memref<128x256xbf16, #tpu.memory_space<vmem>>, vector<128x256xbf16>
    %cst = arith.constant dense<0.000000e+00> : vector<16x256xf32>
    %3 = tpu.matmul %1, %2, %cst {dimension_numbers = #tpu.dot_dimension_numbers<[1], [0], [0], [1], [0, 0, 1, 1], [], []>} : vector<16x128xbf16>, vector<128x256xbf16>, vector<16x256xf32> -> vector<16x256xf32>
    %c0_3 = arith.constant 0 : index
    %c0_4 = arith.constant 0 : index
    %4 = vector.load %arg3[%c0_3, %c0_4] : memref<1x256xf32, #tpu.memory_space<vmem>>, vector<1x256xf32>
    %5 = vector.broadcast %4 : vector<1x256xf32> to vector<16x256xf32>
    %6 = arith.addf %3, %5 : vector<16x256xf32>
    %cst_5 = arith.constant 0.000000e+00 : f32
    %7 = vector.broadcast %cst_5 : f32 to vector<16x256xf32>
    %8 = arith.maximumf %6, %7 : vector<16x256xf32>
    %9 = arith.truncf %8 : vector<16x256xf32> to vector<16x256xbf16>
    %c0_6 = arith.constant 0 : index
    %c0_7 = arith.constant 0 : index
    %10 = vector.load %arg4[%c0_6, %c0_7] : memref<256x128xbf16, #tpu.memory_space<vmem>>, vector<256x128xbf16>
    %cst_8 = arith.constant dense<0.000000e+00> : vector<16x128xf32>
    %11 = tpu.matmul %9, %10, %cst_8 {dimension_numbers = #tpu.dot_dimension_numbers<[1], [0], [0], [1], [0, 0, 1, 1], [], []>} : vector<16x256xbf16>, vector<256x128xbf16>, vector<16x128xf32> -> vector<16x128xf32>
    %c0_9 = arith.constant 0 : index
    %c0_10 = arith.constant 0 : index
    %12 = vector.load %arg5[%c0_9, %c0_10] : memref<1x128xf32, #tpu.memory_space<vmem>>, vector<1x128xf32>
    %13 = vector.broadcast %12 : vector<1x128xf32> to vector<16x128xf32>
    %14 = arith.addf %11, %13 : vector<16x128xf32>
    %15 = arith.addf %14, %0 : vector<16x128xf32>
    %cst_11 = arith.constant dense<0.000000e+00> : vector<16xf32>
    %16 = vector.multi_reduction <add>, %15, %cst_11 [1] : vector<16x128xf32> to vector<16xf32>
    %17 = vector.shape_cast %16 : vector<16xf32> to vector<16x1xf32>
    %cst_12 = arith.constant 1.280000e+02 : f32
    %18 = vector.broadcast %cst_12 : f32 to vector<16x1xf32>
    %19 = arith.divf %17, %18 : vector<16x1xf32>
    %20 = vector.broadcast %19 : vector<16x1xf32> to vector<16x128xf32>
    %21 = arith.subf %15, %20 : vector<16x128xf32>
    %22 = arith.mulf %21, %21 : vector<16x128xf32>
    %cst_13 = arith.constant dense<0.000000e+00> : vector<16xf32>
    %23 = vector.multi_reduction <add>, %22, %cst_13 [1] : vector<16x128xf32> to vector<16xf32>
    %24 = vector.shape_cast %23 : vector<16xf32> to vector<16x1xf32>
    %cst_14 = arith.constant 1.280000e+02 : f32
    %25 = vector.broadcast %cst_14 : f32 to vector<16x1xf32>
    %26 = arith.divf %24, %25 : vector<16x1xf32>
    %27 = vector.broadcast %19 : vector<16x1xf32> to vector<16x128xf32>
    %28 = arith.subf %15, %27 : vector<16x128xf32>
    %cst_15 = arith.constant 9.99999974E-6 : f32
    %29 = vector.broadcast %cst_15 : f32 to vector<16x1xf32>
    %30 = arith.addf %26, %29 : vector<16x1xf32>
    %31 = math.rsqrt %30 : vector<16x1xf32>
    %32 = vector.broadcast %31 : vector<16x1xf32> to vector<16x128xf32>
    %33 = arith.mulf %28, %32 : vector<16x128xf32>
    %c0_16 = arith.constant 0 : index
    %c0_17 = arith.constant 0 : index
    %34 = vector.load %arg6[%c0_16, %c0_17] : memref<1x128xf32, #tpu.memory_space<vmem>>, vector<1x128xf32>
    %35 = vector.broadcast %34 : vector<1x128xf32> to vector<16x128xf32>
    %36 = arith.mulf %33, %35 : vector<16x128xf32>
    %c0_18 = arith.constant 0 : index
    %c0_19 = arith.constant 0 : index
    %37 = vector.load %arg7[%c0_18, %c0_19] : memref<1x128xf32, #tpu.memory_space<vmem>>, vector<1x128xf32>
    %38 = vector.broadcast %37 : vector<1x128xf32> to vector<16x128xf32>
    %39 = arith.addf %36, %38 : vector<16x128xf32>
    %c0_20 = arith.constant 0 : index
    %c0_21 = arith.constant 0 : index
    %40 = vector.load %arg8[%c0_20, %c0_21] : memref<16x128xf32, #tpu.memory_space<vmem>>, vector<16x128xf32>
    tpu.vector_store %arg8[%c0_20, %c0_21], %39 {strides = array<i32>} : memref<16x128xf32, #tpu.memory_space<vmem>>, vector<16x128xf32>,
    return
  }
  func.func @transform_0(%arg0: i32) -> (i32, i32) {
    %c0_i32 = arith.constant 0 : i32
    %c0_i32_0 = arith.constant 0 : i32
    return %arg0, %c0_i32 : i32, i32
  }
  func.func @transform_1(%arg0: i32) -> (i32, i32) {
    %c0_i32 = arith.constant 0 : i32
    %c0_i32_0 = arith.constant 0 : i32
    %c0_i32_1 = arith.constant 0 : i32
    return %c0_i32, %c0_i32_0 : i32, i32
  }
  func.func @transform_2(%arg0: i32) -> (i32, i32) {
    %c0_i32 = arith.constant 0 : i32
    %c0_i32_0 = arith.constant 0 : i32
    %c0_i32_1 = arith.constant 0 : i32
    return %c0_i32, %c0_i32_0 : i32, i32
  }
  func.func @transform_3(%arg0: i32) -> (i32, i32) {
    %c0_i32 = arith.constant 0 : i32
    %c0_i32_0 = arith.constant 0 : i32
    %c0_i32_1 = arith.constant 0 : i32
    return %c0_i32, %c0_i32_0 : i32, i32
  }
  func.func @transform_4(%arg0: i32) -> (i32, i32) {
    %c0_i32 = arith.constant 0 : i32
    %c0_i32_0 = arith.constant 0 : i32
    %c0_i32_1 = arith.constant 0 : i32
    return %c0_i32, %c0_i32_0 : i32, i32
  }
  func.func @transform_5(%arg0: i32) -> (i32, i32) {
    %c0_i32 = arith.constant 0 : i32
    %c0_i32_0 = arith.constant 0 : i32
    %c0_i32_1 = arith.constant 0 : i32
    return %c0_i32, %c0_i32_0 : i32, i32
  }
  func.func @transform_6(%arg0: i32) -> (i32, i32) {
    %c0_i32 = arith.constant 0 : i32
    %c0_i32_0 = arith.constant 0 : i32
    %c0_i32_1 = arith.constant 0 : i32
    return %c0_i32, %c0_i32_0 : i32, i32
  }
  func.func @transform_7(%arg0: i32) -> (i32, i32) {
    %c0_i32 = arith.constant 0 : i32
    %c0_i32_0 = arith.constant 0 : i32
    return %arg0, %c0_i32 : i32, i32
  }
}

module attributes {stable_mosaic.version = 11 : i64} {
  func.func @_attn_block_masked_kernel(%arg0: i32, %arg1: memref<1x8x128xf32, #tpu.memory_space<vmem>>, %arg2: memref<1x8x128xf32, #tpu.memory_space<vmem>>, %arg3: memref<1x8x8xf32, #tpu.memory_space<vmem>>, %arg4: memref<128x128xbf16, #tpu.memory_space<vmem>>, %arg5: memref<1x128xf32, #tpu.memory_space<vmem>>, %arg6: memref<128x128xbf16, #tpu.memory_space<vmem>>, %arg7: memref<1x128xf32, #tpu.memory_space<vmem>>, %arg8: memref<128x128xbf16, #tpu.memory_space<vmem>>, %arg9: memref<1x128xf32, #tpu.memory_space<vmem>>, %arg10: memref<128x128xbf16, #tpu.memory_space<vmem>>, %arg11: memref<1x128xf32, #tpu.memory_space<vmem>>, %arg12: memref<1x128xf32, #tpu.memory_space<vmem>>, %arg13: memref<1x128xf32, #tpu.memory_space<vmem>>, %arg14: memref<1x8x128xf32, #tpu.memory_space<vmem>>) attributes {dimension_semantics = [#tpu.dimension_semantics<parallel>], iteration_bounds = array<i64: 2>, scalar_prefetch = 0 : i64, scratch_operands = 0 : i64, tpu.core_type = #tpu.core_type<tc>, window_params = [{transform_indices = @transform_0, window_bounds = array<i64: 1, 8, 128>}, {transform_indices = @transform_1, window_bounds = array<i64: 1, 8, 128>}, {transform_indices = @transform_2, window_bounds = array<i64: 1, 8, 8>}, {pipeline_mode = #tpu.pipeline_mode<synchronous>, transform_indices = @transform_3, window_bounds = array<i64: 128, 128>}, {pipeline_mode = #tpu.pipeline_mode<synchronous>, transform_indices = @transform_4, window_bounds = array<i64: 1, 128>}, {pipeline_mode = #tpu.pipeline_mode<synchronous>, transform_indices = @transform_5, window_bounds = array<i64: 128, 128>}, {pipeline_mode = #tpu.pipeline_mode<synchronous>, transform_indices = @transform_6, window_bounds = array<i64: 1, 128>}, {pipeline_mode = #tpu.pipeline_mode<synchronous>, transform_indices = @transform_7, window_bounds = array<i64: 128, 128>}, {pipeline_mode = #tpu.pipeline_mode<synchronous>, transform_indices = @transform_8, window_bounds = array<i64: 1, 128>}, {pipeline_mode = #tpu.pipeline_mode<synchronous>, transform_indices = @transform_9, window_bounds = array<i64: 128, 128>}, {pipeline_mode = #tpu.pipeline_mode<synchronous>, transform_indices = @transform_10, window_bounds = array<i64: 1, 128>}, {pipeline_mode = #tpu.pipeline_mode<synchronous>, transform_indices = @transform_11, window_bounds = array<i64: 1, 128>}, {pipeline_mode = #tpu.pipeline_mode<synchronous>, transform_indices = @transform_12, window_bounds = array<i64: 1, 128>}, {transform_indices = @transform_13, window_bounds = array<i64: 1, 8, 128>}]} {
    %c0 = arith.constant 0 : index
    %c0_0 = arith.constant 0 : index
    %c0_1 = arith.constant 0 : index
    %0 = vector.load %arg1[%c0, %c0_0, %c0_1] : memref<1x8x128xf32, #tpu.memory_space<vmem>>, vector<1x8x128xf32>
    %1 = vector.shape_cast %0 : vector<1x8x128xf32> to vector<8x128xf32>
    %c0_2 = arith.constant 0 : index
    %c0_3 = arith.constant 0 : index
    %c0_4 = arith.constant 0 : index
    %2 = vector.load %arg2[%c0_2, %c0_3, %c0_4] : memref<1x8x128xf32, #tpu.memory_space<vmem>>, vector<1x8x128xf32>
    %3 = vector.shape_cast %2 : vector<1x8x128xf32> to vector<8x128xf32>
    %c0_5 = arith.constant 0 : index
    %c0_6 = arith.constant 0 : index
    %c0_7 = arith.constant 0 : index
    %4 = vector.load %arg3[%c0_5, %c0_6, %c0_7] : memref<1x8x8xf32, #tpu.memory_space<vmem>>, vector<1x8x8xf32>
    %5 = vector.shape_cast %4 : vector<1x8x8xf32> to vector<8x8xf32>
    %c0_8 = arith.constant 0 : index
    %c0_9 = arith.constant 0 : index
    %6 = vector.load %arg4[%c0_8, %c0_9] : memref<128x128xbf16, #tpu.memory_space<vmem>>, vector<128x128xbf16>
    %c0_10 = arith.constant 0 : index
    %c0_11 = arith.constant 0 : index
    %7 = vector.load %arg5[%c0_10, %c0_11] : memref<1x128xf32, #tpu.memory_space<vmem>>, vector<1x128xf32>
    %c0_12 = arith.constant 0 : index
    %c0_13 = arith.constant 0 : index
    %8 = vector.load %arg6[%c0_12, %c0_13] : memref<128x128xbf16, #tpu.memory_space<vmem>>, vector<128x128xbf16>
    %c0_14 = arith.constant 0 : index
    %c0_15 = arith.constant 0 : index
    %9 = vector.load %arg7[%c0_14, %c0_15] : memref<1x128xf32, #tpu.memory_space<vmem>>, vector<1x128xf32>
    %c0_16 = arith.constant 0 : index
    %c0_17 = arith.constant 0 : index
    %10 = vector.load %arg8[%c0_16, %c0_17] : memref<128x128xbf16, #tpu.memory_space<vmem>>, vector<128x128xbf16>
    %c0_18 = arith.constant 0 : index
    %c0_19 = arith.constant 0 : index
    %11 = vector.load %arg9[%c0_18, %c0_19] : memref<1x128xf32, #tpu.memory_space<vmem>>, vector<1x128xf32>
    %c0_20 = arith.constant 0 : index
    %c0_21 = arith.constant 0 : index
    %12 = vector.load %arg10[%c0_20, %c0_21] : memref<128x128xbf16, #tpu.memory_space<vmem>>, vector<128x128xbf16>
    %c0_22 = arith.constant 0 : index
    %c0_23 = arith.constant 0 : index
    %13 = vector.load %arg11[%c0_22, %c0_23] : memref<1x128xf32, #tpu.memory_space<vmem>>, vector<1x128xf32>
    %c0_24 = arith.constant 0 : index
    %c0_25 = arith.constant 0 : index
    %14 = vector.load %arg12[%c0_24, %c0_25] : memref<1x128xf32, #tpu.memory_space<vmem>>, vector<1x128xf32>
    %c0_26 = arith.constant 0 : index
    %c0_27 = arith.constant 0 : index
    %15 = vector.load %arg13[%c0_26, %c0_27] : memref<1x128xf32, #tpu.memory_space<vmem>>, vector<1x128xf32>
    %16 = arith.truncf %1 : vector<8x128xf32> to vector<8x128xbf16>
    %17 = arith.truncf %3 : vector<8x128xf32> to vector<8x128xbf16>
    %cst = arith.constant dense<0.000000e+00> : vector<8x128xf32>
    %18 = tpu.matmul %16, %6, %cst {dimension_numbers = #tpu.dot_dimension_numbers<[1], [0], [0], [1], [0, 0, 1, 1], [], []>} : vector<8x128xbf16>, vector<128x128xbf16>, vector<8x128xf32> -> vector<8x128xf32>
    %19 = vector.broadcast %7 : vector<1x128xf32> to vector<8x128xf32>
    %20 = arith.addf %18, %19 : vector<8x128xf32>
    %cst_28 = arith.constant dense<0.000000e+00> : vector<8x128xf32>
    %21 = tpu.matmul %17, %8, %cst_28 {dimension_numbers = #tpu.dot_dimension_numbers<[1], [0], [0], [1], [0, 0, 1, 1], [], []>} : vector<8x128xbf16>, vector<128x128xbf16>, vector<8x128xf32> -> vector<8x128xf32>
    %22 = vector.broadcast %9 : vector<1x128xf32> to vector<8x128xf32>
    %23 = arith.addf %21, %22 : vector<8x128xf32>
    %cst_29 = arith.constant dense<0.000000e+00> : vector<8x128xf32>
    %24 = tpu.matmul %17, %10, %cst_29 {dimension_numbers = #tpu.dot_dimension_numbers<[1], [0], [0], [1], [0, 0, 1, 1], [], []>} : vector<8x128xbf16>, vector<128x128xbf16>, vector<8x128xf32> -> vector<8x128xf32>
    %25 = vector.broadcast %11 : vector<1x128xf32> to vector<8x128xf32>
    %26 = arith.addf %24, %25 : vector<8x128xf32>
    %27 = arith.truncf %20 : vector<8x128xf32> to vector<8x128xbf16>
    %28 = arith.truncf %23 : vector<8x128xf32> to vector<8x128xbf16>
    %cst_30 = arith.constant dense<0.000000e+00> : vector<8x8xf32>
    %29 = tpu.matmul %27, %28, %cst_30 {dimension_numbers = #tpu.dot_dimension_numbers<[1], [1], [0], [0], [0, 0, 1, 0], [], []>} : vector<8x128xbf16>, vector<8x128xbf16>, vector<8x8xf32> -> vector<8x8xf32>
    %cst_31 = arith.constant 0.000000e+00 : f32
    %30 = vector.broadcast %cst_31 : f32 to vector<8x8xf32>
    %31 = arith.cmpf one, %5, %30 : vector<8x8xf32>
    %cst_32 = arith.constant -1.000000e+09 : f32
    %32 = vector.broadcast %cst_32 : f32 to vector<8x8xf32>
    %33 = arith.select %31, %32, %29 : vector<8x8xi1>, vector<8x8xf32>
    %cst_33 = arith.constant dense<0xFF800000> : vector<8xf32>
    %34 = vector.multi_reduction <maximumf>, %33, %cst_33 [1] : vector<8x8xf32> to vector<8xf32>
    %35 = vector.shape_cast %34 : vector<8xf32> to vector<8x1xf32>
    %36 = vector.broadcast %35 : vector<8x1xf32> to vector<8x8xf32>
    %37 = arith.subf %33, %36 : vector<8x8xf32>
    %38 = math.exp %37 : vector<8x8xf32>
    %cst_34 = arith.constant dense<0.000000e+00> : vector<8xf32>
    %39 = vector.multi_reduction <add>, %38, %cst_34 [1] : vector<8x8xf32> to vector<8xf32>
    %40 = vector.shape_cast %39 : vector<8xf32> to vector<8x1xf32>
    %41 = arith.truncf %38 : vector<8x8xf32> to vector<8x8xbf16>
    %42 = arith.truncf %26 : vector<8x128xf32> to vector<8x128xbf16>
    %cst_35 = arith.constant dense<0.000000e+00> : vector<8x128xf32>
    %43 = tpu.matmul %41, %42, %cst_35 {dimension_numbers = #tpu.dot_dimension_numbers<[1], [0], [0], [1], [0, 0, 1, 1], [], []>} : vector<8x8xbf16>, vector<8x128xbf16>, vector<8x128xf32> -> vector<8x128xf32>
    %44 = tpu.reciprocal %40 {approx = true} : vector<8x1xf32> -> vector<8x1xf32>
    %45 = vector.broadcast %44 : vector<8x1xf32> to vector<8x128xf32>
    %46 = arith.mulf %43, %45 : vector<8x128xf32>
    %47 = arith.truncf %46 : vector<8x128xf32> to vector<8x128xbf16>
    %cst_36 = arith.constant dense<0.000000e+00> : vector<8x128xf32>
    %48 = tpu.matmul %47, %12, %cst_36 {dimension_numbers = #tpu.dot_dimension_numbers<[1], [0], [0], [1], [0, 0, 1, 1], [], []>} : vector<8x128xbf16>, vector<128x128xbf16>, vector<8x128xf32> -> vector<8x128xf32>
    %49 = vector.broadcast %13 : vector<1x128xf32> to vector<8x128xf32>
    %50 = arith.addf %48, %49 : vector<8x128xf32>
    %51 = arith.addf %50, %1 : vector<8x128xf32>
    %cst_37 = arith.constant dense<0.000000e+00> : vector<8xf32>
    %52 = vector.multi_reduction <add>, %51, %cst_37 [1] : vector<8x128xf32> to vector<8xf32>
    %53 = vector.shape_cast %52 : vector<8xf32> to vector<8x1xf32>
    %cst_38 = arith.constant 1.280000e+02 : f32
    %54 = vector.broadcast %cst_38 : f32 to vector<8x1xf32>
    %55 = arith.divf %53, %54 : vector<8x1xf32>
    %56 = vector.broadcast %55 : vector<8x1xf32> to vector<8x128xf32>
    %57 = arith.subf %51, %56 : vector<8x128xf32>
    %58 = arith.mulf %57, %57 : vector<8x128xf32>
    %cst_39 = arith.constant dense<0.000000e+00> : vector<8xf32>
    %59 = vector.multi_reduction <add>, %58, %cst_39 [1] : vector<8x128xf32> to vector<8xf32>
    %60 = vector.shape_cast %59 : vector<8xf32> to vector<8x1xf32>
    %cst_40 = arith.constant 1.280000e+02 : f32
    %61 = vector.broadcast %cst_40 : f32 to vector<8x1xf32>
    %62 = arith.divf %60, %61 : vector<8x1xf32>
    %63 = vector.broadcast %55 : vector<8x1xf32> to vector<8x128xf32>
    %64 = arith.subf %51, %63 : vector<8x128xf32>
    %cst_41 = arith.constant 9.99999974E-6 : f32
    %65 = vector.broadcast %cst_41 : f32 to vector<8x1xf32>
    %66 = arith.addf %62, %65 : vector<8x1xf32>
    %67 = math.rsqrt %66 : vector<8x1xf32>
    %68 = vector.broadcast %67 : vector<8x1xf32> to vector<8x128xf32>
    %69 = arith.mulf %64, %68 : vector<8x128xf32>
    %70 = vector.broadcast %14 : vector<1x128xf32> to vector<8x128xf32>
    %71 = arith.mulf %69, %70 : vector<8x128xf32>
    %72 = vector.broadcast %15 : vector<1x128xf32> to vector<8x128xf32>
    %73 = arith.addf %71, %72 : vector<8x128xf32>
    %c0_42 = arith.constant 0 : index
    %c0_43 = arith.constant 0 : index
    %c0_44 = arith.constant 0 : index
    %74 = vector.load %arg14[%c0_42, %c0_43, %c0_44] : memref<1x8x128xf32, #tpu.memory_space<vmem>>, vector<1x8x128xf32>
    %75 = vector.shape_cast %74 : vector<1x8x128xf32> to vector<8x128xf32>
    %76 = vector.shape_cast %73 : vector<8x128xf32> to vector<1x8x128xf32>
    tpu.vector_store %arg14[%c0_42, %c0_43, %c0_44], %76 {strides = array<i32>} : memref<1x8x128xf32, #tpu.memory_space<vmem>>, vector<1x8x128xf32>,
    return
  }
  func.func @transform_0(%arg0: i32) -> (i32, i32, i32) {
    %c0_i32 = arith.constant 0 : i32
    %c0_i32_0 = arith.constant 0 : i32
    %c0_i32_1 = arith.constant 0 : i32
    return %arg0, %c0_i32, %c0_i32_0 : i32, i32, i32
  }
  func.func @transform_1(%arg0: i32) -> (i32, i32, i32) {
    %c0_i32 = arith.constant 0 : i32
    %c0_i32_0 = arith.constant 0 : i32
    %c0_i32_1 = arith.constant 0 : i32
    return %arg0, %c0_i32, %c0_i32_0 : i32, i32, i32
  }
  func.func @transform_2(%arg0: i32) -> (i32, i32, i32) {
    %c0_i32 = arith.constant 0 : i32
    %c0_i32_0 = arith.constant 0 : i32
    %c0_i32_1 = arith.constant 0 : i32
    return %arg0, %c0_i32, %c0_i32_0 : i32, i32, i32
  }
  func.func @transform_3(%arg0: i32) -> (i32, i32) {
    %c0_i32 = arith.constant 0 : i32
    %c0_i32_0 = arith.constant 0 : i32
    %c0_i32_1 = arith.constant 0 : i32
    return %c0_i32, %c0_i32_0 : i32, i32
  }
  func.func @transform_4(%arg0: i32) -> (i32, i32) {
    %c0_i32 = arith.constant 0 : i32
    %c0_i32_0 = arith.constant 0 : i32
    %c0_i32_1 = arith.constant 0 : i32
    return %c0_i32, %c0_i32_0 : i32, i32
  }
  func.func @transform_5(%arg0: i32) -> (i32, i32) {
    %c0_i32 = arith.constant 0 : i32
    %c0_i32_0 = arith.constant 0 : i32
    %c0_i32_1 = arith.constant 0 : i32
    return %c0_i32, %c0_i32_0 : i32, i32
  }
  func.func @transform_6(%arg0: i32) -> (i32, i32) {
    %c0_i32 = arith.constant 0 : i32
    %c0_i32_0 = arith.constant 0 : i32
    %c0_i32_1 = arith.constant 0 : i32
    return %c0_i32, %c0_i32_0 : i32, i32
  }
  func.func @transform_7(%arg0: i32) -> (i32, i32) {
    %c0_i32 = arith.constant 0 : i32
    %c0_i32_0 = arith.constant 0 : i32
    %c0_i32_1 = arith.constant 0 : i32
    return %c0_i32, %c0_i32_0 : i32, i32
  }
  func.func @transform_8(%arg0: i32) -> (i32, i32) {
    %c0_i32 = arith.constant 0 : i32
    %c0_i32_0 = arith.constant 0 : i32
    %c0_i32_1 = arith.constant 0 : i32
    return %c0_i32, %c0_i32_0 : i32, i32
  }
  func.func @transform_9(%arg0: i32) -> (i32, i32) {
    %c0_i32 = arith.constant 0 : i32
    %c0_i32_0 = arith.constant 0 : i32
    %c0_i32_1 = arith.constant 0 : i32
    return %c0_i32, %c0_i32_0 : i32, i32
  }
  func.func @transform_10(%arg0: i32) -> (i32, i32) {
    %c0_i32 = arith.constant 0 : i32
    %c0_i32_0 = arith.constant 0 : i32
    %c0_i32_1 = arith.constant 0 : i32
    return %c0_i32, %c0_i32_0 : i32, i32
  }
  func.func @transform_11(%arg0: i32) -> (i32, i32) {
    %c0_i32 = arith.constant 0 : i32
    %c0_i32_0 = arith.constant 0 : i32
    %c0_i32_1 = arith.constant 0 : i32
    return %c0_i32, %c0_i32_0 : i32, i32
  }
  func.func @transform_12(%arg0: i32) -> (i32, i32) {
    %c0_i32 = arith.constant 0 : i32
    %c0_i32_0 = arith.constant 0 : i32
    %c0_i32_1 = arith.constant 0 : i32
    return %c0_i32, %c0_i32_0 : i32, i32
  }
  func.func @transform_13(%arg0: i32) -> (i32, i32, i32) {
    %c0_i32 = arith.constant 0 : i32
    %c0_i32_0 = arith.constant 0 : i32
    %c0_i32_1 = arith.constant 0 : i32
    return %arg0, %c0_i32, %c0_i32_0 : i32, i32, i32
  }
}

module attributes {stable_mosaic.version = 11 : i64} {
  func.func @_attn_block_nomask_kernel(%arg0: i32, %arg1: memref<1x8x128xf32, #tpu.memory_space<vmem>>, %arg2: memref<1x8x128xf32, #tpu.memory_space<vmem>>, %arg3: memref<128x128xbf16, #tpu.memory_space<vmem>>, %arg4: memref<1x128xf32, #tpu.memory_space<vmem>>, %arg5: memref<128x128xbf16, #tpu.memory_space<vmem>>, %arg6: memref<1x128xf32, #tpu.memory_space<vmem>>, %arg7: memref<128x128xbf16, #tpu.memory_space<vmem>>, %arg8: memref<1x128xf32, #tpu.memory_space<vmem>>, %arg9: memref<128x128xbf16, #tpu.memory_space<vmem>>, %arg10: memref<1x128xf32, #tpu.memory_space<vmem>>, %arg11: memref<1x128xf32, #tpu.memory_space<vmem>>, %arg12: memref<1x128xf32, #tpu.memory_space<vmem>>, %arg13: memref<1x8x128xf32, #tpu.memory_space<vmem>>) attributes {dimension_semantics = [#tpu.dimension_semantics<parallel>], iteration_bounds = array<i64: 2>, scalar_prefetch = 0 : i64, scratch_operands = 0 : i64, tpu.core_type = #tpu.core_type<tc>, window_params = [{transform_indices = @transform_0, window_bounds = array<i64: 1, 8, 128>}, {transform_indices = @transform_1, window_bounds = array<i64: 1, 8, 128>}, {pipeline_mode = #tpu.pipeline_mode<synchronous>, transform_indices = @transform_2, window_bounds = array<i64: 128, 128>}, {pipeline_mode = #tpu.pipeline_mode<synchronous>, transform_indices = @transform_3, window_bounds = array<i64: 1, 128>}, {pipeline_mode = #tpu.pipeline_mode<synchronous>, transform_indices = @transform_4, window_bounds = array<i64: 128, 128>}, {pipeline_mode = #tpu.pipeline_mode<synchronous>, transform_indices = @transform_5, window_bounds = array<i64: 1, 128>}, {pipeline_mode = #tpu.pipeline_mode<synchronous>, transform_indices = @transform_6, window_bounds = array<i64: 128, 128>}, {pipeline_mode = #tpu.pipeline_mode<synchronous>, transform_indices = @transform_7, window_bounds = array<i64: 1, 128>}, {pipeline_mode = #tpu.pipeline_mode<synchronous>, transform_indices = @transform_8, window_bounds = array<i64: 128, 128>}, {pipeline_mode = #tpu.pipeline_mode<synchronous>, transform_indices = @transform_9, window_bounds = array<i64: 1, 128>}, {pipeline_mode = #tpu.pipeline_mode<synchronous>, transform_indices = @transform_10, window_bounds = array<i64: 1, 128>}, {pipeline_mode = #tpu.pipeline_mode<synchronous>, transform_indices = @transform_11, window_bounds = array<i64: 1, 128>}, {transform_indices = @transform_12, window_bounds = array<i64: 1, 8, 128>}]} {
    %c0 = arith.constant 0 : index
    %c0_0 = arith.constant 0 : index
    %c0_1 = arith.constant 0 : index
    %0 = vector.load %arg1[%c0, %c0_0, %c0_1] : memref<1x8x128xf32, #tpu.memory_space<vmem>>, vector<1x8x128xf32>
    %1 = vector.shape_cast %0 : vector<1x8x128xf32> to vector<8x128xf32>
    %c0_2 = arith.constant 0 : index
    %c0_3 = arith.constant 0 : index
    %c0_4 = arith.constant 0 : index
    %2 = vector.load %arg2[%c0_2, %c0_3, %c0_4] : memref<1x8x128xf32, #tpu.memory_space<vmem>>, vector<1x8x128xf32>
    %3 = vector.shape_cast %2 : vector<1x8x128xf32> to vector<8x128xf32>
    %c0_5 = arith.constant 0 : index
    %c0_6 = arith.constant 0 : index
    %4 = vector.load %arg3[%c0_5, %c0_6] : memref<128x128xbf16, #tpu.memory_space<vmem>>, vector<128x128xbf16>
    %c0_7 = arith.constant 0 : index
    %c0_8 = arith.constant 0 : index
    %5 = vector.load %arg4[%c0_7, %c0_8] : memref<1x128xf32, #tpu.memory_space<vmem>>, vector<1x128xf32>
    %c0_9 = arith.constant 0 : index
    %c0_10 = arith.constant 0 : index
    %6 = vector.load %arg5[%c0_9, %c0_10] : memref<128x128xbf16, #tpu.memory_space<vmem>>, vector<128x128xbf16>
    %c0_11 = arith.constant 0 : index
    %c0_12 = arith.constant 0 : index
    %7 = vector.load %arg6[%c0_11, %c0_12] : memref<1x128xf32, #tpu.memory_space<vmem>>, vector<1x128xf32>
    %c0_13 = arith.constant 0 : index
    %c0_14 = arith.constant 0 : index
    %8 = vector.load %arg7[%c0_13, %c0_14] : memref<128x128xbf16, #tpu.memory_space<vmem>>, vector<128x128xbf16>
    %c0_15 = arith.constant 0 : index
    %c0_16 = arith.constant 0 : index
    %9 = vector.load %arg8[%c0_15, %c0_16] : memref<1x128xf32, #tpu.memory_space<vmem>>, vector<1x128xf32>
    %c0_17 = arith.constant 0 : index
    %c0_18 = arith.constant 0 : index
    %10 = vector.load %arg9[%c0_17, %c0_18] : memref<128x128xbf16, #tpu.memory_space<vmem>>, vector<128x128xbf16>
    %c0_19 = arith.constant 0 : index
    %c0_20 = arith.constant 0 : index
    %11 = vector.load %arg10[%c0_19, %c0_20] : memref<1x128xf32, #tpu.memory_space<vmem>>, vector<1x128xf32>
    %c0_21 = arith.constant 0 : index
    %c0_22 = arith.constant 0 : index
    %12 = vector.load %arg11[%c0_21, %c0_22] : memref<1x128xf32, #tpu.memory_space<vmem>>, vector<1x128xf32>
    %c0_23 = arith.constant 0 : index
    %c0_24 = arith.constant 0 : index
    %13 = vector.load %arg12[%c0_23, %c0_24] : memref<1x128xf32, #tpu.memory_space<vmem>>, vector<1x128xf32>
    %14 = arith.truncf %1 : vector<8x128xf32> to vector<8x128xbf16>
    %15 = arith.truncf %3 : vector<8x128xf32> to vector<8x128xbf16>
    %cst = arith.constant dense<0.000000e+00> : vector<8x128xf32>
    %16 = tpu.matmul %14, %4, %cst {dimension_numbers = #tpu.dot_dimension_numbers<[1], [0], [0], [1], [0, 0, 1, 1], [], []>} : vector<8x128xbf16>, vector<128x128xbf16>, vector<8x128xf32> -> vector<8x128xf32>
    %17 = vector.broadcast %5 : vector<1x128xf32> to vector<8x128xf32>
    %18 = arith.addf %16, %17 : vector<8x128xf32>
    %cst_25 = arith.constant dense<0.000000e+00> : vector<8x128xf32>
    %19 = tpu.matmul %15, %6, %cst_25 {dimension_numbers = #tpu.dot_dimension_numbers<[1], [0], [0], [1], [0, 0, 1, 1], [], []>} : vector<8x128xbf16>, vector<128x128xbf16>, vector<8x128xf32> -> vector<8x128xf32>
    %20 = vector.broadcast %7 : vector<1x128xf32> to vector<8x128xf32>
    %21 = arith.addf %19, %20 : vector<8x128xf32>
    %cst_26 = arith.constant dense<0.000000e+00> : vector<8x128xf32>
    %22 = tpu.matmul %15, %8, %cst_26 {dimension_numbers = #tpu.dot_dimension_numbers<[1], [0], [0], [1], [0, 0, 1, 1], [], []>} : vector<8x128xbf16>, vector<128x128xbf16>, vector<8x128xf32> -> vector<8x128xf32>
    %23 = vector.broadcast %9 : vector<1x128xf32> to vector<8x128xf32>
    %24 = arith.addf %22, %23 : vector<8x128xf32>
    %25 = arith.truncf %18 : vector<8x128xf32> to vector<8x128xbf16>
    %26 = arith.truncf %21 : vector<8x128xf32> to vector<8x128xbf16>
    %cst_27 = arith.constant dense<0.000000e+00> : vector<8x8xf32>
    %27 = tpu.matmul %25, %26, %cst_27 {dimension_numbers = #tpu.dot_dimension_numbers<[1], [1], [0], [0], [0, 0, 1, 0], [], []>} : vector<8x128xbf16>, vector<8x128xbf16>, vector<8x8xf32> -> vector<8x8xf32>
    %cst_28 = arith.constant dense<0xFF800000> : vector<8xf32>
    %28 = vector.multi_reduction <maximumf>, %27, %cst_28 [1] : vector<8x8xf32> to vector<8xf32>
    %29 = vector.shape_cast %28 : vector<8xf32> to vector<8x1xf32>
    %30 = vector.broadcast %29 : vector<8x1xf32> to vector<8x8xf32>
    %31 = arith.subf %27, %30 : vector<8x8xf32>
    %32 = math.exp %31 : vector<8x8xf32>
    %cst_29 = arith.constant dense<0.000000e+00> : vector<8xf32>
    %33 = vector.multi_reduction <add>, %32, %cst_29 [1] : vector<8x8xf32> to vector<8xf32>
    %34 = vector.shape_cast %33 : vector<8xf32> to vector<8x1xf32>
    %35 = arith.truncf %32 : vector<8x8xf32> to vector<8x8xbf16>
    %36 = arith.truncf %24 : vector<8x128xf32> to vector<8x128xbf16>
    %cst_30 = arith.constant dense<0.000000e+00> : vector<8x128xf32>
    %37 = tpu.matmul %35, %36, %cst_30 {dimension_numbers = #tpu.dot_dimension_numbers<[1], [0], [0], [1], [0, 0, 1, 1], [], []>} : vector<8x8xbf16>, vector<8x128xbf16>, vector<8x128xf32> -> vector<8x128xf32>
    %38 = tpu.reciprocal %34 {approx = true} : vector<8x1xf32> -> vector<8x1xf32>
    %39 = vector.broadcast %38 : vector<8x1xf32> to vector<8x128xf32>
    %40 = arith.mulf %37, %39 : vector<8x128xf32>
    %41 = arith.truncf %40 : vector<8x128xf32> to vector<8x128xbf16>
    %cst_31 = arith.constant dense<0.000000e+00> : vector<8x128xf32>
    %42 = tpu.matmul %41, %10, %cst_31 {dimension_numbers = #tpu.dot_dimension_numbers<[1], [0], [0], [1], [0, 0, 1, 1], [], []>} : vector<8x128xbf16>, vector<128x128xbf16>, vector<8x128xf32> -> vector<8x128xf32>
    %43 = vector.broadcast %11 : vector<1x128xf32> to vector<8x128xf32>
    %44 = arith.addf %42, %43 : vector<8x128xf32>
    %45 = arith.addf %44, %1 : vector<8x128xf32>
    %cst_32 = arith.constant dense<0.000000e+00> : vector<8xf32>
    %46 = vector.multi_reduction <add>, %45, %cst_32 [1] : vector<8x128xf32> to vector<8xf32>
    %47 = vector.shape_cast %46 : vector<8xf32> to vector<8x1xf32>
    %cst_33 = arith.constant 1.280000e+02 : f32
    %48 = vector.broadcast %cst_33 : f32 to vector<8x1xf32>
    %49 = arith.divf %47, %48 : vector<8x1xf32>
    %50 = vector.broadcast %49 : vector<8x1xf32> to vector<8x128xf32>
    %51 = arith.subf %45, %50 : vector<8x128xf32>
    %52 = arith.mulf %51, %51 : vector<8x128xf32>
    %cst_34 = arith.constant dense<0.000000e+00> : vector<8xf32>
    %53 = vector.multi_reduction <add>, %52, %cst_34 [1] : vector<8x128xf32> to vector<8xf32>
    %54 = vector.shape_cast %53 : vector<8xf32> to vector<8x1xf32>
    %cst_35 = arith.constant 1.280000e+02 : f32
    %55 = vector.broadcast %cst_35 : f32 to vector<8x1xf32>
    %56 = arith.divf %54, %55 : vector<8x1xf32>
    %57 = vector.broadcast %49 : vector<8x1xf32> to vector<8x128xf32>
    %58 = arith.subf %45, %57 : vector<8x128xf32>
    %cst_36 = arith.constant 9.99999974E-6 : f32
    %59 = vector.broadcast %cst_36 : f32 to vector<8x1xf32>
    %60 = arith.addf %56, %59 : vector<8x1xf32>
    %61 = math.rsqrt %60 : vector<8x1xf32>
    %62 = vector.broadcast %61 : vector<8x1xf32> to vector<8x128xf32>
    %63 = arith.mulf %58, %62 : vector<8x128xf32>
    %64 = vector.broadcast %12 : vector<1x128xf32> to vector<8x128xf32>
    %65 = arith.mulf %63, %64 : vector<8x128xf32>
    %66 = vector.broadcast %13 : vector<1x128xf32> to vector<8x128xf32>
    %67 = arith.addf %65, %66 : vector<8x128xf32>
    %c0_37 = arith.constant 0 : index
    %c0_38 = arith.constant 0 : index
    %c0_39 = arith.constant 0 : index
    %68 = vector.load %arg13[%c0_37, %c0_38, %c0_39] : memref<1x8x128xf32, #tpu.memory_space<vmem>>, vector<1x8x128xf32>
    %69 = vector.shape_cast %68 : vector<1x8x128xf32> to vector<8x128xf32>
    %70 = vector.shape_cast %67 : vector<8x128xf32> to vector<1x8x128xf32>
    tpu.vector_store %arg13[%c0_37, %c0_38, %c0_39], %70 {strides = array<i32>} : memref<1x8x128xf32, #tpu.memory_space<vmem>>, vector<1x8x128xf32>,
    return
  }
  func.func @transform_0(%arg0: i32) -> (i32, i32, i32) {
    %c0_i32 = arith.constant 0 : i32
    %c0_i32_0 = arith.constant 0 : i32
    %c0_i32_1 = arith.constant 0 : i32
    return %arg0, %c0_i32, %c0_i32_0 : i32, i32, i32
  }
  func.func @transform_1(%arg0: i32) -> (i32, i32, i32) {
    %c0_i32 = arith.constant 0 : i32
    %c0_i32_0 = arith.constant 0 : i32
    %c0_i32_1 = arith.constant 0 : i32
    return %arg0, %c0_i32, %c0_i32_0 : i32, i32, i32
  }
  func.func @transform_2(%arg0: i32) -> (i32, i32) {
    %c0_i32 = arith.constant 0 : i32
    %c0_i32_0 = arith.constant 0 : i32
    %c0_i32_1 = arith.constant 0 : i32
    return %c0_i32, %c0_i32_0 : i32, i32
  }
  func.func @transform_3(%arg0: i32) -> (i32, i32) {
    %c0_i32 = arith.constant 0 : i32
    %c0_i32_0 = arith.constant 0 : i32
    %c0_i32_1 = arith.constant 0 : i32
    return %c0_i32, %c0_i32_0 : i32, i32
  }
  func.func @transform_4(%arg0: i32) -> (i32, i32) {
    %c0_i32 = arith.constant 0 : i32
    %c0_i32_0 = arith.constant 0 : i32
    %c0_i32_1 = arith.constant 0 : i32
    return %c0_i32, %c0_i32_0 : i32, i32
  }
  func.func @transform_5(%arg0: i32) -> (i32, i32) {
    %c0_i32 = arith.constant 0 : i32
    %c0_i32_0 = arith.constant 0 : i32
    %c0_i32_1 = arith.constant 0 : i32
    return %c0_i32, %c0_i32_0 : i32, i32
  }
  func.func @transform_6(%arg0: i32) -> (i32, i32) {
    %c0_i32 = arith.constant 0 : i32
    %c0_i32_0 = arith.constant 0 : i32
    %c0_i32_1 = arith.constant 0 : i32
    return %c0_i32, %c0_i32_0 : i32, i32
  }
  func.func @transform_7(%arg0: i32) -> (i32, i32) {
    %c0_i32 = arith.constant 0 : i32
    %c0_i32_0 = arith.constant 0 : i32
    %c0_i32_1 = arith.constant 0 : i32
    return %c0_i32, %c0_i32_0 : i32, i32
  }
  func.func @transform_8(%arg0: i32) -> (i32, i32) {
    %c0_i32 = arith.constant 0 : i32
    %c0_i32_0 = arith.constant 0 : i32
    %c0_i32_1 = arith.constant 0 : i32
    return %c0_i32, %c0_i32_0 : i32, i32
  }
  func.func @transform_9(%arg0: i32) -> (i32, i32) {
    %c0_i32 = arith.constant 0 : i32
    %c0_i32_0 = arith.constant 0 : i32
    %c0_i32_1 = arith.constant 0 : i32
    return %c0_i32, %c0_i32_0 : i32, i32
  }
  func.func @transform_10(%arg0: i32) -> (i32, i32) {
    %c0_i32 = arith.constant 0 : i32
    %c0_i32_0 = arith.constant 0 : i32
    %c0_i32_1 = arith.constant 0 : i32
    return %c0_i32, %c0_i32_0 : i32, i32
  }
  func.func @transform_11(%arg0: i32) -> (i32, i32) {
    %c0_i32 = arith.constant 0 : i32
    %c0_i32_0 = arith.constant 0 : i32
    %c0_i32_1 = arith.constant 0 : i32
    return %c0_i32, %c0_i32_0 : i32, i32
  }
  func.func @transform_12(%arg0: i32) -> (i32, i32, i32) {
    %c0_i32 = arith.constant 0 : i32
    %c0_i32_0 = arith.constant 0 : i32
    %c0_i32_1 = arith.constant 0 : i32
    return %arg0, %c0_i32, %c0_i32_0 : i32, i32, i32
  }
}

module attributes {stable_mosaic.version = 11 : i64} {
  func.func @_linear_kernel(%arg0: i32, %arg1: memref<16x128xf32, #tpu.memory_space<vmem>>, %arg2: memref<128x256xbf16, #tpu.memory_space<vmem>>, %arg3: memref<1x256xf32, #tpu.memory_space<vmem>>, %arg4: memref<16x256xf32, #tpu.memory_space<vmem>>) attributes {dimension_semantics = [#tpu.dimension_semantics<parallel>], iteration_bounds = array<i64: 1>, scalar_prefetch = 0 : i64, scratch_operands = 0 : i64, tpu.core_type = #tpu.core_type<tc>, window_params = [{transform_indices = @transform_0, window_bounds = array<i64: 16, 128>}, {pipeline_mode = #tpu.pipeline_mode<synchronous>, transform_indices = @transform_1, window_bounds = array<i64: 128, 256>}, {pipeline_mode = #tpu.pipeline_mode<synchronous>, transform_indices = @transform_2, window_bounds = array<i64: 1, 256>}, {transform_indices = @transform_3, window_bounds = array<i64: 16, 256>}]} {
    %c0 = arith.constant 0 : index
    %c0_0 = arith.constant 0 : index
    %0 = vector.load %arg1[%c0, %c0_0] : memref<16x128xf32, #tpu.memory_space<vmem>>, vector<16x128xf32>
    %1 = arith.truncf %0 : vector<16x128xf32> to vector<16x128xbf16>
    %c0_1 = arith.constant 0 : index
    %c0_2 = arith.constant 0 : index
    %2 = vector.load %arg2[%c0_1, %c0_2] : memref<128x256xbf16, #tpu.memory_space<vmem>>, vector<128x256xbf16>
    %cst = arith.constant dense<0.000000e+00> : vector<16x256xf32>
    %3 = tpu.matmul %1, %2, %cst {dimension_numbers = #tpu.dot_dimension_numbers<[1], [0], [0], [1], [0, 0, 1, 1], [], []>} : vector<16x128xbf16>, vector<128x256xbf16>, vector<16x256xf32> -> vector<16x256xf32>
    %c0_3 = arith.constant 0 : index
    %c0_4 = arith.constant 0 : index
    %4 = vector.load %arg3[%c0_3, %c0_4] : memref<1x256xf32, #tpu.memory_space<vmem>>, vector<1x256xf32>
    %5 = vector.broadcast %4 : vector<1x256xf32> to vector<16x256xf32>
    %6 = arith.addf %3, %5 : vector<16x256xf32>
    %c0_5 = arith.constant 0 : index
    %c0_6 = arith.constant 0 : index
    %7 = vector.load %arg4[%c0_5, %c0_6] : memref<16x256xf32, #tpu.memory_space<vmem>>, vector<16x256xf32>
    tpu.vector_store %arg4[%c0_5, %c0_6], %6 {strides = array<i32>} : memref<16x256xf32, #tpu.memory_space<vmem>>, vector<16x256xf32>,
    return
  }
  func.func @transform_0(%arg0: i32) -> (i32, i32) {
    %c0_i32 = arith.constant 0 : i32
    %c0_i32_0 = arith.constant 0 : i32
    return %arg0, %c0_i32 : i32, i32
  }
  func.func @transform_1(%arg0: i32) -> (i32, i32) {
    %c0_i32 = arith.constant 0 : i32
    %c0_i32_0 = arith.constant 0 : i32
    %c0_i32_1 = arith.constant 0 : i32
    return %c0_i32, %c0_i32_0 : i32, i32
  }
  func.func @transform_2(%arg0: i32) -> (i32, i32) {
    %c0_i32 = arith.constant 0 : i32
    %c0_i32_0 = arith.constant 0 : i32
    %c0_i32_1 = arith.constant 0 : i32
    return %c0_i32, %c0_i32_0 : i32, i32
  }
  func.func @transform_3(%arg0: i32) -> (i32, i32) {
    %c0_i32 = arith.constant 0 : i32
    %c0_i32_0 = arith.constant 0 : i32
    return %arg0, %c0_i32 : i32, i32
  }
}

</mosaic_0001>

<llo_original>
// kernel: tpu_custom_call.1
$region0: #{tpu_custom_call.1}
  #allocation0 [shape = 'u32[]', space=smem, size = 0x4, offset = 0x4, fixed_abs, tag = 'smem constant byte address 0x4 - core index']
  #allocation1 [shape = 'u32[144,128]{1,0:T(1,128)}', space=vmem, size = 0x12000, scoped, tag = 'internal scratch']
  %s0 = inlined_call_operand.hbm [shape: f32[16,128], index: 0, kind: input, shape index: {}]
  %s1 = inlined_call_operand.hbm [shape: f32[8,128], index: 1, kind: input, shape index: {}]
  %s2 = inlined_call_operand.hbm [shape: f32[16,128], index: 2, kind: output, shape index: {}]
  %s3 = sld [smem:[#allocation0]]
  $region49: #{tpu_custom_call.1} parent=0
    _
  %s5 = ssub.s32 1, %s3
  %s6 = scalar_select 0, %s5, %s3
  $region1: #{tpu_custom_call.1} parent=0
    #allocation2 [shape = 'u8[8192]{0}', space=vmem, size = 0x2000, scoped, tag = 'input window, operand 0']
    #allocation3 [shape = 's32[2]{0}', space=sflag, size = 0x8, scoped, tag = 'scoped memory for tpu_custom_call.1']
    #allocation4 [shape = 's32[2]{0}', space=sflag, size = 0x8, scoped, tag = 'scoped memory for tpu_custom_call.1']
    #allocation5 [shape = 'u8[4096]{0}', space=vmem, size = 0x1000, scoped, tag = 'input window, operand 1, single buffered']
    #allocation6 [shape = 's32[1]{0}', space=sflag, size = 0x4, scoped, tag = 'scoped memory for tpu_custom_call.1']
    #allocation7 [shape = 'u8[8192]{0}', space=vmem, size = 0x2000, scoped, tag = 'output window, operand 0']
    %7 = vsyncpa [#allocation3], 0
    %s8 = scalar_lea.sflag [#allocation3], 1
    %9 = vsyncpa %s8, 0
    %10 = vsyncpa [#allocation6], 0
    %11 = vsyncpa [#allocation4], 0
    %s12 = scalar_lea.sflag [#allocation4], 1
    %13 = vsyncpa %s12, 0
    loop: start=0, step=1, limit=4
    $region2: #{tpu_custom_call.1} parent=1 // loop_pre_header
      _
    $region3: #{tpu_custom_call.1} parent=1 // loop_header
      %s15 = sphi 0, %s19
      %p16 = scmp.ge.s32.totalorder %s15, 4
      %s25 = sphi 0, %s27
      %s28 = sphi 0, %s25
      %s29 = sphi 0, %s28
      %s45 = sphi 0, %s29
      %s49 = sphi 0, %s49
      %s51 = sphi 0, %s49
      %s52 = sphi 0, %s51
      %s66 = sphi 0, %s52
      %s72 = sphi 0, %s74
      %s75 = sphi 0, %s72
      %s76 = sphi 0, %s75
      %s92 = sphi 0, %s76
    $region4: #{tpu_custom_call.1} parent=1 // loop_header_branch
      %18 = sbr.rel (%p16) target = $region8
    $region5: #{tpu_custom_call.1} parent=1 // loop_body
      %s20 = ssub.s32 %s15, 1
      %s21 = ssub.s32 %s15, 2
      %s22 = sadd.s32 %s15, 1
      %s23 = ssub.s32 %s15, %s22
      %p24 = scmp.eq.s32.totalorder %s23, 0
      %s26 = sadd.s32 %s25, 1
      %s27 = scalar_select %p24, %s25, %s26
      %p30 = pneg %p24
      %p31 = scmp.eq.s32.totalorder %s15, 1
      %p32 = por %p30, %p31
      %p33 = scmp.ne.s32.totalorder %s25, %s28
      %p34 = scmp.eq.s32.totalorder %s15, 0
      %p35 = por %p33, %p34
      %p36 = scmp.ne.s32.totalorder %s25, %s28
      %p37 = scmp.eq.s32.totalorder %s20, 1
      %p38 = por %p36, %p37
      %p39 = scmp.ne.s32.totalorder %s28, %s29
      %p40 = scmp.eq.s32.totalorder %s20, 0
      %p41 = por %p39, %p40
      %p42 = scmp.ne.s32.totalorder %s28, %s29
      %p43 = scmp.eq.s32.totalorder %s21, 1
      %p44 = por %p42, %p43
      %p46 = scmp.ne.s32.totalorder %s29, %s45
      %p47 = scmp.eq.s32.totalorder %s21, 0
      %p48 = por %p46, %p47
      %s50 = sadd.s32 %s49, 1
      %p53 = scmp.eq.s32.totalorder %s15, 1
      %p54 = scmp.ne.s32.totalorder %s49, %s51
      %p55 = scmp.eq.s32.totalorder %s15, 0
      %p56 = por %p54, %p55
      %p57 = scmp.ne.s32.totalorder %s49, %s51
      %p58 = scmp.eq.s32.totalorder %s20, 1
      %p59 = por %p57, %p58
      %p60 = scmp.ne.s32.totalorder %s51, %s52
      %p61 = scmp.eq.s32.totalorder %s20, 0
      %p62 = por %p60, %p61
      %p63 = scmp.ne.s32.totalorder %s51, %s52
      %p64 = scmp.eq.s32.totalorder %s21, 1
      %p65 = por %p63, %p64
      %p67 = scmp.ne.s32.totalorder %s52, %s66
      %p68 = scmp.eq.s32.totalorder %s21, 0
      %p69 = por %p67, %p68
      %s70 = ssub.s32 %s15, %s22
      %p71 = scmp.eq.s32.totalorder %s70, 0
      %s73 = sadd.s32 %s72, 1
      %s74 = scalar_select %p71, %s72, %s73
      %p77 = pneg %p71
      %p78 = scmp.eq.s32.totalorder %s15, 1
      %p79 = por %p77, %p78
      %p80 = scmp.ne.s32.totalorder %s72, %s75
      %p81 = scmp.eq.s32.totalorder %s15, 0
      %p82 = por %p80, %p81
      %p83 = scmp.ne.s32.totalorder %s72, %s75
      %p84 = scmp.eq.s32.totalorder %s20, 1
      %p85 = por %p83, %p84
      %p86 = scmp.ne.s32.totalorder %s75, %s76
      %p87 = scmp.eq.s32.totalorder %s20, 0
      %p88 = por %p86, %p87
      %p89 = scmp.ne.s32.totalorder %s75, %s76
      %p90 = scmp.eq.s32.totalorder %s21, 1
      %p91 = por %p89, %p90
      %p93 = scmp.ne.s32.totalorder %s76, %s92
      %p94 = scmp.eq.s32.totalorder %s21, 0
      %p95 = por %p93, %p94
      %p96 = scmp.le.s32.totalorder 1, %s15
      %p97 = scmp.lt.s32.totalorder %s15, 3
      %p98 = pnand %p96, %p97
      %p99 = pneg %p98
      // Predicated region
      $region9: #{tpu_custom_call.1} parent=5 // pred_check
        _
      $region10: #{tpu_custom_call.1} parent=5 // pred_check_branch
        %101 = sbr.rel (%p98) target = $region12
      $region11: #{tpu_custom_call.1} parent=5 // pred_region
        %s102 = ssub.s32 %s15, 1
        // Predicated region
        $region13: #{tpu_custom_call.1} parent=11 // pred_check
          %p103 = pneg %p62
        $region14: #{tpu_custom_call.1} parent=11 // pred_check_branch
          %105 = sbr.rel (%p103) target = $region16
        $region15: #{tpu_custom_call.1} parent=11 // pred_region
          %s107 = ssub.s32 128, 128
          %108 = vsyncadd [#allocation6], %s107
          %s110 = sshll.u32 [#allocation5], 4
          %s111 = int_to_ptr.vmem [resolvable:$true] %s110
          %113 = dma.hbm_to_vmem [thread:$0]  %s1, 128, %s111, [#allocation6]
        $region16: #{tpu_custom_call.1} parent=11 // pred_fallthru
          _
      $region12: #{tpu_custom_call.1} parent=5 // pred_fallthru
        _
      %p114 = scmp.lt.s32.totalorder %s15, 2
      // Predicated region
      $region17: #{tpu_custom_call.1} parent=5 // pred_check
        %p115 = pneg %p114
      $region18: #{tpu_custom_call.1} parent=5 // pred_check_branch
        %117 = sbr.rel (%p115) target = $region20
      $region19: #{tpu_custom_call.1} parent=5 // pred_region
        // Predicated region
        $region21: #{tpu_custom_call.1} parent=19 // pred_check
          %p118 = pneg %p35
        $region22: #{tpu_custom_call.1} parent=19 // pred_check_branch
          %120 = sbr.rel (%p118) target = $region24
        $region23: #{tpu_custom_call.1} parent=19 // pred_region
          %s121 = sand.u32 %s25, 1
          %s122 = scalar_lea.sflag [#allocation3], %s121
          %s123 = sand.u32 %s25, 1
          %s124 = smul.addr %s123, 8
          %s125 = scalar_lea.vmem [#allocation2], %s124
          %s127 = ssub.s32 128, 128
          %128 = vsyncadd %s122, %s127
          %s129 = smul.addr %s15, 128
          %s130 = scalar_lea.hbm %s0, %s129
          %s132 = sshll.u32 %s125, 4
          %s133 = int_to_ptr.vmem [resolvable:$true] %s132
          %135 = dma.hbm_to_vmem [thread:$0]  %s130, 128, %s133, %s122
        $region24: #{tpu_custom_call.1} parent=19 // pred_fallthru
          _
      $region20: #{tpu_custom_call.1} parent=5 // pred_fallthru
        _
      %p136 = scmp.le.s32.totalorder 1, %s15
      %p137 = scmp.lt.s32.totalorder %s15, 3
      %p138 = pnand %p136, %p137
      %p139 = pneg %p138
      // Predicated region
      $region25: #{tpu_custom_call.1} parent=5 // pred_check
        _
      $region26: #{tpu_custom_call.1} parent=5 // pred_check_branch
        %141 = sbr.rel (%p138) target = $region28
      $region27: #{tpu_custom_call.1} parent=5 // pred_region
        %s142 = ssub.s32 %s15, 1
        %s143 = sand.u32 %s28, 1
        %s144 = scalar_lea.sflag [#allocation3], %s143
        %s145 = sand.u32 %s28, 1
        %s146 = smul.addr %s145, 8
        %s147 = scalar_lea.vmem [#allocation2], %s146
        // Predicated region
        $region29: #{tpu_custom_call.1} parent=27 // pred_check
          %p148 = pneg %p41
        $region30: #{tpu_custom_call.1} parent=27 // pred_check_branch
          %150 = sbr.rel (%p148) target = $region32
        $region31: #{tpu_custom_call.1} parent=27 // pred_region
          %151 = dma.done %s144, 128
        $region32: #{tpu_custom_call.1} parent=27 // pred_fallthru
          _
        // Predicated region
        $region33: #{tpu_custom_call.1} parent=27 // pred_check
          %p152 = pneg %p62
        $region34: #{tpu_custom_call.1} parent=27 // pred_check_branch
          %154 = sbr.rel (%p152) target = $region36
        $region35: #{tpu_custom_call.1} parent=27 // pred_region
          %155 = dma.done [#allocation6], 128
        $region36: #{tpu_custom_call.1} parent=27 // pred_fallthru
          _
        %s156 = sand.u32 %s28, 1
        %s157 = scalar_lea.sflag [#allocation3], %s156
        %s158 = sand.u32 %s28, 1
        %s159 = smul.addr %s158, 8
        %s160 = scalar_lea.vmem [#allocation2], %s159
        %p161 = pneg %p41
        %p162 = pneg %p38
        %p163 = pneg %p62
        %p164 = pneg %p59
        %p165 = pneg %p88
        %p166 = pneg %p85
        %s167 = sand.u32 %s75, 1
        %s168 = scalar_lea.sflag [#allocation4], %s167
        %s169 = sand.u32 %s75, 1
        %s170 = smul.addr %s169, 8
        %s171 = scalar_lea.vmem [#allocation7], %s170
        %v172 = vld [vmem:[%s147] sm:$0xff]
        %v173 = vld [vmem:[#allocation5] sm:$0xff]
        %v174 = vadd.f32 %v172, %v173
        %175 = vst [vmem:[%s171] sm:$0xff] %v174
        %s176 = sand.u32 %s75, 1
        %s177 = scalar_lea.sflag [#allocation4], %s176
        %s178 = sand.u32 %s75, 1
        %s179 = smul.addr %s178, 8
        %s180 = scalar_lea.vmem [#allocation7], %s179
        // Predicated region
        $region37: #{tpu_custom_call.1} parent=27 // pred_check
          %p181 = pneg %p85
        $region38: #{tpu_custom_call.1} parent=27 // pred_check_branch
          %183 = sbr.rel (%p181) target = $region40
        $region39: #{tpu_custom_call.1} parent=27 // pred_region
          %s185 = ssub.s32 128, 128
          %186 = vsyncadd %s177, %s185
          %s187 = smul.addr %s20, 128
          %s188 = scalar_lea.hbm %s2, %s187
          %s190 = sshll.u32 %s180, 4
          %s191 = int_to_ptr.vmem [resolvable:$true] %s190
          %193 = dma.vmem_to_hbm [thread:$0]  %s191, 128, %s188, %s177
        $region40: #{tpu_custom_call.1} parent=27 // pred_fallthru
          _
      $region28: #{tpu_custom_call.1} parent=5 // pred_fallthru
        _
      %p194 = scmp.le.s32.totalorder 2, %s15
      // Predicated region
      $region41: #{tpu_custom_call.1} parent=5 // pred_check
        %p195 = pneg %p194
      $region42: #{tpu_custom_call.1} parent=5 // pred_check_branch
        %197 = sbr.rel (%p195) target = $region44
      $region43: #{tpu_custom_call.1} parent=5 // pred_region
        %s198 = ssub.s32 %s15, 2
        // Predicated region
        $region45: #{tpu_custom_call.1} parent=43 // pred_check
          %p199 = pneg %p91
        $region46: #{tpu_custom_call.1} parent=43 // pred_check_branch
          %201 = sbr.rel (%p199) target = $region48
        $region47: #{tpu_custom_call.1} parent=43 // pred_region
          %s202 = sand.u32 %s76, 1
          %s203 = scalar_lea.sflag [#allocation4], %s202
          %s204 = sand.u32 %s76, 1
          %s205 = smul.addr %s204, 8
          %s206 = scalar_lea.vmem [#allocation7], %s205
          %207 = dma.done %s203, 128
        $region48: #{tpu_custom_call.1} parent=43 // pred_fallthru
          _
      $region44: #{tpu_custom_call.1} parent=5 // pred_fallthru
        _
    $region6: #{tpu_custom_call.1} parent=1 // loop_footer
      %s19 = sadd.s32 1, %s15
    $region7: #{tpu_custom_call.1} parent=1 // loop_footer_branch
      %14 = sbr.rel target = $region3
    $region8: #{tpu_custom_call.1} parent=1 // loop_exit
      _
    %208 = vsyncpa [#allocation3], 1
    %s209 = scalar_lea.sflag [#allocation3], 1
    %210 = vsyncpa %s209, 1
    %211 = vsyncpa [#allocation6], 1
    %212 = vsyncpa [#allocation4], 1
    %s213 = scalar_lea.sflag [#allocation4], 1
    %214 = vsyncpa %s213, 1

// kernel: transformer_forward.12
$region0: #{transformer_forward.12}
  #allocation0 [shape = 'u32[]', space=smem, size = 0x4, offset = 0x4, fixed_abs, tag = 'smem constant byte address 0x4 - core index']
  #allocation1 [shape = 'u32[144,128]{1,0:T(1,128)}', space=vmem, size = 0x12000, scoped, tag = 'internal scratch']
  %s0 = inlined_call_operand.vmem [shape: f32[16,128], index: 0, kind: input, shape index: {}]
  %s1 = inlined_call_operand.vmem [shape: bf16[128,256], index: 1, kind: input, shape index: {}]
  %s2 = inlined_call_operand.vmem [shape: f32[1,256], index: 2, kind: input, shape index: {}]
  %s3 = inlined_call_operand.vmem [shape: bf16[256,128], index: 3, kind: input, shape index: {}]
  %s4 = inlined_call_operand.vmem [shape: f32[1,128], index: 4, kind: input, shape index: {}]
  %s5 = inlined_call_operand.vmem [shape: f32[1,128], index: 5, kind: input, shape index: {}]
  %s6 = inlined_call_operand.vmem [shape: f32[1,128], index: 6, kind: input, shape index: {}]
  %s7 = inlined_call_operand.vmem [shape: f32[16,128], index: 7, kind: output, shape index: {}]
  %s8 = sld [smem:[#allocation0]]
  $region38: #{transformer_forward.12} parent=0
    _
  %s10 = ssub.s32 1, %s8
  %s11 = scalar_select 0, %s10, %s8
  // Predicated region
  $region2: #{transformer_forward.12} parent=0 // pred_check
    _
  $region3: #{transformer_forward.12} parent=0 // pred_check_branch
    %13 = sbr.rel (0) target = $region5
  $region4: #{transformer_forward.12} parent=0 // pred_region
    _
  $region5: #{transformer_forward.12} parent=0 // pred_fallthru
    _
  // Predicated region
  $region6: #{transformer_forward.12} parent=0 // pred_check
    _
  $region7: #{transformer_forward.12} parent=0 // pred_check_branch
    %15 = sbr.rel (0) target = $region9
  $region8: #{transformer_forward.12} parent=0 // pred_region
    _
  $region9: #{transformer_forward.12} parent=0 // pred_fallthru
    _
  // Predicated region
  $region10: #{transformer_forward.12} parent=0 // pred_check
    _
  $region11: #{transformer_forward.12} parent=0 // pred_check_branch
    %17 = sbr.rel (0) target = $region13
  $region12: #{transformer_forward.12} parent=0 // pred_region
    _
  $region13: #{transformer_forward.12} parent=0 // pred_fallthru
    _
  // Predicated region
  $region14: #{transformer_forward.12} parent=0 // pred_check
    _
  $region15: #{transformer_forward.12} parent=0 // pred_check_branch
    %19 = sbr.rel (0) target = $region17
  $region16: #{transformer_forward.12} parent=0 // pred_region
    _
  $region17: #{transformer_forward.12} parent=0 // pred_fallthru
    _
  // Predicated region
  $region18: #{transformer_forward.12} parent=0 // pred_check
    _
  $region19: #{transformer_forward.12} parent=0 // pred_check_branch
    %21 = sbr.rel (0) target = $region21
  $region20: #{transformer_forward.12} parent=0 // pred_region
    _
  $region21: #{transformer_forward.12} parent=0 // pred_fallthru
    _
  // Predicated region
  $region22: #{transformer_forward.12} parent=0 // pred_check
    _
  $region23: #{transformer_forward.12} parent=0 // pred_check_branch
    %23 = sbr.rel (0) target = $region25
  $region24: #{transformer_forward.12} parent=0 // pred_region
    _
  $region25: #{transformer_forward.12} parent=0 // pred_fallthru
    _
  // Predicated region
  $region26: #{transformer_forward.12} parent=0 // pred_check
    _
  $region27: #{transformer_forward.12} parent=0 // pred_check_branch
    %25 = sbr.rel (0) target = $region29
  $region28: #{transformer_forward.12} parent=0 // pred_region
    _
  $region29: #{transformer_forward.12} parent=0 // pred_fallthru
    _
  %v27 = vld [vmem:[%s0] sm:$0xff]
  %v28 = vld [vmem:[%s0 + $0x8] sm:$0xff]
  %v29 = vpack.c.bf16 %v28, %v27
  %v30 = vld [vmem:[%s1] sm:$0xff]
  %v31 = vld [vmem:[%s1 + $0x8] sm:$0xff]
  %v32 = vld [vmem:[%s1 + $0x10] sm:$0xff]
  %v33 = vld [vmem:[%s1 + $0x18] sm:$0xff]
  %v34 = vld [vmem:[%s1 + $0x20] sm:$0xff]
  %v35 = vld [vmem:[%s1 + $0x28] sm:$0xff]
  %v36 = vld [vmem:[%s1 + $0x30] sm:$0xff]
  %v37 = vld [vmem:[%s1 + $0x38] sm:$0xff]
  %v38 = vld [vmem:[%s1 + $0x40] sm:$0xff]
  %v39 = vld [vmem:[%s1 + $0x48] sm:$0xff]
  %v40 = vld [vmem:[%s1 + $0x50] sm:$0xff]
  %v41 = vld [vmem:[%s1 + $0x58] sm:$0xff]
  %v42 = vld [vmem:[%s1 + $0x60] sm:$0xff]
  %v43 = vld [vmem:[%s1 + $0x68] sm:$0xff]
  %v44 = vld [vmem:[%s1 + $0x70] sm:$0xff]
  %v45 = vld [vmem:[%s1 + $0x78] sm:$0xff]
  %v46 = vld [vmem:[%s2] sm:$0x3]
  %v48 = vlaneseq
  %v49 = vshrl.u32 %v48, 7
  %v50 = vsub.s32 0, %v49
  %v51 = vrot.slane %v46, %v50
  %v52 = vlaneseq
  %v53 = vshrl.u32 %v52, 7
  %v54 = vsub.s32 1, %v53
  %v55 = vrot.slane %v46, %v54
  %v74 = vunpack.c.l.b16 %v30
  %v75 = vunpack.c.h.b16 %v30
  %v76 = vunpack.c.l.b16 %v31
  %v77 = vunpack.c.h.b16 %v31
  %v78 = vunpack.c.l.b16 %v32
  %v79 = vunpack.c.h.b16 %v32
  %v80 = vunpack.c.l.b16 %v33
  %v81 = vunpack.c.h.b16 %v33
  %v82 = vunpack.c.l.b16 %v34
  %v83 = vunpack.c.h.b16 %v34
  %v84 = vunpack.c.l.b16 %v35
  %v85 = vunpack.c.h.b16 %v35
  %v86 = vunpack.c.l.b16 %v36
  %v87 = vunpack.c.h.b16 %v36
  %v88 = vunpack.c.l.b16 %v37
  %v89 = vunpack.c.h.b16 %v37
  %v90 = vunpack.c.l.b16 %v38
  %v91 = vunpack.c.h.b16 %v38
  %v92 = vunpack.c.l.b16 %v39
  %v93 = vunpack.c.h.b16 %v39
  %v94 = vunpack.c.l.b16 %v40
  %v95 = vunpack.c.h.b16 %v40
  %v96 = vunpack.c.l.b16 %v41
  %v97 = vunpack.c.h.b16 %v41
  %v98 = vunpack.c.l.b16 %v42
  %v99 = vunpack.c.h.b16 %v42
  %v100 = vunpack.c.l.b16 %v43
  %v101 = vunpack.c.h.b16 %v43
  %v102 = vunpack.c.l.b16 %v44
  %v103 = vunpack.c.h.b16 %v44
  %v104 = vunpack.c.l.b16 %v45
  %v105 = vunpack.c.h.b16 %v45
  %v106 = vpack.c.b16 %v76, %v74
  %v107 = vpack.c.b16 %v77, %v75
  %v108 = vpack.c.b16 %v80, %v78
  %v109 = vpack.c.b16 %v81, %v79
  %v110 = vpack.c.b16 %v84, %v82
  %v111 = vpack.c.b16 %v85, %v83
  %v112 = vpack.c.b16 %v88, %v86
  %v113 = vpack.c.b16 %v89, %v87
  %v114 = vpack.c.b16 %v92, %v90
  %v115 = vpack.c.b16 %v93, %v91
  %v116 = vpack.c.b16 %v96, %v94
  %v117 = vpack.c.b16 %v97, %v95
  %v118 = vpack.c.b16 %v100, %v98
  %v119 = vpack.c.b16 %v101, %v99
  %v120 = vpack.c.b16 %v104, %v102
  %v121 = vpack.c.b16 %v105, %v103
  %138 = vmatprep.subr.bf16.mxu0 %v107
  %139 = vmatpush1.bf16.msra.mxu0 %v106
  %140 = vmatprep.subr.bf16.mxu0 %v109
  %141 = vmatpush1.bf16.msra.mxu0 %v108
  %142 = vmatprep.subr.bf16.mxu0 %v111
  %143 = vmatpush1.bf16.msra.mxu0 %v110
  %144 = vmatprep.subr.bf16.mxu0 %v113
  %145 = vmatpush1.bf16.msra.mxu0 %v112
  %146 = vmatprep.subr.bf16.mxu0 %v115
  %147 = vmatpush1.bf16.msra.mxu0 %v114
  %148 = vmatprep.subr.bf16.mxu0 %v117
  %149 = vmatpush1.bf16.msra.mxu0 %v116
  %150 = vmatprep.subr.bf16.mxu0 %v119
  %151 = vmatpush1.bf16.msra.mxu0 %v118
  %152 = vmatprep.subr.bf16.mxu0 %v121
  %153 = vmatpush1.bf16.msra.mxu0 %v120
  %154 = vmatprep.subr.bf16.mxu0 0
  %155 = vmatpush1.bf16.msra.mxu0 0
  %156 = vmatprep.subr.bf16.mxu0 0
  %157 = vmatpush1.bf16.msra.mxu0 0
  %158 = vmatprep.subr.bf16.mxu0 0
  %159 = vmatpush1.bf16.msra.mxu0 0
  %160 = vmatprep.subr.bf16.mxu0 0
  %161 = vmatpush1.bf16.msra.mxu0 0
  %162 = vmatprep.subr.bf16.mxu0 0
  %163 = vmatpush1.bf16.msra.mxu0 0
  %164 = vmatprep.subr.bf16.mxu0 0
  %165 = vmatpush1.bf16.msra.mxu0 0
  %166 = vmatprep.subr.bf16.mxu0 0
  %167 = vmatpush1.bf16.msra.mxu0 0
  %168 = vmatprep.subr.bf16.mxu0 0
  %169 = vmatpush1.bf16.msra.mxu0 0
  %170 = vmatprep.mubr.bf16.mxu0 0
  %171 = vmatmul.mubr.bf16.gmra.mrb[0].mxu0 %v29
  %v172 = vpop.f32.mrb[0].mxu0
  %v173 = vadd.f32 %v51, %v172
  %v174 = vpop.f32.mrb[0].mxu0
  %v175 = vadd.f32 %v55, %v174
  %v176 = vpop.f32.mrb[0].mxu0
  %v177 = vadd.f32 %v51, %v176
  %v178 = vpop.f32.mrb[0].mxu0
  %v179 = vadd.f32 %v55, %v178
  %180 = vdwg.mxu0
  %v181 = vmax.f32 %v173, 0.0
  %v182 = vmax.f32 %v175, 0.0
  %v183 = vmax.f32 %v177, 0.0
  %v184 = vmax.f32 %v179, 0.0
  %v185 = vpack.c.bf16 %v183, %v181
  %v186 = vpack.c.bf16 %v184, %v182
  %v187 = vld [vmem:[%s3] sm:$0xf]
  %v188 = vld [vmem:[%s3 + $0x4] sm:$0xf]
  %v189 = vld [vmem:[%s3 + $0x8] sm:$0xf]
  %v190 = vld [vmem:[%s3 + $0xc] sm:$0xf]
  %v191 = vld [vmem:[%s3 + $0x10] sm:$0xf]
  %v192 = vld [vmem:[%s3 + $0x14] sm:$0xf]
  %v193 = vld [vmem:[%s3 + $0x18] sm:$0xf]
  %v194 = vld [vmem:[%s3 + $0x1c] sm:$0xf]
  %v195 = vld [vmem:[%s3 + $0x20] sm:$0xf]
  %v196 = vld [vmem:[%s3 + $0x24] sm:$0xf]
  %v197 = vld [vmem:[%s3 + $0x28] sm:$0xf]
  %v198 = vld [vmem:[%s3 + $0x2c] sm:$0xf]
  %v199 = vld [vmem:[%s3 + $0x30] sm:$0xf]
  %v200 = vld [vmem:[%s3 + $0x34] sm:$0xf]
  %v201 = vld [vmem:[%s3 + $0x38] sm:$0xf]
  %v202 = vld [vmem:[%s3 + $0x3c] sm:$0xf]
  %v203 = vld [vmem:[%s3 + $0x40] sm:$0xf]
  %v204 = vld [vmem:[%s3 + $0x44] sm:$0xf]
  %v205 = vld [vmem:[%s3 + $0x48] sm:$0xf]
  %v206 = vld [vmem:[%s3 + $0x4c] sm:$0xf]
  %v207 = vld [vmem:[%s3 + $0x50] sm:$0xf]
  %v208 = vld [vmem:[%s3 + $0x54] sm:$0xf]
  %v209 = vld [vmem:[%s3 + $0x58] sm:$0xf]
  %v210 = vld [vmem:[%s3 + $0x5c] sm:$0xf]
  %v211 = vld [vmem:[%s3 + $0x60] sm:$0xf]
  %v212 = vld [vmem:[%s3 + $0x64] sm:$0xf]
  %v213 = vld [vmem:[%s3 + $0x68] sm:$0xf]
  %v214 = vld [vmem:[%s3 + $0x6c] sm:$0xf]
  %v215 = vld [vmem:[%s3 + $0x70] sm:$0xf]
  %v216 = vld [vmem:[%s3 + $0x74] sm:$0xf]
  %v217 = vld [vmem:[%s3 + $0x78] sm:$0xf]
  %v218 = vld [vmem:[%s3 + $0x7c] sm:$0xf]
  %v219 = vld [vmem:[%s4] sm:$0x1]
  %v221 = vlaneseq
  %v222 = vshrl.u32 %v221, 7
  %v223 = vsub.s32 0, %v222
  %v224 = vrot.slane %v219, %v223
  %v258 = vunpack.c.l.b16 %v187
  %v259 = vunpack.c.l.b16 %v188
  %v260 = vunpack.c.l.b16 %v189
  %v261 = vunpack.c.l.b16 %v190
  %v262 = vunpack.c.l.b16 %v191
  %v263 = vunpack.c.l.b16 %v192
  %v264 = vunpack.c.l.b16 %v193
  %v265 = vunpack.c.l.b16 %v194
  %v266 = vunpack.c.l.b16 %v195
  %v267 = vunpack.c.l.b16 %v196
  %v268 = vunpack.c.l.b16 %v197
  %v269 = vunpack.c.l.b16 %v198
  %v270 = vunpack.c.l.b16 %v199
  %v271 = vunpack.c.l.b16 %v200
  %v272 = vunpack.c.l.b16 %v201
  %v273 = vunpack.c.l.b16 %v202
  %v274 = vunpack.c.l.b16 %v203
  %v275 = vunpack.c.l.b16 %v204
  %v276 = vunpack.c.l.b16 %v205
  %v277 = vunpack.c.l.b16 %v206
  %v278 = vunpack.c.l.b16 %v207
  %v279 = vunpack.c.l.b16 %v208
  %v280 = vunpack.c.l.b16 %v209
  %v281 = vunpack.c.l.b16 %v210
  %v282 = vunpack.c.l.b16 %v211
  %v283 = vunpack.c.l.b16 %v212
  %v284 = vunpack.c.l.b16 %v213
  %v285 = vunpack.c.l.b16 %v214
  %v286 = vunpack.c.l.b16 %v215
  %v287 = vunpack.c.l.b16 %v216
  %v288 = vunpack.c.l.b16 %v217
  %v289 = vunpack.c.l.b16 %v218
  %v290 = vpack.c.b16 %v259, %v258
  %v291 = vpack.c.b16 %v261, %v260
  %v292 = vpack.c.b16 %v263, %v262
  %v293 = vpack.c.b16 %v265, %v264
  %v294 = vpack.c.b16 %v267, %v266
  %v295 = vpack.c.b16 %v269, %v268
  %v296 = vpack.c.b16 %v271, %v270
  %v297 = vpack.c.b16 %v273, %v272
  %v298 = vpack.c.b16 %v275, %v274
  %v299 = vpack.c.b16 %v277, %v276
  %v300 = vpack.c.b16 %v279, %v278
  %v301 = vpack.c.b16 %v281, %v280
  %v302 = vpack.c.b16 %v283, %v282
  %v303 = vpack.c.b16 %v285, %v284
  %v304 = vpack.c.b16 %v287, %v286
  %v305 = vpack.c.b16 %v289, %v288
  %322 = vmatprep.subr.bf16.mxu0 0
  %323 = vmatpush1.bf16.msra.mxu0 %v290
  %324 = vmatprep.subr.bf16.mxu0 0
  %325 = vmatpush1.bf16.msra.mxu0 %v291
  %326 = vmatprep.subr.bf16.mxu0 0
  %327 = vmatpush1.bf16.msra.mxu0 %v292
  %328 = vmatprep.subr.bf16.mxu0 0
  %329 = vmatpush1.bf16.msra.mxu0 %v293
  %330 = vmatprep.subr.bf16.mxu0 0
  %331 = vmatpush1.bf16.msra.mxu0 %v294
  %332 = vmatprep.subr.bf16.mxu0 0
  %333 = vmatpush1.bf16.msra.mxu0 %v295
  %334 = vmatprep.subr.bf16.mxu0 0
  %335 = vmatpush1.bf16.msra.mxu0 %v296
  %336 = vmatprep.subr.bf16.mxu0 0
  %337 = vmatpush1.bf16.msra.mxu0 %v297
  %338 = vmatprep.subr.bf16.mxu0 0
  %339 = vmatpush1.bf16.msra.mxu0 %v298
  %340 = vmatprep.subr.bf16.mxu0 0
  %341 = vmatpush1.bf16.msra.mxu0 %v299
  %342 = vmatprep.subr.bf16.mxu0 0
  %343 = vmatpush1.bf16.msra.mxu0 %v300
  %344 = vmatprep.subr.bf16.mxu0 0
  %345 = vmatpush1.bf16.msra.mxu0 %v301
  %346 = vmatprep.subr.bf16.mxu0 0
  %347 = vmatpush1.bf16.msra.mxu0 %v302
  %348 = vmatprep.subr.bf16.mxu0 0
  %349 = vmatpush1.bf16.msra.mxu0 %v303
  %350 = vmatprep.subr.bf16.mxu0 0
  %351 = vmatpush1.bf16.msra.mxu0 %v304
  %352 = vmatprep.subr.bf16.mxu0 0
  %353 = vmatpush1.bf16.msra.mxu0 %v305
  %354 = vmatprep.mubr.bf16.mxu0 %v186
  %355 = vmatmul.mubr.bf16.gmra.mrb[0].mxu0 %v185
  %v356 = vpop.f32.mrb[0].mxu0
  %v357 = vadd.f32 %v224, %v356
  %v358 = vpop.f32.mrb[0].mxu0
  %v359 = vpop.f32.mrb[0].mxu0
  %v360 = vadd.f32 %v224, %v359
  %v361 = vpop.f32.mrb[0].mxu0
  %362 = vdwg.mxu0
  %v363 = vadd.f32 %v357, %v27
  %v364 = vadd.f32 %v360, %v28
  %365 = vadd.xlane.f32.xlu0 %v363
  %v366 = vpop.xlane.xlu0 %365
  %367 = vadd.xlane.f32.xlu0 %v364
  %v368 = vpop.xlane.xlu0 %367
  %v369 = vrcp.pop 128.0
  %v370 = vmul.f32 %v366, %v369
  %v371 = vmul.f32 %v368, %v369
  %v372 = vsub.f32 %v363, %v370
  %v373 = vsub.f32 %v364, %v371
  %v374 = vmul.f32 %v372, %v372
  %v375 = vmul.f32 %v373, %v373
  %376 = vadd.xlane.f32.xlu0 %v374
  %v377 = vpop.xlane.xlu0 %376
  %378 = vadd.xlane.f32.xlu0 %v375
  %v379 = vpop.xlane.xlu0 %378
  %v380 = vmul.f32 %v377, %v369
  %v381 = vmul.f32 %v379, %v369
  %v382 = vadd.f32 %v380, 1e-05
  %v383 = vadd.f32 %v381, 1e-05
  %v384 = vrsqrt.pop %v382
  %v385 = vrsqrt.pop %v383
  %v386 = vmul.f32 %v372, %v384
  %v387 = vmul.f32 %v373, %v385
  %v388 = vld [vmem:[%s5] sm:$0x1]
  %v390 = vlaneseq
  %v391 = vshrl.u32 %v390, 7
  %v392 = vsub.s32 0, %v391
  %v393 = vrot.slane %v388, %v392
  %v395 = vmul.f32 %v386, %v393
  %v396 = vmul.f32 %v387, %v393
  %v397 = vld [vmem:[%s6] sm:$0x1]
  %v399 = vlaneseq
  %v400 = vshrl.u32 %v399, 7
  %v401 = vsub.s32 0, %v400
  %v402 = vrot.slane %v397, %v401
  %v404 = vadd.f32 %v395, %v402
  %v405 = vadd.f32 %v396, %v402
  %406 = vst [vmem:[%s7] sm:$0xff] %v404
  %407 = vst [vmem:[%s7 + $0x8] sm:$0xff] %v405
  // Predicated region
  $region30: #{transformer_forward.12} parent=0 // pred_check
    _
  $region31: #{transformer_forward.12} parent=0 // pred_check_branch
    %409 = sbr.rel (0) target = $region33
  $region32: #{transformer_forward.12} parent=0 // pred_region
    _
  $region33: #{transformer_forward.12} parent=0 // pred_fallthru
    _
  // Predicated region
  $region34: #{transformer_forward.12} parent=0 // pred_check
    _
  $region35: #{transformer_forward.12} parent=0 // pred_check_branch
    %411 = sbr.rel (0) target = $region37
  $region36: #{transformer_forward.12} parent=0 // pred_region
    _
  $region37: #{transformer_forward.12} parent=0 // pred_fallthru
    _

// kernel: transformer_forward.21
$region0: #{transformer_forward.21}
  #allocation0 [shape = 'u32[]', space=smem, size = 0x4, offset = 0x4, fixed_abs, tag = 'smem constant byte address 0x4 - core index']
  #allocation1 [shape = 'u32[144,128]{1,0:T(1,128)}', space=vmem, size = 0x12000, scoped, tag = 'internal scratch']
  %s0 = inlined_call_operand.vmem [shape: f32[16,128], index: 0, kind: input, shape index: {}]
  %s1 = inlined_call_operand.vmem [shape: bf16[128,256], index: 1, kind: input, shape index: {}]
  %s2 = inlined_call_operand.vmem [shape: f32[1,256], index: 2, kind: input, shape index: {}]
  %s3 = inlined_call_operand.hbm [shape: f32[16,256], index: 3, kind: output, shape index: {}]
  %s4 = sld [smem:[#allocation0]]
  $region22: #{transformer_forward.21} parent=0
    _
  %s6 = ssub.s32 1, %s4
  %s7 = scalar_select 0, %s6, %s4
  $region1: #{transformer_forward.21} parent=0
    #allocation2 [shape = 'u8[16384]{0}', space=vmem, size = 0x4000, scoped, tag = 'output window, operand 0, single buffered']
    #allocation3 [shape = 's32[1]{0}', space=sflag, size = 0x4, scoped, tag = 'scoped memory for transformer_forward.21']
    %8 = vsyncpa [#allocation3], 0
    // Predicated region
    $region2: #{transformer_forward.21} parent=1 // pred_check
      _
    $region3: #{transformer_forward.21} parent=1 // pred_check_branch
      %10 = sbr.rel (0) target = $region5
    $region4: #{transformer_forward.21} parent=1 // pred_region
      _
    $region5: #{transformer_forward.21} parent=1 // pred_fallthru
      _
    // Predicated region
    $region6: #{transformer_forward.21} parent=1 // pred_check
      _
    $region7: #{transformer_forward.21} parent=1 // pred_check_branch
      %12 = sbr.rel (0) target = $region9
    $region8: #{transformer_forward.21} parent=1 // pred_region
      _
    $region9: #{transformer_forward.21} parent=1 // pred_fallthru
      _
    // Predicated region
    $region10: #{transformer_forward.21} parent=1 // pred_check
      _
    $region11: #{transformer_forward.21} parent=1 // pred_check_branch
      %14 = sbr.rel (0) target = $region13
    $region12: #{transformer_forward.21} parent=1 // pred_region
      _
    $region13: #{transformer_forward.21} parent=1 // pred_fallthru
      _
    %v16 = vld [vmem:[%s0] sm:$0xff]
    %v17 = vld [vmem:[%s0 + $0x8] sm:$0xff]
    %v18 = vpack.c.bf16 %v17, %v16
    %v19 = vld [vmem:[%s1] sm:$0xff]
    %v20 = vld [vmem:[%s1 + $0x8] sm:$0xff]
    %v21 = vld [vmem:[%s1 + $0x10] sm:$0xff]
    %v22 = vld [vmem:[%s1 + $0x18] sm:$0xff]
    %v23 = vld [vmem:[%s1 + $0x20] sm:$0xff]
    %v24 = vld [vmem:[%s1 + $0x28] sm:$0xff]
    %v25 = vld [vmem:[%s1 + $0x30] sm:$0xff]
    %v26 = vld [vmem:[%s1 + $0x38] sm:$0xff]
    %v27 = vld [vmem:[%s1 + $0x40] sm:$0xff]
    %v28 = vld [vmem:[%s1 + $0x48] sm:$0xff]
    %v29 = vld [vmem:[%s1 + $0x50] sm:$0xff]
    %v30 = vld [vmem:[%s1 + $0x58] sm:$0xff]
    %v31 = vld [vmem:[%s1 + $0x60] sm:$0xff]
    %v32 = vld [vmem:[%s1 + $0x68] sm:$0xff]
    %v33 = vld [vmem:[%s1 + $0x70] sm:$0xff]
    %v34 = vld [vmem:[%s1 + $0x78] sm:$0xff]
    %v35 = vld [vmem:[%s2] sm:$0x3]
    %v37 = vlaneseq
    %v38 = vshrl.u32 %v37, 7
    %v39 = vsub.s32 0, %v38
    %v40 = vrot.slane %v35, %v39
    %v41 = vlaneseq
    %v42 = vshrl.u32 %v41, 7
    %v43 = vsub.s32 1, %v42
    %v44 = vrot.slane %v35, %v43
    %v63 = vunpack.c.l.b16 %v19
    %v64 = vunpack.c.h.b16 %v19
    %v65 = vunpack.c.l.b16 %v20
    %v66 = vunpack.c.h.b16 %v20
    %v67 = vunpack.c.l.b16 %v21
    %v68 = vunpack.c.h.b16 %v21
    %v69 = vunpack.c.l.b16 %v22
    %v70 = vunpack.c.h.b16 %v22
    %v71 = vunpack.c.l.b16 %v23
    %v72 = vunpack.c.h.b16 %v23
    %v73 = vunpack.c.l.b16 %v24
    %v74 = vunpack.c.h.b16 %v24
    %v75 = vunpack.c.l.b16 %v25
    %v76 = vunpack.c.h.b16 %v25
    %v77 = vunpack.c.l.b16 %v26
    %v78 = vunpack.c.h.b16 %v26
    %v79 = vunpack.c.l.b16 %v27
    %v80 = vunpack.c.h.b16 %v27
    %v81 = vunpack.c.l.b16 %v28
    %v82 = vunpack.c.h.b16 %v28
    %v83 = vunpack.c.l.b16 %v29
    %v84 = vunpack.c.h.b16 %v29
    %v85 = vunpack.c.l.b16 %v30
    %v86 = vunpack.c.h.b16 %v30
    %v87 = vunpack.c.l.b16 %v31
    %v88 = vunpack.c.h.b16 %v31
    %v89 = vunpack.c.l.b16 %v32
    %v90 = vunpack.c.h.b16 %v32
    %v91 = vunpack.c.l.b16 %v33
    %v92 = vunpack.c.h.b16 %v33
    %v93 = vunpack.c.l.b16 %v34
    %v94 = vunpack.c.h.b16 %v34
    %v95 = vpack.c.b16 %v65, %v63
    %v96 = vpack.c.b16 %v66, %v64
    %v97 = vpack.c.b16 %v69, %v67
    %v98 = vpack.c.b16 %v70, %v68
    %v99 = vpack.c.b16 %v73, %v71
    %v100 = vpack.c.b16 %v74, %v72
    %v101 = vpack.c.b16 %v77, %v75
    %v102 = vpack.c.b16 %v78, %v76
    %v103 = vpack.c.b16 %v81, %v79
    %v104 = vpack.c.b16 %v82, %v80
    %v105 = vpack.c.b16 %v85, %v83
    %v106 = vpack.c.b16 %v86, %v84
    %v107 = vpack.c.b16 %v89, %v87
    %v108 = vpack.c.b16 %v90, %v88
    %v109 = vpack.c.b16 %v93, %v91
    %v110 = vpack.c.b16 %v94, %v92
    %127 = vmatprep.subr.bf16.mxu0 %v96
    %128 = vmatpush1.bf16.msra.mxu0 %v95
    %129 = vmatprep.subr.bf16.mxu0 %v98
    %130 = vmatpush1.bf16.msra.mxu0 %v97
    %131 = vmatprep.subr.bf16.mxu0 %v100
    %132 = vmatpush1.bf16.msra.mxu0 %v99
    %133 = vmatprep.subr.bf16.mxu0 %v102
    %134 = vmatpush1.bf16.msra.mxu0 %v101
    %135 = vmatprep.subr.bf16.mxu0 %v104
    %136 = vmatpush1.bf16.msra.mxu0 %v103
    %137 = vmatprep.subr.bf16.mxu0 %v106
    %138 = vmatpush1.bf16.msra.mxu0 %v105
    %139 = vmatprep.subr.bf16.mxu0 %v108
    %140 = vmatpush1.bf16.msra.mxu0 %v107
    %141 = vmatprep.subr.bf16.mxu0 %v110
    %142 = vmatpush1.bf16.msra.mxu0 %v109
    %143 = vmatprep.subr.bf16.mxu0 0
    %144 = vmatpush1.bf16.msra.mxu0 0
    %145 = vmatprep.subr.bf16.mxu0 0
    %146 = vmatpush1.bf16.msra.mxu0 0
    %147 = vmatprep.subr.bf16.mxu0 0
    %148 = vmatpush1.bf16.msra.mxu0 0
    %149 = vmatprep.subr.bf16.mxu0 0
    %150 = vmatpush1.bf16.msra.mxu0 0
    %151 = vmatprep.subr.bf16.mxu0 0
    %152 = vmatpush1.bf16.msra.mxu0 0
    %153 = vmatprep.subr.bf16.mxu0 0
    %154 = vmatpush1.bf16.msra.mxu0 0
    %155 = vmatprep.subr.bf16.mxu0 0
    %156 = vmatpush1.bf16.msra.mxu0 0
    %157 = vmatprep.subr.bf16.mxu0 0
    %158 = vmatpush1.bf16.msra.mxu0 0
    %159 = vmatprep.mubr.bf16.mxu0 0
    %160 = vmatmul.mubr.bf16.gmra.mrb[0].mxu0 %v18
    %v161 = vpop.f32.mrb[0].mxu0
    %v162 = vadd.f32 %v40, %v161
    %v163 = vpop.f32.mrb[0].mxu0
    %v164 = vadd.f32 %v44, %v163
    %v165 = vpop.f32.mrb[0].mxu0
    %v166 = vadd.f32 %v40, %v165
    %v167 = vpop.f32.mrb[0].mxu0
    %v168 = vadd.f32 %v44, %v167
    %169 = vdwg.mxu0
    %170 = vst [vmem:[#allocation2] sm:$0xff] %v162
    %171 = vst [vmem:[#allocation2 + $0x8] sm:$0xff] %v164
    %172 = vst [vmem:[#allocation2 + $0x10] sm:$0xff] %v166
    %173 = vst [vmem:[#allocation2 + $0x18] sm:$0xff] %v168
    // Predicated region
    $region14: #{transformer_forward.21} parent=1 // pred_check
      _
    $region15: #{transformer_forward.21} parent=1 // pred_check_branch
      %175 = sbr.rel (0) target = $region17
    $region16: #{transformer_forward.21} parent=1 // pred_region
      %s177 = ssub.s32 512, 512
      %178 = vsyncadd [#allocation3], %s177
      %s179 = sshll.u32 [#allocation2], 4
      %s180 = int_to_ptr.vmem [resolvable:$true] %s179
      %185 = dma.vmem_to_hbm [thread:$0]  %s180, 512, %s3, [#allocation3], 256, 256, 16
    $region17: #{transformer_forward.21} parent=1 // pred_fallthru
      _
    // Predicated region
    $region18: #{transformer_forward.21} parent=1 // pred_check
      _
    $region19: #{transformer_forward.21} parent=1 // pred_check_branch
      %187 = sbr.rel (0) target = $region21
    $region20: #{transformer_forward.21} parent=1 // pred_region
      %188 = dma.done [#allocation3], 512
    $region21: #{transformer_forward.21} parent=1 // pred_fallthru
      _
    %189 = vsyncpa [#allocation3], 1

// kernel: transformer_forward.11
$region0: #{transformer_forward.11}
  #allocation0 [shape = 'u32[]', space=smem, size = 0x4, offset = 0x4, fixed_abs, tag = 'smem constant byte address 0x4 - core index']
  #allocation1 [shape = 'u32[144,128]{1,0:T(1,128)}', space=vmem, size = 0x12000, scoped, tag = 'internal scratch']
  %s0 = inlined_call_operand.vmem [shape: f32[2,8,128], index: 0, kind: input, shape index: {}, may-alias: {0,1}]
  %s1 = inlined_call_operand.vmem [shape: f32[2,8,128], index: 1, kind: input, shape index: {}, may-alias: {0,1}]
  %s2 = inlined_call_operand.vmem [shape: f32[2,8,8], index: 2, kind: input, shape index: {}]
  %s3 = inlined_call_operand.vmem [shape: bf16[128,128], index: 3, kind: input, shape index: {}]
  %s4 = inlined_call_operand.vmem [shape: f32[1,128], index: 4, kind: input, shape index: {}]
  %s5 = inlined_call_operand.vmem [shape: bf16[128,128], index: 5, kind: input, shape index: {}]
  %s6 = inlined_call_operand.vmem [shape: f32[1,128], index: 6, kind: input, shape index: {}]
  %s7 = inlined_call_operand.vmem [shape: bf16[128,128], index: 7, kind: input, shape index: {}]
  %s8 = inlined_call_operand.vmem [shape: f32[1,128], index: 8, kind: input, shape index: {}]
  %s9 = inlined_call_operand.vmem [shape: bf16[128,128], index: 9, kind: input, shape index: {}]
  %s10 = inlined_call_operand.vmem [shape: f32[1,128], index: 10, kind: input, shape index: {}]
  %s11 = inlined_call_operand.vmem [shape: f32[1,128], index: 11, kind: input, shape index: {}]
  %s12 = inlined_call_operand.vmem [shape: f32[1,128], index: 12, kind: input, shape index: {}]
  %s13 = inlined_call_operand.vmem [shape: f32[2,8,128], index: 13, kind: output, shape index: {}]
  %s14 = sld [smem:[#allocation0]]
  $region85: #{transformer_forward.11} parent=0
    _
  %s16 = ssub.s32 1, %s14
  %s17 = scalar_select 0, %s16, %s14
  loop: start=0, step=1, limit=4
  $region2: #{transformer_forward.11} parent=0 // loop_pre_header
    _
  $region3: #{transformer_forward.11} parent=0 // loop_header
    %s19 = sphi 0, %s23
    %p20 = scmp.ge.s32.totalorder %s19, 4
    %s29 = sphi 0, %s31
    %s32 = sphi 0, %s29
    %s33 = sphi 0, %s32
    %s49 = sphi 0, %s33
    %s55 = sphi 0, %s57
    %s58 = sphi 0, %s55
    %s59 = sphi 0, %s58
    %s75 = sphi 0, %s59
    %s81 = sphi 0, %s83
    %s84 = sphi 0, %s81
    %s85 = sphi 0, %s84
    %s101 = sphi 0, %s85
    %s105 = sphi 0, %s105
    %s107 = sphi 0, %s105
    %s108 = sphi 0, %s107
    %s122 = sphi 0, %s108
    %s126 = sphi 0, %s126
    %s128 = sphi 0, %s126
    %s129 = sphi 0, %s128
    %s143 = sphi 0, %s129
    %s147 = sphi 0, %s147
    %s149 = sphi 0, %s147
    %s150 = sphi 0, %s149
    %s164 = sphi 0, %s150
    %s168 = sphi 0, %s168
    %s170 = sphi 0, %s168
    %s171 = sphi 0, %s170
    %s185 = sphi 0, %s171
    %s189 = sphi 0, %s189
    %s191 = sphi 0, %s189
    %s192 = sphi 0, %s191
    %s206 = sphi 0, %s192
    %s210 = sphi 0, %s210
    %s212 = sphi 0, %s210
    %s213 = sphi 0, %s212
    %s227 = sphi 0, %s213
    %s231 = sphi 0, %s231
    %s233 = sphi 0, %s231
    %s234 = sphi 0, %s233
    %s248 = sphi 0, %s234
    %s252 = sphi 0, %s252
    %s254 = sphi 0, %s252
    %s255 = sphi 0, %s254
    %s269 = sphi 0, %s255
    %s273 = sphi 0, %s273
    %s275 = sphi 0, %s273
    %s276 = sphi 0, %s275
    %s290 = sphi 0, %s276
    %s294 = sphi 0, %s294
    %s296 = sphi 0, %s294
    %s297 = sphi 0, %s296
    %s311 = sphi 0, %s297
    %s317 = sphi 0, %s319
    %s320 = sphi 0, %s317
    %s321 = sphi 0, %s320
    %s337 = sphi 0, %s321
  $region4: #{transformer_forward.11} parent=0 // loop_header_branch
    %22 = sbr.rel (%p20) target = $region8
  $region5: #{transformer_forward.11} parent=0 // loop_body
    %s24 = ssub.s32 %s19, 1
    %s25 = ssub.s32 %s19, 2
    %s26 = sadd.s32 %s19, 1
    %s27 = ssub.s32 %s19, %s26
    %p28 = scmp.eq.s32.totalorder %s27, 0
    %s30 = sadd.s32 %s29, 1
    %s31 = scalar_select %p28, %s29, %s30
    %p34 = pneg %p28
    %p35 = scmp.eq.s32.totalorder %s19, 1
    %p36 = por %p34, %p35
    %p37 = scmp.ne.s32.totalorder %s29, %s32
    %p38 = scmp.eq.s32.totalorder %s19, 0
    %p39 = por %p37, %p38
    %p40 = scmp.ne.s32.totalorder %s29, %s32
    %p41 = scmp.eq.s32.totalorder %s24, 1
    %p42 = por %p40, %p41
    %p43 = scmp.ne.s32.totalorder %s32, %s33
    %p44 = scmp.eq.s32.totalorder %s24, 0
    %p45 = por %p43, %p44
    %p46 = scmp.ne.s32.totalorder %s32, %s33
    %p47 = scmp.eq.s32.totalorder %s25, 1
    %p48 = por %p46, %p47
    %p50 = scmp.ne.s32.totalorder %s33, %s49
    %p51 = scmp.eq.s32.totalorder %s25, 0
    %p52 = por %p50, %p51
    %s53 = ssub.s32 %s19, %s26
    %p54 = scmp.eq.s32.totalorder %s53, 0
    %s56 = sadd.s32 %s55, 1
    %s57 = scalar_select %p54, %s55, %s56
    %p60 = pneg %p54
    %p61 = scmp.eq.s32.totalorder %s19, 1
    %p62 = por %p60, %p61
    %p63 = scmp.ne.s32.totalorder %s55, %s58
    %p64 = scmp.eq.s32.totalorder %s19, 0
    %p65 = por %p63, %p64
    %p66 = scmp.ne.s32.totalorder %s55, %s58
    %p67 = scmp.eq.s32.totalorder %s24, 1
    %p68 = por %p66, %p67
    %p69 = scmp.ne.s32.totalorder %s58, %s59
    %p70 = scmp.eq.s32.totalorder %s24, 0
    %p71 = por %p69, %p70
    %p72 = scmp.ne.s32.totalorder %s58, %s59
    %p73 = scmp.eq.s32.totalorder %s25, 1
    %p74 = por %p72, %p73
    %p76 = scmp.ne.s32.totalorder %s59, %s75
    %p77 = scmp.eq.s32.totalorder %s25, 0
    %p78 = por %p76, %p77
    %s79 = ssub.s32 %s19, %s26
    %p80 = scmp.eq.s32.totalorder %s79, 0
    %s82 = sadd.s32 %s81, 1
    %s83 = scalar_select %p80, %s81, %s82
    %p86 = pneg %p80
    %p87 = scmp.eq.s32.totalorder %s19, 1
    %p88 = por %p86, %p87
    %p89 = scmp.ne.s32.totalorder %s81, %s84
    %p90 = scmp.eq.s32.totalorder %s19, 0
    %p91 = por %p89, %p90
    %p92 = scmp.ne.s32.totalorder %s81, %s84
    %p93 = scmp.eq.s32.totalorder %s24, 1
    %p94 = por %p92, %p93
    %p95 = scmp.ne.s32.totalorder %s84, %s85
    %p96 = scmp.eq.s32.totalorder %s24, 0
    %p97 = por %p95, %p96
    %p98 = scmp.ne.s32.totalorder %s84, %s85
    %p99 = scmp.eq.s32.totalorder %s25, 1
    %p100 = por %p98, %p99
    %p102 = scmp.ne.s32.totalorder %s85, %s101
    %p103 = scmp.eq.s32.totalorder %s25, 0
    %p104 = por %p102, %p103
    %s106 = sadd.s32 %s105, 1
    %p109 = scmp.eq.s32.totalorder %s19, 1
    %p110 = scmp.ne.s32.totalorder %s105, %s107
    %p111 = scmp.eq.s32.totalorder %s19, 0
    %p112 = por %p110, %p111
    %p113 = scmp.ne.s32.totalorder %s105, %s107
    %p114 = scmp.eq.s32.totalorder %s24, 1
    %p115 = por %p113, %p114
    %p116 = scmp.ne.s32.totalorder %s107, %s108
    %p117 = scmp.eq.s32.totalorder %s24, 0
    %p118 = por %p116, %p117
    %p119 = scmp.ne.s32.totalorder %s107, %s108
    %p120 = scmp.eq.s32.totalorder %s25, 1
    %p121 = por %p119, %p120
    %p123 = scmp.ne.s32.totalorder %s108, %s122
    %p124 = scmp.eq.s32.totalorder %s25, 0
    %p125 = por %p123, %p124
    %s127 = sadd.s32 %s126, 1
    %p130 = scmp.eq.s32.totalorder %s19, 1
    %p131 = scmp.ne.s32.totalorder %s126, %s128
    %p132 = scmp.eq.s32.totalorder %s19, 0
    %p133 = por %p131, %p132
    %p134 = scmp.ne.s32.totalorder %s126, %s128
    %p135 = scmp.eq.s32.totalorder %s24, 1
    %p136 = por %p134, %p135
    %p137 = scmp.ne.s32.totalorder %s128, %s129
    %p138 = scmp.eq.s32.totalorder %s24, 0
    %p139 = por %p137, %p138
    %p140 = scmp.ne.s32.totalorder %s128, %s129
    %p141 = scmp.eq.s32.totalorder %s25, 1
    %p142 = por %p140, %p141
    %p144 = scmp.ne.s32.totalorder %s129, %s143
    %p145 = scmp.eq.s32.totalorder %s25, 0
    %p146 = por %p144, %p145
    %s148 = sadd.s32 %s147, 1
    %p151 = scmp.eq.s32.totalorder %s19, 1
    %p152 = scmp.ne.s32.totalorder %s147, %s149
    %p153 = scmp.eq.s32.totalorder %s19, 0
    %p154 = por %p152, %p153
    %p155 = scmp.ne.s32.totalorder %s147, %s149
    %p156 = scmp.eq.s32.totalorder %s24, 1
    %p157 = por %p155, %p156
    %p158 = scmp.ne.s32.totalorder %s149, %s150
    %p159 = scmp.eq.s32.totalorder %s24, 0
    %p160 = por %p158, %p159
    %p161 = scmp.ne.s32.totalorder %s149, %s150
    %p162 = scmp.eq.s32.totalorder %s25, 1
    %p163 = por %p161, %p162
    %p165 = scmp.ne.s32.totalorder %s150, %s164
    %p166 = scmp.eq.s32.totalorder %s25, 0
    %p167 = por %p165, %p166
    %s169 = sadd.s32 %s168, 1
    %p172 = scmp.eq.s32.totalorder %s19, 1
    %p173 = scmp.ne.s32.totalorder %s168, %s170
    %p174 = scmp.eq.s32.totalorder %s19, 0
    %p175 = por %p173, %p174
    %p176 = scmp.ne.s32.totalorder %s168, %s170
    %p177 = scmp.eq.s32.totalorder %s24, 1
    %p178 = por %p176, %p177
    %p179 = scmp.ne.s32.totalorder %s170, %s171
    %p180 = scmp.eq.s32.totalorder %s24, 0
    %p181 = por %p179, %p180
    %p182 = scmp.ne.s32.totalorder %s170, %s171
    %p183 = scmp.eq.s32.totalorder %s25, 1
    %p184 = por %p182, %p183
    %p186 = scmp.ne.s32.totalorder %s171, %s185
    %p187 = scmp.eq.s32.totalorder %s25, 0
    %p188 = por %p186, %p187
    %s190 = sadd.s32 %s189, 1
    %p193 = scmp.eq.s32.totalorder %s19, 1
    %p194 = scmp.ne.s32.totalorder %s189, %s191
    %p195 = scmp.eq.s32.totalorder %s19, 0
    %p196 = por %p194, %p195
    %p197 = scmp.ne.s32.totalorder %s189, %s191
    %p198 = scmp.eq.s32.totalorder %s24, 1
    %p199 = por %p197, %p198
    %p200 = scmp.ne.s32.totalorder %s191, %s192
    %p201 = scmp.eq.s32.totalorder %s24, 0
    %p202 = por %p200, %p201
    %p203 = scmp.ne.s32.totalorder %s191, %s192
    %p204 = scmp.eq.s32.totalorder %s25, 1
    %p205 = por %p203, %p204
    %p207 = scmp.ne.s32.totalorder %s192, %s206
    %p208 = scmp.eq.s32.totalorder %s25, 0
    %p209 = por %p207, %p208
    %s211 = sadd.s32 %s210, 1
    %p214 = scmp.eq.s32.totalorder %s19, 1
    %p215 = scmp.ne.s32.totalorder %s210, %s212
    %p216 = scmp.eq.s32.totalorder %s19, 0
    %p217 = por %p215, %p216
    %p218 = scmp.ne.s32.totalorder %s210, %s212
    %p219 = scmp.eq.s32.totalorder %s24, 1
    %p220 = por %p218, %p219
    %p221 = scmp.ne.s32.totalorder %s212, %s213
    %p222 = scmp.eq.s32.totalorder %s24, 0
    %p223 = por %p221, %p222
    %p224 = scmp.ne.s32.totalorder %s212, %s213
    %p225 = scmp.eq.s32.totalorder %s25, 1
    %p226 = por %p224, %p225
    %p228 = scmp.ne.s32.totalorder %s213, %s227
    %p229 = scmp.eq.s32.totalorder %s25, 0
    %p230 = por %p228, %p229
    %s232 = sadd.s32 %s231, 1
    %p235 = scmp.eq.s32.totalorder %s19, 1
    %p236 = scmp.ne.s32.totalorder %s231, %s233
    %p237 = scmp.eq.s32.totalorder %s19, 0
    %p238 = por %p236, %p237
    %p239 = scmp.ne.s32.totalorder %s231, %s233
    %p240 = scmp.eq.s32.totalorder %s24, 1
    %p241 = por %p239, %p240
    %p242 = scmp.ne.s32.totalorder %s233, %s234
    %p243 = scmp.eq.s32.totalorder %s24, 0
    %p244 = por %p242, %p243
    %p245 = scmp.ne.s32.totalorder %s233, %s234
    %p246 = scmp.eq.s32.totalorder %s25, 1
    %p247 = por %p245, %p246
    %p249 = scmp.ne.s32.totalorder %s234, %s248
    %p250 = scmp.eq.s32.totalorder %s25, 0
    %p251 = por %p249, %p250
    %s253 = sadd.s32 %s252, 1
    %p256 = scmp.eq.s32.totalorder %s19, 1
    %p257 = scmp.ne.s32.totalorder %s252, %s254
    %p258 = scmp.eq.s32.totalorder %s19, 0
    %p259 = por %p257, %p258
    %p260 = scmp.ne.s32.totalorder %s252, %s254
    %p261 = scmp.eq.s32.totalorder %s24, 1
    %p262 = por %p260, %p261
    %p263 = scmp.ne.s32.totalorder %s254, %s255
    %p264 = scmp.eq.s32.totalorder %s24, 0
    %p265 = por %p263, %p264
    %p266 = scmp.ne.s32.totalorder %s254, %s255
    %p267 = scmp.eq.s32.totalorder %s25, 1
    %p268 = por %p266, %p267
    %p270 = scmp.ne.s32.totalorder %s255, %s269
    %p271 = scmp.eq.s32.totalorder %s25, 0
    %p272 = por %p270, %p271
    %s274 = sadd.s32 %s273, 1
    %p277 = scmp.eq.s32.totalorder %s19, 1
    %p278 = scmp.ne.s32.totalorder %s273, %s275
    %p279 = scmp.eq.s32.totalorder %s19, 0
    %p280 = por %p278, %p279
    %p281 = scmp.ne.s32.totalorder %s273, %s275
    %p282 = scmp.eq.s32.totalorder %s24, 1
    %p283 = por %p281, %p282
    %p284 = scmp.ne.s32.totalorder %s275, %s276
    %p285 = scmp.eq.s32.totalorder %s24, 0
    %p286 = por %p284, %p285
    %p287 = scmp.ne.s32.totalorder %s275, %s276
    %p288 = scmp.eq.s32.totalorder %s25, 1
    %p289 = por %p287, %p288
    %p291 = scmp.ne.s32.totalorder %s276, %s290
    %p292 = scmp.eq.s32.totalorder %s25, 0
    %p293 = por %p291, %p292
    %s295 = sadd.s32 %s294, 1
    %p298 = scmp.eq.s32.totalorder %s19, 1
    %p299 = scmp.ne.s32.totalorder %s294, %s296
    %p300 = scmp.eq.s32.totalorder %s19, 0
    %p301 = por %p299, %p300
    %p302 = scmp.ne.s32.totalorder %s294, %s296
    %p303 = scmp.eq.s32.totalorder %s24, 1
    %p304 = por %p302, %p303
    %p305 = scmp.ne.s32.totalorder %s296, %s297
    %p306 = scmp.eq.s32.totalorder %s24, 0
    %p307 = por %p305, %p306
    %p308 = scmp.ne.s32.totalorder %s296, %s297
    %p309 = scmp.eq.s32.totalorder %s25, 1
    %p310 = por %p308, %p309
    %p312 = scmp.ne.s32.totalorder %s297, %s311
    %p313 = scmp.eq.s32.totalorder %s25, 0
    %p314 = por %p312, %p313
    %s315 = ssub.s32 %s19, %s26
    %p316 = scmp.eq.s32.totalorder %s315, 0
    %s318 = sadd.s32 %s317, 1
    %s319 = scalar_select %p316, %s317, %s318
    %p322 = pneg %p316
    %p323 = scmp.eq.s32.totalorder %s19, 1
    %p324 = por %p322, %p323
    %p325 = scmp.ne.s32.totalorder %s317, %s320
    %p326 = scmp.eq.s32.totalorder %s19, 0
    %p327 = por %p325, %p326
    %p328 = scmp.ne.s32.totalorder %s317, %s320
    %p329 = scmp.eq.s32.totalorder %s24, 1
    %p330 = por %p328, %p329
    %p331 = scmp.ne.s32.totalorder %s320, %s321
    %p332 = scmp.eq.s32.totalorder %s24, 0
    %p333 = por %p331, %p332
    %p334 = scmp.ne.s32.totalorder %s320, %s321
    %p335 = scmp.eq.s32.totalorder %s25, 1
    %p336 = por %p334, %p335
    %p338 = scmp.ne.s32.totalorder %s321, %s337
    %p339 = scmp.eq.s32.totalorder %s25, 0
    %p340 = por %p338, %p339
    %p341 = scmp.le.s32.totalorder 1, %s19
    %p342 = scmp.lt.s32.totalorder %s19, 3
    %p343 = pnand %p341, %p342
    %p344 = pneg %p343
    // Predicated region
    $region9: #{transformer_forward.11} parent=5 // pred_check
      _
    $region10: #{transformer_forward.11} parent=5 // pred_check_branch
      %346 = sbr.rel (%p343) target = $region12
    $region11: #{transformer_forward.11} parent=5 // pred_region
      %s347 = ssub.s32 %s19, 1
      // Predicated region
      $region13: #{transformer_forward.11} parent=11 // pred_check
        %p348 = pneg %p118
      $region14: #{transformer_forward.11} parent=11 // pred_check_branch
        %350 = sbr.rel (%p348) target = $region16
      $region15: #{transformer_forward.11} parent=11 // pred_region
        _
      $region16: #{transformer_forward.11} parent=11 // pred_fallthru
        _
      // Predicated region
      $region17: #{transformer_forward.11} parent=11 // pred_check
        %p351 = pneg %p139
      $region18: #{transformer_forward.11} parent=11 // pred_check_branch
        %353 = sbr.rel (%p351) target = $region20
      $region19: #{transformer_forward.11} parent=11 // pred_region
        _
      $region20: #{transformer_forward.11} parent=11 // pred_fallthru
        _
      // Predicated region
      $region21: #{transformer_forward.11} parent=11 // pred_check
        %p354 = pneg %p160
      $region22: #{transformer_forward.11} parent=11 // pred_check_branch
        %356 = sbr.rel (%p354) target = $region24
      $region23: #{transformer_forward.11} parent=11 // pred_region
        _
      $region24: #{transformer_forward.11} parent=11 // pred_fallthru
        _
      // Predicated region
      $region25: #{transformer_forward.11} parent=11 // pred_check
        %p357 = pneg %p181
      $region26: #{transformer_forward.11} parent=11 // pred_check_branch
        %359 = sbr.rel (%p357) target = $region28
      $region27: #{transformer_forward.11} parent=11 // pred_region
        _
      $region28: #{transformer_forward.11} parent=11 // pred_fallthru
        _
      // Predicated region
      $region29: #{transformer_forward.11} parent=11 // pred_check
        %p360 = pneg %p202
      $region30: #{transformer_forward.11} parent=11 // pred_check_branch
        %362 = sbr.rel (%p360) target = $region32
      $region31: #{transformer_forward.11} parent=11 // pred_region
        _
      $region32: #{transformer_forward.11} parent=11 // pred_fallthru
        _
      // Predicated region
      $region33: #{transformer_forward.11} parent=11 // pred_check
        %p363 = pneg %p223
      $region34: #{transformer_forward.11} parent=11 // pred_check_branch
        %365 = sbr.rel (%p363) target = $region36
      $region35: #{transformer_forward.11} parent=11 // pred_region
        _
      $region36: #{transformer_forward.11} parent=11 // pred_fallthru
        _
      // Predicated region
      $region37: #{transformer_forward.11} parent=11 // pred_check
        %p366 = pneg %p244
      $region38: #{transformer_forward.11} parent=11 // pred_check_branch
        %368 = sbr.rel (%p366) target = $region40
      $region39: #{transformer_forward.11} parent=11 // pred_region
        _
      $region40: #{transformer_forward.11} parent=11 // pred_fallthru
        _
      // Predicated region
      $region41: #{transformer_forward.11} parent=11 // pred_check
        %p369 = pneg %p265
      $region42: #{transformer_forward.11} parent=11 // pred_check_branch
        %371 = sbr.rel (%p369) target = $region44
      $region43: #{transformer_forward.11} parent=11 // pred_region
        _
      $region44: #{transformer_forward.11} parent=11 // pred_fallthru
        _
      // Predicated region
      $region45: #{transformer_forward.11} parent=11 // pred_check
        %p372 = pneg %p286
      $region46: #{transformer_forward.11} parent=11 // pred_check_branch
        %374 = sbr.rel (%p372) target = $region48
      $region47: #{transformer_forward.11} parent=11 // pred_region
        _
      $region48: #{transformer_forward.11} parent=11 // pred_fallthru
        _
      // Predicated region
      $region49: #{transformer_forward.11} parent=11 // pred_check
        %p375 = pneg %p307
      $region50: #{transformer_forward.11} parent=11 // pred_check_branch
        %377 = sbr.rel (%p375) target = $region52
      $region51: #{transformer_forward.11} parent=11 // pred_region
        _
      $region52: #{transformer_forward.11} parent=11 // pred_fallthru
        _
    $region12: #{transformer_forward.11} parent=5 // pred_fallthru
      _
    %p378 = scmp.lt.s32.totalorder %s19, 2
    // Predicated region
    $region53: #{transformer_forward.11} parent=5 // pred_check
      %p379 = pneg %p378
    $region54: #{transformer_forward.11} parent=5 // pred_check_branch
      %381 = sbr.rel (%p379) target = $region56
    $region55: #{transformer_forward.11} parent=5 // pred_region
      // Predicated region
      $region57: #{transformer_forward.11} parent=55 // pred_check
        %p382 = pneg %p39
      $region58: #{transformer_forward.11} parent=55 // pred_check_branch
        %384 = sbr.rel (%p382) target = $region60
      $region59: #{transformer_forward.11} parent=55 // pred_region
        %p385 = scmp.lt.s32.totalorder %s19, 1
        %s386 = scalar_select %p385, %s19, 1
        %s387 = smul.addr %s386, 8
        %s388 = scalar_lea.vmem %s0, %s387
      $region60: #{transformer_forward.11} parent=55 // pred_fallthru
        _
      // Predicated region
      $region61: #{transformer_forward.11} parent=55 // pred_check
        %p389 = pneg %p65
      $region62: #{transformer_forward.11} parent=55 // pred_check_branch
        %391 = sbr.rel (%p389) target = $region64
      $region63: #{transformer_forward.11} parent=55 // pred_region
        %p392 = scmp.lt.s32.totalorder %s19, 1
        %s393 = scalar_select %p392, %s19, 1
        %s394 = smul.addr %s393, 8
        %s395 = scalar_lea.vmem %s1, %s394
      $region64: #{transformer_forward.11} parent=55 // pred_fallthru
        _
      // Predicated region
      $region65: #{transformer_forward.11} parent=55 // pred_check
        %p396 = pneg %p91
      $region66: #{transformer_forward.11} parent=55 // pred_check_branch
        %398 = sbr.rel (%p396) target = $region68
      $region67: #{transformer_forward.11} parent=55 // pred_region
        %p399 = scmp.lt.s32.totalorder %s19, 1
        %s400 = scalar_select %p399, %s19, 1
        %s401 = smul.addr %s400, 8
        %s402 = scalar_lea.vmem %s2, %s401
      $region68: #{transformer_forward.11} parent=55 // pred_fallthru
        _
    $region56: #{transformer_forward.11} parent=5 // pred_fallthru
      _
    %p403 = scmp.le.s32.totalorder 1, %s19
    %p404 = scmp.lt.s32.totalorder %s19, 3
    %p405 = pnand %p403, %p404
    %p406 = pneg %p405
    // Predicated region
    $region69: #{transformer_forward.11} parent=5 // pred_check
      _
    $region70: #{transformer_forward.11} parent=5 // pred_check_branch
      %408 = sbr.rel (%p405) target = $region72
    $region71: #{transformer_forward.11} parent=5 // pred_region
      %s409 = ssub.s32 %s19, 1
      %p410 = scmp.lt.s32.totalorder %s24, 1
      %s411 = scalar_select %p410, %s24, 1
      %s412 = smul.addr %s411, 8
      %s413 = scalar_lea.vmem %s0, %s412
      %p414 = pneg %p45
      %p415 = pneg %p42
      %p416 = scmp.lt.s32.totalorder %s24, 1
      %s417 = scalar_select %p416, %s24, 1
      %s418 = smul.addr %s417, 8
      %s419 = scalar_lea.vmem %s1, %s418
      %p420 = pneg %p71
      %p421 = pneg %p68
      %p422 = scmp.lt.s32.totalorder %s24, 1
      %s423 = scalar_select %p422, %s24, 1
      %s424 = smul.addr %s423, 8
      %s425 = scalar_lea.vmem %s2, %s424
      %p426 = pneg %p97
      %p427 = pneg %p94
      %p428 = pneg %p118
      %p429 = pneg %p115
      %p430 = pneg %p139
      %p431 = pneg %p136
      %p432 = pneg %p160
      %p433 = pneg %p157
      %p434 = pneg %p181
      %p435 = pneg %p178
      %p436 = pneg %p202
      %p437 = pneg %p199
      %p438 = pneg %p223
      %p439 = pneg %p220
      %p440 = pneg %p244
      %p441 = pneg %p241
      %p442 = pneg %p265
      %p443 = pneg %p262
      %p444 = pneg %p286
      %p445 = pneg %p283
      %p446 = pneg %p307
      %p447 = pneg %p304
      %p448 = pneg %p333
      %p449 = pneg %p330
      %p450 = scmp.lt.s32.totalorder %s24, 1
      %s451 = scalar_select %p450, %s24, 1
      %s452 = smul.addr %s451, 8
      %s453 = scalar_lea.vmem %s13, %s452
      %p454 = scmp.lt.s32.totalorder %s24, 1
      %s455 = scalar_select %p454, %s24, 1
      %s456 = smul.addr %s455, 8
      %s457 = scalar_lea.vmem %s0, %s456
      %p458 = scmp.lt.s32.totalorder %s24, 1
      %s459 = scalar_select %p458, %s24, 1
      %s460 = smul.addr %s459, 8
      %s461 = scalar_lea.vmem %s1, %s460
      %p462 = scmp.lt.s32.totalorder %s24, 1
      %s463 = scalar_select %p462, %s24, 1
      %s464 = smul.addr %s463, 8
      %s465 = scalar_lea.vmem %s2, %s464
      %p466 = scmp.lt.s32.totalorder %s24, 1
      %s467 = scalar_select %p466, %s24, 1
      %s468 = smul.addr %s467, 8
      %s469 = scalar_lea.vmem %s13, %s468
      %v471 = vld [vmem:[%s457] sm:$0xff]
      %v472 = vld [vmem:[%s461] sm:$0xff]
      %v473 = vld [vmem:[%s465] sm:$0xff]
      %v474 = vld [vmem:[%s3] sm:$0xf]
      %v475 = vld [vmem:[%s3 + $0x4] sm:$0xf]
      %v476 = vld [vmem:[%s3 + $0x8] sm:$0xf]
      %v477 = vld [vmem:[%s3 + $0xc] sm:$0xf]
      %v478 = vld [vmem:[%s3 + $0x10] sm:$0xf]
      %v479 = vld [vmem:[%s3 + $0x14] sm:$0xf]
      %v480 = vld [vmem:[%s3 + $0x18] sm:$0xf]
      %v481 = vld [vmem:[%s3 + $0x1c] sm:$0xf]
      %v482 = vld [vmem:[%s3 + $0x20] sm:$0xf]
      %v483 = vld [vmem:[%s3 + $0x24] sm:$0xf]
      %v484 = vld [vmem:[%s3 + $0x28] sm:$0xf]
      %v485 = vld [vmem:[%s3 + $0x2c] sm:$0xf]
      %v486 = vld [vmem:[%s3 + $0x30] sm:$0xf]
      %v487 = vld [vmem:[%s3 + $0x34] sm:$0xf]
      %v488 = vld [vmem:[%s3 + $0x38] sm:$0xf]
      %v489 = vld [vmem:[%s3 + $0x3c] sm:$0xf]
      %v490 = vld [vmem:[%s4] sm:$0x1]
      %v491 = vld [vmem:[%s5] sm:$0xf]
      %v492 = vld [vmem:[%s5 + $0x4] sm:$0xf]
      %v493 = vld [vmem:[%s5 + $0x8] sm:$0xf]
      %v494 = vld [vmem:[%s5 + $0xc] sm:$0xf]
      %v495 = vld [vmem:[%s5 + $0x10] sm:$0xf]
      %v496 = vld [vmem:[%s5 + $0x14] sm:$0xf]
      %v497 = vld [vmem:[%s5 + $0x18] sm:$0xf]
      %v498 = vld [vmem:[%s5 + $0x1c] sm:$0xf]
      %v499 = vld [vmem:[%s5 + $0x20] sm:$0xf]
      %v500 = vld [vmem:[%s5 + $0x24] sm:$0xf]
      %v501 = vld [vmem:[%s5 + $0x28] sm:$0xf]
      %v502 = vld [vmem:[%s5 + $0x2c] sm:$0xf]
      %v503 = vld [vmem:[%s5 + $0x30] sm:$0xf]
      %v504 = vld [vmem:[%s5 + $0x34] sm:$0xf]
      %v505 = vld [vmem:[%s5 + $0x38] sm:$0xf]
      %v506 = vld [vmem:[%s5 + $0x3c] sm:$0xf]
      %v507 = vld [vmem:[%s6] sm:$0x1]
      %v508 = vld [vmem:[%s7] sm:$0xf]
      %v509 = vld [vmem:[%s7 + $0x4] sm:$0xf]
      %v510 = vld [vmem:[%s7 + $0x8] sm:$0xf]
      %v511 = vld [vmem:[%s7 + $0xc] sm:$0xf]
      %v512 = vld [vmem:[%s7 + $0x10] sm:$0xf]
      %v513 = vld [vmem:[%s7 + $0x14] sm:$0xf]
      %v514 = vld [vmem:[%s7 + $0x18] sm:$0xf]
      %v515 = vld [vmem:[%s7 + $0x1c] sm:$0xf]
      %v516 = vld [vmem:[%s7 + $0x20] sm:$0xf]
      %v517 = vld [vmem:[%s7 + $0x24] sm:$0xf]
      %v518 = vld [vmem:[%s7 + $0x28] sm:$0xf]
      %v519 = vld [vmem:[%s7 + $0x2c] sm:$0xf]
      %v520 = vld [vmem:[%s7 + $0x30] sm:$0xf]
      %v521 = vld [vmem:[%s7 + $0x34] sm:$0xf]
      %v522 = vld [vmem:[%s7 + $0x38] sm:$0xf]
      %v523 = vld [vmem:[%s7 + $0x3c] sm:$0xf]
      %v524 = vld [vmem:[%s8] sm:$0x1]
      %v525 = vld [vmem:[%s9] sm:$0xf]
      %v526 = vld [vmem:[%s9 + $0x4] sm:$0xf]
      %v527 = vld [vmem:[%s9 + $0x8] sm:$0xf]
      %v528 = vld [vmem:[%s9 + $0xc] sm:$0xf]
      %v529 = vld [vmem:[%s9 + $0x10] sm:$0xf]
      %v530 = vld [vmem:[%s9 + $0x14] sm:$0xf]
      %v531 = vld [vmem:[%s9 + $0x18] sm:$0xf]
      %v532 = vld [vmem:[%s9 + $0x1c] sm:$0xf]
      %v533 = vld [vmem:[%s9 + $0x20] sm:$0xf]
      %v534 = vld [vmem:[%s9 + $0x24] sm:$0xf]
      %v535 = vld [vmem:[%s9 + $0x28] sm:$0xf]
      %v536 = vld [vmem:[%s9 + $0x2c] sm:$0xf]
      %v537 = vld [vmem:[%s9 + $0x30] sm:$0xf]
      %v538 = vld [vmem:[%s9 + $0x34] sm:$0xf]
      %v539 = vld [vmem:[%s9 + $0x38] sm:$0xf]
      %v540 = vld [vmem:[%s9 + $0x3c] sm:$0xf]
      %v541 = vld [vmem:[%s10] sm:$0x1]
      %v542 = vld [vmem:[%s11] sm:$0x1]
      %v543 = vld [vmem:[%s12] sm:$0x1]
      %v544 = vpack.c.bf16 %v471, %v471
      %v545 = vpack.c.bf16 %v472, %v472
      %v547 = vlaneseq
      %v548 = vshrl.u32 %v547, 7
      %v549 = vsub.s32 0, %v548
      %v550 = vrot.slane %v490, %v549
      %v568 = vunpack.c.l.b16 %v474
      %v569 = vunpack.c.l.b16 %v475
      %v570 = vunpack.c.l.b16 %v476
      %v571 = vunpack.c.l.b16 %v477
      %v572 = vunpack.c.l.b16 %v478
      %v573 = vunpack.c.l.b16 %v479
      %v574 = vunpack.c.l.b16 %v480
      %v575 = vunpack.c.l.b16 %v481
      %v576 = vunpack.c.l.b16 %v482
      %v577 = vunpack.c.l.b16 %v483
      %v578 = vunpack.c.l.b16 %v484
      %v579 = vunpack.c.l.b16 %v485
      %v580 = vunpack.c.l.b16 %v486
      %v581 = vunpack.c.l.b16 %v487
      %v582 = vunpack.c.l.b16 %v488
      %v583 = vunpack.c.l.b16 %v489
      %v584 = vpack.c.b16 %v569, %v568
      %v585 = vpack.c.b16 %v571, %v570
      %v586 = vpack.c.b16 %v573, %v572
      %v587 = vpack.c.b16 %v575, %v574
      %v588 = vpack.c.b16 %v577, %v576
      %v589 = vpack.c.b16 %v579, %v578
      %v590 = vpack.c.b16 %v581, %v580
      %v591 = vpack.c.b16 %v583, %v582
      %600 = vmatprep.subr.bf16.mxu0 0
      %601 = vmatpush1.bf16.msra.mxu0 %v584
      %602 = vmatprep.subr.bf16.mxu0 0
      %603 = vmatpush1.bf16.msra.mxu0 %v585
      %604 = vmatprep.subr.bf16.mxu0 0
      %605 = vmatpush1.bf16.msra.mxu0 %v586
      %606 = vmatprep.subr.bf16.mxu0 0
      %607 = vmatpush1.bf16.msra.mxu0 %v587
      %608 = vmatprep.subr.bf16.mxu0 0
      %609 = vmatpush1.bf16.msra.mxu0 %v588
      %610 = vmatprep.subr.bf16.mxu0 0
      %611 = vmatpush1.bf16.msra.mxu0 %v589
      %612 = vmatprep.subr.bf16.mxu0 0
      %613 = vmatpush1.bf16.msra.mxu0 %v590
      %614 = vmatprep.subr.bf16.mxu0 0
      %615 = vmatpush1.bf16.msra.mxu0 %v591
      %616 = vmatprep.subr.bf16.mxu0 0
      %617 = vmatpush1.bf16.msra.mxu0 0
      %618 = vmatprep.subr.bf16.mxu0 0
      %619 = vmatpush1.bf16.msra.mxu0 0
      %620 = vmatprep.subr.bf16.mxu0 0
      %621 = vmatpush1.bf16.msra.mxu0 0
      %622 = vmatprep.subr.bf16.mxu0 0
      %623 = vmatpush1.bf16.msra.mxu0 0
      %624 = vmatprep.subr.bf16.mxu0 0
      %625 = vmatpush1.bf16.msra.mxu0 0
      %626 = vmatprep.subr.bf16.mxu0 0
      %627 = vmatpush1.bf16.msra.mxu0 0
      %628 = vmatprep.subr.bf16.mxu0 0
      %629 = vmatpush1.bf16.msra.mxu0 0
      %630 = vmatprep.subr.bf16.mxu0 0
      %631 = vmatpush1.bf16.msra.mxu0 0
      %632 = vmatprep.mubr.bf16.mxu0 0
      %633 = vmatmul.mubr.bf16.gmra.mrb[0].mxu0 %v544
      %v634 = vpop.f32.mrb[0].mxu0
      %v635 = vadd.f32 %v550, %v634
      %v636 = vpop.f32.mrb[0].mxu0
      %v637 = vpop.f32.mrb[0].mxu0
      %v638 = vpop.f32.mrb[0].mxu0
      %639 = vdwg.mxu0
      %v641 = vlaneseq
      %v642 = vshrl.u32 %v641, 7
      %v643 = vsub.s32 0, %v642
      %v644 = vrot.slane %v507, %v643
      %v662 = vunpack.c.l.b16 %v491
      %v663 = vunpack.c.l.b16 %v492
      %v664 = vunpack.c.l.b16 %v493
      %v665 = vunpack.c.l.b16 %v494
      %v666 = vunpack.c.l.b16 %v495
      %v667 = vunpack.c.l.b16 %v496
      %v668 = vunpack.c.l.b16 %v497
      %v669 = vunpack.c.l.b16 %v498
      %v670 = vunpack.c.l.b16 %v499
      %v671 = vunpack.c.l.b16 %v500
      %v672 = vunpack.c.l.b16 %v501
      %v673 = vunpack.c.l.b16 %v502
      %v674 = vunpack.c.l.b16 %v503
      %v675 = vunpack.c.l.b16 %v504
      %v676 = vunpack.c.l.b16 %v505
      %v677 = vunpack.c.l.b16 %v506
      %v678 = vpack.c.b16 %v663, %v662
      %v679 = vpack.c.b16 %v665, %v664
      %v680 = vpack.c.b16 %v667, %v666
      %v681 = vpack.c.b16 %v669, %v668
      %v682 = vpack.c.b16 %v671, %v670
      %v683 = vpack.c.b16 %v673, %v672
      %v684 = vpack.c.b16 %v675, %v674
      %v685 = vpack.c.b16 %v677, %v676
      %694 = vmatprep.subr.bf16.mxu0 0
      %695 = vmatpush1.bf16.msra.mxu0 %v678
      %696 = vmatprep.subr.bf16.mxu0 0
      %697 = vmatpush1.bf16.msra.mxu0 %v679
      %698 = vmatprep.subr.bf16.mxu0 0
      %699 = vmatpush1.bf16.msra.mxu0 %v680
      %700 = vmatprep.subr.bf16.mxu0 0
      %701 = vmatpush1.bf16.msra.mxu0 %v681
      %702 = vmatprep.subr.bf16.mxu0 0
      %703 = vmatpush1.bf16.msra.mxu0 %v682
      %704 = vmatprep.subr.bf16.mxu0 0
      %705 = vmatpush1.bf16.msra.mxu0 %v683
      %706 = vmatprep.subr.bf16.mxu0 0
      %707 = vmatpush1.bf16.msra.mxu0 %v684
      %708 = vmatprep.subr.bf16.mxu0 0
      %709 = vmatpush1.bf16.msra.mxu0 %v685
      %710 = vmatprep.subr.bf16.mxu0 0
      %711 = vmatpush1.bf16.msra.mxu0 0
      %712 = vmatprep.subr.bf16.mxu0 0
      %713 = vmatpush1.bf16.msra.mxu0 0
      %714 = vmatprep.subr.bf16.mxu0 0
      %715 = vmatpush1.bf16.msra.mxu0 0
      %716 = vmatprep.subr.bf16.mxu0 0
      %717 = vmatpush1.bf16.msra.mxu0 0
      %718 = vmatprep.subr.bf16.mxu0 0
      %719 = vmatpush1.bf16.msra.mxu0 0
      %720 = vmatprep.subr.bf16.mxu0 0
      %721 = vmatpush1.bf16.msra.mxu0 0
      %722 = vmatprep.subr.bf16.mxu0 0
      %723 = vmatpush1.bf16.msra.mxu0 0
      %724 = vmatprep.subr.bf16.mxu0 0
      %725 = vmatpush1.bf16.msra.mxu0 0
      %726 = vmatprep.mubr.bf16.mxu0 0
      %727 = vmatmul.mubr.bf16.gmra.mrb[0].mxu0 %v545
      %v728 = vpop.f32.mrb[0].mxu0
      %v729 = vadd.f32 %v644, %v728
      %v730 = vpop.f32.mrb[0].mxu0
      %v731 = vpop.f32.mrb[0].mxu0
      %v732 = vpop.f32.mrb[0].mxu0
      %733 = vdwg.mxu0
      %v735 = vlaneseq
      %v736 = vshrl.u32 %v735, 7
      %v737 = vsub.s32 0, %v736
      %v738 = vrot.slane %v524, %v737
      %v756 = vunpack.c.l.b16 %v508
      %v757 = vunpack.c.l.b16 %v509
      %v758 = vunpack.c.l.b16 %v510
      %v759 = vunpack.c.l.b16 %v511
      %v760 = vunpack.c.l.b16 %v512
      %v761 = vunpack.c.l.b16 %v513
      %v762 = vunpack.c.l.b16 %v514
      %v763 = vunpack.c.l.b16 %v515
      %v764 = vunpack.c.l.b16 %v516
      %v765 = vunpack.c.l.b16 %v517
      %v766 = vunpack.c.l.b16 %v518
      %v767 = vunpack.c.l.b16 %v519
      %v768 = vunpack.c.l.b16 %v520
      %v769 = vunpack.c.l.b16 %v521
      %v770 = vunpack.c.l.b16 %v522
      %v771 = vunpack.c.l.b16 %v523
      %v772 = vpack.c.b16 %v757, %v756
      %v773 = vpack.c.b16 %v759, %v758
      %v774 = vpack.c.b16 %v761, %v760
      %v775 = vpack.c.b16 %v763, %v762
      %v776 = vpack.c.b16 %v765, %v764
      %v777 = vpack.c.b16 %v767, %v766
      %v778 = vpack.c.b16 %v769, %v768
      %v779 = vpack.c.b16 %v771, %v770
      %788 = vmatprep.subr.bf16.mxu0 0
      %789 = vmatpush1.bf16.msra.mxu0 %v772
      %790 = vmatprep.subr.bf16.mxu0 0
      %791 = vmatpush1.bf16.msra.mxu0 %v773
      %792 = vmatprep.subr.bf16.mxu0 0
      %793 = vmatpush1.bf16.msra.mxu0 %v774
      %794 = vmatprep.subr.bf16.mxu0 0
      %795 = vmatpush1.bf16.msra.mxu0 %v775
      %796 = vmatprep.subr.bf16.mxu0 0
      %797 = vmatpush1.bf16.msra.mxu0 %v776
      %798 = vmatprep.subr.bf16.mxu0 0
      %799 = vmatpush1.bf16.msra.mxu0 %v777
      %800 = vmatprep.subr.bf16.mxu0 0
      %801 = vmatpush1.bf16.msra.mxu0 %v778
      %802 = vmatprep.subr.bf16.mxu0 0
      %803 = vmatpush1.bf16.msra.mxu0 %v779
      %804 = vmatprep.subr.bf16.mxu0 0
      %805 = vmatpush1.bf16.msra.mxu0 0
      %806 = vmatprep.subr.bf16.mxu0 0
      %807 = vmatpush1.bf16.msra.mxu0 0
      %808 = vmatprep.subr.bf16.mxu0 0
      %809 = vmatpush1.bf16.msra.mxu0 0
      %810 = vmatprep.subr.bf16.mxu0 0
      %811 = vmatpush1.bf16.msra.mxu0 0
      %812 = vmatprep.subr.bf16.mxu0 0
      %813 = vmatpush1.bf16.msra.mxu0 0
      %814 = vmatprep.subr.bf16.mxu0 0
      %815 = vmatpush1.bf16.msra.mxu0 0
      %816 = vmatprep.subr.bf16.mxu0 0
      %817 = vmatpush1.bf16.msra.mxu0 0
      %818 = vmatprep.subr.bf16.mxu0 0
      %819 = vmatpush1.bf16.msra.mxu0 0
      %820 = vmatprep.mubr.bf16.mxu0 0
      %821 = vmatmul.mubr.bf16.gmra.mrb[0].mxu0 %v545
      %v822 = vpop.f32.mrb[0].mxu0
      %v823 = vadd.f32 %v738, %v822
      %v824 = vpop.f32.mrb[0].mxu0
      %v825 = vpop.f32.mrb[0].mxu0
      %v826 = vpop.f32.mrb[0].mxu0
      %827 = vdwg.mxu0
      %v828 = vpack.c.bf16 %v635, %v635
      %v829 = vpack.c.bf16 %v729, %v729
      %830 = vmatprep.subr.bf16.mxu0 0
      %831 = vmatpush1.bf16.xpose.msra.mxu0 %v829
      %832 = vmatprep.subr.bf16.mxu0 0
      %833 = vmatpush1.bf16.xpose.msra.mxu0 0
      %834 = vmatprep.subr.bf16.mxu0 0
      %835 = vmatpush1.bf16.xpose.msra.mxu0 0
      %836 = vmatprep.subr.bf16.mxu0 0
      %837 = vmatpush1.bf16.xpose.msra.mxu0 0
      %838 = vmatprep.subr.bf16.mxu0 0
      %839 = vmatpush1.bf16.xpose.msra.mxu0 0
      %840 = vmatprep.subr.bf16.mxu0 0
      %841 = vmatpush1.bf16.xpose.msra.mxu0 0
      %842 = vmatprep.subr.bf16.mxu0 0
      %843 = vmatpush1.bf16.xpose.msra.mxu0 0
      %844 = vmatprep.subr.bf16.mxu0 0
      %845 = vmatpush1.bf16.xpose.msra.mxu0 0
      %846 = vmatprep.subr.bf16.mxu0 0
      %847 = vmatpush1.bf16.xpose.msra.mxu0 0
      %848 = vmatprep.subr.bf16.mxu0 0
      %849 = vmatpush1.bf16.xpose.msra.mxu0 0
      %850 = vmatprep.subr.bf16.mxu0 0
      %851 = vmatpush1.bf16.xpose.msra.mxu0 0
      %852 = vmatprep.subr.bf16.mxu0 0
      %853 = vmatpush1.bf16.xpose.msra.mxu0 0
      %854 = vmatprep.subr.bf16.mxu0 0
      %855 = vmatpush1.bf16.xpose.msra.mxu0 0
      %856 = vmatprep.subr.bf16.mxu0 0
      %857 = vmatpush1.bf16.xpose.msra.mxu0 0
      %858 = vmatprep.subr.bf16.mxu0 0
      %859 = vmatpush1.bf16.xpose.msra.mxu0 0
      %860 = vmatprep.subr.bf16.mxu0 0
      %861 = vmatpush1.bf16.xpose.msra.mxu0 0
      %862 = vmatprep.mubr.bf16.mxu0 0
      %863 = vmatmul.mubr.bf16.gmra.mrb[0].mxu0 %v828
      %v864 = vpop.f32.mrb[0].mxu0
      %v865 = vadd.f32 0.0, %v864
      %v866 = vpop.f32.mrb[0].mxu0
      %v867 = vpop.f32.mrb[0].mxu0
      %v868 = vpop.f32.mrb[0].mxu0
      %869 = vdwg.mxu0
      %vm870 = vcmp.ne.f32.partialorder %v473, 0.0
      %v871 = vsel %vm870, -1e+09, %v865
      %vm872 = vcmask 64512
      %v873 = vsel %vm872, %v871, -inf
      %874 = vmax.xlane.f32.xlu0 %v873
      %v875 = vpop.xlane.xlu0 %874
      %v876 = vsub.f32 %v871, %v875
      %v877 = vmul.f32 %v876, 1.442695
      %v878 = vpow.pop %v877
      %v879 = vsel %vm872, %v878, 0.0
      %880 = vadd.xlane.f32.xlu0 %v879
      %v881 = vpop.xlane.xlu0 %880
      %v882 = vpack.c.bf16 %v878, %v878
      %v883 = vpack.c.bf16 %v823, %v823
      %v885 = vsel %vm872, %v882, 0
      %vm887 = vcmask 1043456
      %v889 = vsel %vm887, %v883, 0
      %891 = vmatprep.subr.bf16.mxu0 0
      %892 = vmatpush1.bf16.msra.mxu0 %v889
      %893 = vmatprep.subr.bf16.mxu0 0
      %894 = vmatpush1.bf16.msra.mxu0 0
      %895 = vmatprep.subr.bf16.mxu0 0
      %896 = vmatpush1.bf16.msra.mxu0 0
      %897 = vmatprep.subr.bf16.mxu0 0
      %898 = vmatpush1.bf16.msra.mxu0 0
      %899 = vmatprep.subr.bf16.mxu0 0
      %900 = vmatpush1.bf16.msra.mxu0 0
      %901 = vmatprep.subr.bf16.mxu0 0
      %902 = vmatpush1.bf16.msra.mxu0 0
      %903 = vmatprep.subr.bf16.mxu0 0
      %904 = vmatpush1.bf16.msra.mxu0 0
      %905 = vmatprep.subr.bf16.mxu0 0
      %906 = vmatpush1.bf16.msra.mxu0 0
      %907 = vmatprep.subr.bf16.mxu0 0
      %908 = vmatpush1.bf16.msra.mxu0 0
      %909 = vmatprep.subr.bf16.mxu0 0
      %910 = vmatpush1.bf16.msra.mxu0 0
      %911 = vmatprep.subr.bf16.mxu0 0
      %912 = vmatpush1.bf16.msra.mxu0 0
      %913 = vmatprep.subr.bf16.mxu0 0
      %914 = vmatpush1.bf16.msra.mxu0 0
      %915 = vmatprep.subr.bf16.mxu0 0
      %916 = vmatpush1.bf16.msra.mxu0 0
      %917 = vmatprep.subr.bf16.mxu0 0
      %918 = vmatpush1.bf16.msra.mxu0 0
      %919 = vmatprep.subr.bf16.mxu0 0
      %920 = vmatpush1.bf16.msra.mxu0 0
      %921 = vmatprep.subr.bf16.mxu0 0
      %922 = vmatpush1.bf16.msra.mxu0 0
      %923 = vmatprep.mubr.bf16.mxu0 0
      %924 = vmatmul.mubr.bf16.gmra.mrb[0].mxu0 %v885
      %v925 = vpop.f32.mrb[0].mxu0
      %v926 = vadd.f32 0.0, %v925
      %v927 = vpop.f32.mrb[0].mxu0
      %v928 = vpop.f32.mrb[0].mxu0
      %v929 = vpop.f32.mrb[0].mxu0
      %930 = vdwg.mxu0
      %v931 = vrcp.pop %v881
      %v932 = vmul.f32 %v926, %v931
      %v933 = vpack.c.bf16 %v932, %v932
      %v935 = vlaneseq
      %v936 = vshrl.u32 %v935, 7
      %v937 = vsub.s32 0, %v936
      %v938 = vrot.slane %v541, %v937
      %v956 = vunpack.c.l.b16 %v525
      %v957 = vunpack.c.l.b16 %v526
      %v958 = vunpack.c.l.b16 %v527
      %v959 = vunpack.c.l.b16 %v528
      %v960 = vunpack.c.l.b16 %v529
      %v961 = vunpack.c.l.b16 %v530
      %v962 = vunpack.c.l.b16 %v531
      %v963 = vunpack.c.l.b16 %v532
      %v964 = vunpack.c.l.b16 %v533
      %v965 = vunpack.c.l.b16 %v534
      %v966 = vunpack.c.l.b16 %v535
      %v967 = vunpack.c.l.b16 %v536
      %v968 = vunpack.c.l.b16 %v537
      %v969 = vunpack.c.l.b16 %v538
      %v970 = vunpack.c.l.b16 %v539
      %v971 = vunpack.c.l.b16 %v540
      %v972 = vpack.c.b16 %v957, %v956
      %v973 = vpack.c.b16 %v959, %v958
      %v974 = vpack.c.b16 %v961, %v960
      %v975 = vpack.c.b16 %v963, %v962
      %v976 = vpack.c.b16 %v965, %v964
      %v977 = vpack.c.b16 %v967, %v966
      %v978 = vpack.c.b16 %v969, %v968
      %v979 = vpack.c.b16 %v971, %v970
      %988 = vmatprep.subr.bf16.mxu0 0
      %989 = vmatpush1.bf16.msra.mxu0 %v972
      %990 = vmatprep.subr.bf16.mxu0 0
      %991 = vmatpush1.bf16.msra.mxu0 %v973
      %992 = vmatprep.subr.bf16.mxu0 0
      %993 = vmatpush1.bf16.msra.mxu0 %v974
      %994 = vmatprep.subr.bf16.mxu0 0
      %995 = vmatpush1.bf16.msra.mxu0 %v975
      %996 = vmatprep.subr.bf16.mxu0 0
      %997 = vmatpush1.bf16.msra.mxu0 %v976
      %998 = vmatprep.subr.bf16.mxu0 0
      %999 = vmatpush1.bf16.msra.mxu0 %v977
      %1000 = vmatprep.subr.bf16.mxu0 0
      %1001 = vmatpush1.bf16.msra.mxu0 %v978
      %1002 = vmatprep.subr.bf16.mxu0 0
      %1003 = vmatpush1.bf16.msra.mxu0 %v979
      %1004 = vmatprep.subr.bf16.mxu0 0
      %1005 = vmatpush1.bf16.msra.mxu0 0
      %1006 = vmatprep.subr.bf16.mxu0 0
      %1007 = vmatpush1.bf16.msra.mxu0 0
      %1008 = vmatprep.subr.bf16.mxu0 0
      %1009 = vmatpush1.bf16.msra.mxu0 0
      %1010 = vmatprep.subr.bf16.mxu0 0
      %1011 = vmatpush1.bf16.msra.mxu0 0
      %1012 = vmatprep.subr.bf16.mxu0 0
      %1013 = vmatpush1.bf16.msra.mxu0 0
      %1014 = vmatprep.subr.bf16.mxu0 0
      %1015 = vmatpush1.bf16.msra.mxu0 0
      %1016 = vmatprep.subr.bf16.mxu0 0
      %1017 = vmatpush1.bf16.msra.mxu0 0
      %1018 = vmatprep.subr.bf16.mxu0 0
      %1019 = vmatpush1.bf16.msra.mxu0 0
      %1020 = vmatprep.mubr.bf16.mxu0 0
      %1021 = vmatmul.mubr.bf16.gmra.mrb[0].mxu0 %v933
      %v1022 = vpop.f32.mrb[0].mxu0
      %v1023 = vadd.f32 %v938, %v1022
      %v1024 = vpop.f32.mrb[0].mxu0
      %v1025 = vpop.f32.mrb[0].mxu0
      %v1026 = vpop.f32.mrb[0].mxu0
      %1027 = vdwg.mxu0
      %v1028 = vadd.f32 %v1023, %v471
      %1029 = vadd.xlane.f32.xlu0 %v1028
      %v1030 = vpop.xlane.xlu0 %1029
      %v1031 = vrcp.pop 128.0
      %v1032 = vmul.f32 %v1030, %v1031
      %v1033 = vsub.f32 %v1028, %v1032
      %v1034 = vmul.f32 %v1033, %v1033
      %1035 = vadd.xlane.f32.xlu0 %v1034
      %v1036 = vpop.xlane.xlu0 %1035
      %v1037 = vmul.f32 %v1036, %v1031
      %v1038 = vadd.f32 %v1037, 1e-05
      %v1039 = vrsqrt.pop %v1038
      %v1040 = vmul.f32 %v1033, %v1039
      %v1042 = vlaneseq
      %v1043 = vshrl.u32 %v1042, 7
      %v1044 = vsub.s32 0, %v1043
      %v1045 = vrot.slane %v542, %v1044
      %v1047 = vmul.f32 %v1040, %v1045
      %v1049 = vlaneseq
      %v1050 = vshrl.u32 %v1049, 7
      %v1051 = vsub.s32 0, %v1050
      %v1052 = vrot.slane %v543, %v1051
      %v1054 = vadd.f32 %v1047, %v1052
      %1055 = vst [vmem:[%s469] sm:$0xff] %v1054
      %p1056 = scmp.lt.s32.totalorder %s24, 1
      %s1057 = scalar_select %p1056, %s24, 1
      %s1058 = smul.addr %s1057, 8
      %s1059 = scalar_lea.vmem %s13, %s1058
      // Predicated region
      $region73: #{transformer_forward.11} parent=71 // pred_check
        %p1060 = pneg %p330
      $region74: #{transformer_forward.11} parent=71 // pred_check_branch
        %1062 = sbr.rel (%p1060) target = $region76
      $region75: #{transformer_forward.11} parent=71 // pred_region
        _
      $region76: #{transformer_forward.11} parent=71 // pred_fallthru
        _
    $region72: #{transformer_forward.11} parent=5 // pred_fallthru
      _
    %p1063 = scmp.le.s32.totalorder 2, %s19
    // Predicated region
    $region77: #{transformer_forward.11} parent=5 // pred_check
      %p1064 = pneg %p1063
    $region78: #{transformer_forward.11} parent=5 // pred_check_branch
      %1066 = sbr.rel (%p1064) target = $region80
    $region79: #{transformer_forward.11} parent=5 // pred_region
      %s1067 = ssub.s32 %s19, 2
      // Predicated region
      $region81: #{transformer_forward.11} parent=79 // pred_check
        %p1068 = pneg %p336
      $region82: #{transformer_forward.11} parent=79 // pred_check_branch
        %1070 = sbr.rel (%p1068) target = $region84
      $region83: #{transformer_forward.11} parent=79 // pred_region
        %p1071 = scmp.lt.s32.totalorder %s25, 1
        %s1072 = scalar_select %p1071, %s25, 1
        %s1073 = smul.addr %s1072, 8
        %s1074 = scalar_lea.vmem %s13, %s1073
      $region84: #{transformer_forward.11} parent=79 // pred_fallthru
        _
    $region80: #{transformer_forward.11} parent=5 // pred_fallthru
      _
  $region6: #{transformer_forward.11} parent=0 // loop_footer
    %s23 = sadd.s32 1, %s19
  $region7: #{transformer_forward.11} parent=0 // loop_footer_branch
    %18 = sbr.rel target = $region3
  $region8: #{transformer_forward.11} parent=0 // loop_exit
    _

// kernel: transformer_forward.16
$region0: #{transformer_forward.16}
  #allocation0 [shape = 'u32[]', space=smem, size = 0x4, offset = 0x4, fixed_abs, tag = 'smem constant byte address 0x4 - core index']
  #allocation1 [shape = 'u32[144,128]{1,0:T(1,128)}', space=vmem, size = 0x12000, scoped, tag = 'internal scratch']
  %s0 = inlined_call_operand.vmem [shape: f32[2,8,128], index: 0, kind: input, shape index: {}]
  %s1 = inlined_call_operand.vmem [shape: f32[2,8,128], index: 1, kind: input, shape index: {}]
  %s2 = inlined_call_operand.vmem [shape: bf16[128,128], index: 2, kind: input, shape index: {}]
  %s3 = inlined_call_operand.vmem [shape: f32[1,128], index: 3, kind: input, shape index: {}]
  %s4 = inlined_call_operand.vmem [shape: bf16[128,128], index: 4, kind: input, shape index: {}]
  %s5 = inlined_call_operand.vmem [shape: f32[1,128], index: 5, kind: input, shape index: {}]
  %s6 = inlined_call_operand.vmem [shape: bf16[128,128], index: 6, kind: input, shape index: {}]
  %s7 = inlined_call_operand.vmem [shape: f32[1,128], index: 7, kind: input, shape index: {}]
  %s8 = inlined_call_operand.vmem [shape: bf16[128,128], index: 8, kind: input, shape index: {}]
  %s9 = inlined_call_operand.vmem [shape: f32[1,128], index: 9, kind: input, shape index: {}]
  %s10 = inlined_call_operand.vmem [shape: f32[1,128], index: 10, kind: input, shape index: {}]
  %s11 = inlined_call_operand.vmem [shape: f32[1,128], index: 11, kind: input, shape index: {}]
  %s12 = inlined_call_operand.vmem [shape: f32[2,8,128], index: 12, kind: output, shape index: {}]
  %s13 = sld [smem:[#allocation0]]
  $region81: #{transformer_forward.16} parent=0
    _
  %s15 = ssub.s32 1, %s13
  %s16 = scalar_select 0, %s15, %s13
  loop: start=0, step=1, limit=4
  $region2: #{transformer_forward.16} parent=0 // loop_pre_header
    _
  $region3: #{transformer_forward.16} parent=0 // loop_header
    %s18 = sphi 0, %s22
    %p19 = scmp.ge.s32.totalorder %s18, 4
    %s28 = sphi 0, %s30
    %s31 = sphi 0, %s28
    %s32 = sphi 0, %s31
    %s48 = sphi 0, %s32
    %s54 = sphi 0, %s56
    %s57 = sphi 0, %s54
    %s58 = sphi 0, %s57
    %s74 = sphi 0, %s58
    %s78 = sphi 0, %s78
    %s80 = sphi 0, %s78
    %s81 = sphi 0, %s80
    %s95 = sphi 0, %s81
    %s99 = sphi 0, %s99
    %s101 = sphi 0, %s99
    %s102 = sphi 0, %s101
    %s116 = sphi 0, %s102
    %s120 = sphi 0, %s120
    %s122 = sphi 0, %s120
    %s123 = sphi 0, %s122
    %s137 = sphi 0, %s123
    %s141 = sphi 0, %s141
    %s143 = sphi 0, %s141
    %s144 = sphi 0, %s143
    %s158 = sphi 0, %s144
    %s162 = sphi 0, %s162
    %s164 = sphi 0, %s162
    %s165 = sphi 0, %s164
    %s179 = sphi 0, %s165
    %s183 = sphi 0, %s183
    %s185 = sphi 0, %s183
    %s186 = sphi 0, %s185
    %s200 = sphi 0, %s186
    %s204 = sphi 0, %s204
    %s206 = sphi 0, %s204
    %s207 = sphi 0, %s206
    %s221 = sphi 0, %s207
    %s225 = sphi 0, %s225
    %s227 = sphi 0, %s225
    %s228 = sphi 0, %s227
    %s242 = sphi 0, %s228
    %s246 = sphi 0, %s246
    %s248 = sphi 0, %s246
    %s249 = sphi 0, %s248
    %s263 = sphi 0, %s249
    %s267 = sphi 0, %s267
    %s269 = sphi 0, %s267
    %s270 = sphi 0, %s269
    %s284 = sphi 0, %s270
    %s290 = sphi 0, %s292
    %s293 = sphi 0, %s290
    %s294 = sphi 0, %s293
    %s310 = sphi 0, %s294
  $region4: #{transformer_forward.16} parent=0 // loop_header_branch
    %21 = sbr.rel (%p19) target = $region8
  $region5: #{transformer_forward.16} parent=0 // loop_body
    %s23 = ssub.s32 %s18, 1
    %s24 = ssub.s32 %s18, 2
    %s25 = sadd.s32 %s18, 1
    %s26 = ssub.s32 %s18, %s25
    %p27 = scmp.eq.s32.totalorder %s26, 0
    %s29 = sadd.s32 %s28, 1
    %s30 = scalar_select %p27, %s28, %s29
    %p33 = pneg %p27
    %p34 = scmp.eq.s32.totalorder %s18, 1
    %p35 = por %p33, %p34
    %p36 = scmp.ne.s32.totalorder %s28, %s31
    %p37 = scmp.eq.s32.totalorder %s18, 0
    %p38 = por %p36, %p37
    %p39 = scmp.ne.s32.totalorder %s28, %s31
    %p40 = scmp.eq.s32.totalorder %s23, 1
    %p41 = por %p39, %p40
    %p42 = scmp.ne.s32.totalorder %s31, %s32
    %p43 = scmp.eq.s32.totalorder %s23, 0
    %p44 = por %p42, %p43
    %p45 = scmp.ne.s32.totalorder %s31, %s32
    %p46 = scmp.eq.s32.totalorder %s24, 1
    %p47 = por %p45, %p46
    %p49 = scmp.ne.s32.totalorder %s32, %s48
    %p50 = scmp.eq.s32.totalorder %s24, 0
    %p51 = por %p49, %p50
    %s52 = ssub.s32 %s18, %s25
    %p53 = scmp.eq.s32.totalorder %s52, 0
    %s55 = sadd.s32 %s54, 1
    %s56 = scalar_select %p53, %s54, %s55
    %p59 = pneg %p53
    %p60 = scmp.eq.s32.totalorder %s18, 1
    %p61 = por %p59, %p60
    %p62 = scmp.ne.s32.totalorder %s54, %s57
    %p63 = scmp.eq.s32.totalorder %s18, 0
    %p64 = por %p62, %p63
    %p65 = scmp.ne.s32.totalorder %s54, %s57
    %p66 = scmp.eq.s32.totalorder %s23, 1
    %p67 = por %p65, %p66
    %p68 = scmp.ne.s32.totalorder %s57, %s58
    %p69 = scmp.eq.s32.totalorder %s23, 0
    %p70 = por %p68, %p69
    %p71 = scmp.ne.s32.totalorder %s57, %s58
    %p72 = scmp.eq.s32.totalorder %s24, 1
    %p73 = por %p71, %p72
    %p75 = scmp.ne.s32.totalorder %s58, %s74
    %p76 = scmp.eq.s32.totalorder %s24, 0
    %p77 = por %p75, %p76
    %s79 = sadd.s32 %s78, 1
    %p82 = scmp.eq.s32.totalorder %s18, 1
    %p83 = scmp.ne.s32.totalorder %s78, %s80
    %p84 = scmp.eq.s32.totalorder %s18, 0
    %p85 = por %p83, %p84
    %p86 = scmp.ne.s32.totalorder %s78, %s80
    %p87 = scmp.eq.s32.totalorder %s23, 1
    %p88 = por %p86, %p87
    %p89 = scmp.ne.s32.totalorder %s80, %s81
    %p90 = scmp.eq.s32.totalorder %s23, 0
    %p91 = por %p89, %p90
    %p92 = scmp.ne.s32.totalorder %s80, %s81
    %p93 = scmp.eq.s32.totalorder %s24, 1
    %p94 = por %p92, %p93
    %p96 = scmp.ne.s32.totalorder %s81, %s95
    %p97 = scmp.eq.s32.totalorder %s24, 0
    %p98 = por %p96, %p97
    %s100 = sadd.s32 %s99, 1
    %p103 = scmp.eq.s32.totalorder %s18, 1
    %p104 = scmp.ne.s32.totalorder %s99, %s101
    %p105 = scmp.eq.s32.totalorder %s18, 0
    %p106 = por %p104, %p105
    %p107 = scmp.ne.s32.totalorder %s99, %s101
    %p108 = scmp.eq.s32.totalorder %s23, 1
    %p109 = por %p107, %p108
    %p110 = scmp.ne.s32.totalorder %s101, %s102
    %p111 = scmp.eq.s32.totalorder %s23, 0
    %p112 = por %p110, %p111
    %p113 = scmp.ne.s32.totalorder %s101, %s102
    %p114 = scmp.eq.s32.totalorder %s24, 1
    %p115 = por %p113, %p114
    %p117 = scmp.ne.s32.totalorder %s102, %s116
    %p118 = scmp.eq.s32.totalorder %s24, 0
    %p119 = por %p117, %p118
    %s121 = sadd.s32 %s120, 1
    %p124 = scmp.eq.s32.totalorder %s18, 1
    %p125 = scmp.ne.s32.totalorder %s120, %s122
    %p126 = scmp.eq.s32.totalorder %s18, 0
    %p127 = por %p125, %p126
    %p128 = scmp.ne.s32.totalorder %s120, %s122
    %p129 = scmp.eq.s32.totalorder %s23, 1
    %p130 = por %p128, %p129
    %p131 = scmp.ne.s32.totalorder %s122, %s123
    %p132 = scmp.eq.s32.totalorder %s23, 0
    %p133 = por %p131, %p132
    %p134 = scmp.ne.s32.totalorder %s122, %s123
    %p135 = scmp.eq.s32.totalorder %s24, 1
    %p136 = por %p134, %p135
    %p138 = scmp.ne.s32.totalorder %s123, %s137
    %p139 = scmp.eq.s32.totalorder %s24, 0
    %p140 = por %p138, %p139
    %s142 = sadd.s32 %s141, 1
    %p145 = scmp.eq.s32.totalorder %s18, 1
    %p146 = scmp.ne.s32.totalorder %s141, %s143
    %p147 = scmp.eq.s32.totalorder %s18, 0
    %p148 = por %p146, %p147
    %p149 = scmp.ne.s32.totalorder %s141, %s143
    %p150 = scmp.eq.s32.totalorder %s23, 1
    %p151 = por %p149, %p150
    %p152 = scmp.ne.s32.totalorder %s143, %s144
    %p153 = scmp.eq.s32.totalorder %s23, 0
    %p154 = por %p152, %p153
    %p155 = scmp.ne.s32.totalorder %s143, %s144
    %p156 = scmp.eq.s32.totalorder %s24, 1
    %p157 = por %p155, %p156
    %p159 = scmp.ne.s32.totalorder %s144, %s158
    %p160 = scmp.eq.s32.totalorder %s24, 0
    %p161 = por %p159, %p160
    %s163 = sadd.s32 %s162, 1
    %p166 = scmp.eq.s32.totalorder %s18, 1
    %p167 = scmp.ne.s32.totalorder %s162, %s164
    %p168 = scmp.eq.s32.totalorder %s18, 0
    %p169 = por %p167, %p168
    %p170 = scmp.ne.s32.totalorder %s162, %s164
    %p171 = scmp.eq.s32.totalorder %s23, 1
    %p172 = por %p170, %p171
    %p173 = scmp.ne.s32.totalorder %s164, %s165
    %p174 = scmp.eq.s32.totalorder %s23, 0
    %p175 = por %p173, %p174
    %p176 = scmp.ne.s32.totalorder %s164, %s165
    %p177 = scmp.eq.s32.totalorder %s24, 1
    %p178 = por %p176, %p177
    %p180 = scmp.ne.s32.totalorder %s165, %s179
    %p181 = scmp.eq.s32.totalorder %s24, 0
    %p182 = por %p180, %p181
    %s184 = sadd.s32 %s183, 1
    %p187 = scmp.eq.s32.totalorder %s18, 1
    %p188 = scmp.ne.s32.totalorder %s183, %s185
    %p189 = scmp.eq.s32.totalorder %s18, 0
    %p190 = por %p188, %p189
    %p191 = scmp.ne.s32.totalorder %s183, %s185
    %p192 = scmp.eq.s32.totalorder %s23, 1
    %p193 = por %p191, %p192
    %p194 = scmp.ne.s32.totalorder %s185, %s186
    %p195 = scmp.eq.s32.totalorder %s23, 0
    %p196 = por %p194, %p195
    %p197 = scmp.ne.s32.totalorder %s185, %s186
    %p198 = scmp.eq.s32.totalorder %s24, 1
    %p199 = por %p197, %p198
    %p201 = scmp.ne.s32.totalorder %s186, %s200
    %p202 = scmp.eq.s32.totalorder %s24, 0
    %p203 = por %p201, %p202
    %s205 = sadd.s32 %s204, 1
    %p208 = scmp.eq.s32.totalorder %s18, 1
    %p209 = scmp.ne.s32.totalorder %s204, %s206
    %p210 = scmp.eq.s32.totalorder %s18, 0
    %p211 = por %p209, %p210
    %p212 = scmp.ne.s32.totalorder %s204, %s206
    %p213 = scmp.eq.s32.totalorder %s23, 1
    %p214 = por %p212, %p213
    %p215 = scmp.ne.s32.totalorder %s206, %s207
    %p216 = scmp.eq.s32.totalorder %s23, 0
    %p217 = por %p215, %p216
    %p218 = scmp.ne.s32.totalorder %s206, %s207
    %p219 = scmp.eq.s32.totalorder %s24, 1
    %p220 = por %p218, %p219
    %p222 = scmp.ne.s32.totalorder %s207, %s221
    %p223 = scmp.eq.s32.totalorder %s24, 0
    %p224 = por %p222, %p223
    %s226 = sadd.s32 %s225, 1
    %p229 = scmp.eq.s32.totalorder %s18, 1
    %p230 = scmp.ne.s32.totalorder %s225, %s227
    %p231 = scmp.eq.s32.totalorder %s18, 0
    %p232 = por %p230, %p231
    %p233 = scmp.ne.s32.totalorder %s225, %s227
    %p234 = scmp.eq.s32.totalorder %s23, 1
    %p235 = por %p233, %p234
    %p236 = scmp.ne.s32.totalorder %s227, %s228
    %p237 = scmp.eq.s32.totalorder %s23, 0
    %p238 = por %p236, %p237
    %p239 = scmp.ne.s32.totalorder %s227, %s228
    %p240 = scmp.eq.s32.totalorder %s24, 1
    %p241 = por %p239, %p240
    %p243 = scmp.ne.s32.totalorder %s228, %s242
    %p244 = scmp.eq.s32.totalorder %s24, 0
    %p245 = por %p243, %p244
    %s247 = sadd.s32 %s246, 1
    %p250 = scmp.eq.s32.totalorder %s18, 1
    %p251 = scmp.ne.s32.totalorder %s246, %s248
    %p252 = scmp.eq.s32.totalorder %s18, 0
    %p253 = por %p251, %p252
    %p254 = scmp.ne.s32.totalorder %s246, %s248
    %p255 = scmp.eq.s32.totalorder %s23, 1
    %p256 = por %p254, %p255
    %p257 = scmp.ne.s32.totalorder %s248, %s249
    %p258 = scmp.eq.s32.totalorder %s23, 0
    %p259 = por %p257, %p258
    %p260 = scmp.ne.s32.totalorder %s248, %s249
    %p261 = scmp.eq.s32.totalorder %s24, 1
    %p262 = por %p260, %p261
    %p264 = scmp.ne.s32.totalorder %s249, %s263
    %p265 = scmp.eq.s32.totalorder %s24, 0
    %p266 = por %p264, %p265
    %s268 = sadd.s32 %s267, 1
    %p271 = scmp.eq.s32.totalorder %s18, 1
    %p272 = scmp.ne.s32.totalorder %s267, %s269
    %p273 = scmp.eq.s32.totalorder %s18, 0
    %p274 = por %p272, %p273
    %p275 = scmp.ne.s32.totalorder %s267, %s269
    %p276 = scmp.eq.s32.totalorder %s23, 1
    %p277 = por %p275, %p276
    %p278 = scmp.ne.s32.totalorder %s269, %s270
    %p279 = scmp.eq.s32.totalorder %s23, 0
    %p280 = por %p278, %p279
    %p281 = scmp.ne.s32.totalorder %s269, %s270
    %p282 = scmp.eq.s32.totalorder %s24, 1
    %p283 = por %p281, %p282
    %p285 = scmp.ne.s32.totalorder %s270, %s284
    %p286 = scmp.eq.s32.totalorder %s24, 0
    %p287 = por %p285, %p286
    %s288 = ssub.s32 %s18, %s25
    %p289 = scmp.eq.s32.totalorder %s288, 0
    %s291 = sadd.s32 %s290, 1
    %s292 = scalar_select %p289, %s290, %s291
    %p295 = pneg %p289
    %p296 = scmp.eq.s32.totalorder %s18, 1
    %p297 = por %p295, %p296
    %p298 = scmp.ne.s32.totalorder %s290, %s293
    %p299 = scmp.eq.s32.totalorder %s18, 0
    %p300 = por %p298, %p299
    %p301 = scmp.ne.s32.totalorder %s290, %s293
    %p302 = scmp.eq.s32.totalorder %s23, 1
    %p303 = por %p301, %p302
    %p304 = scmp.ne.s32.totalorder %s293, %s294
    %p305 = scmp.eq.s32.totalorder %s23, 0
    %p306 = por %p304, %p305
    %p307 = scmp.ne.s32.totalorder %s293, %s294
    %p308 = scmp.eq.s32.totalorder %s24, 1
    %p309 = por %p307, %p308
    %p311 = scmp.ne.s32.totalorder %s294, %s310
    %p312 = scmp.eq.s32.totalorder %s24, 0
    %p313 = por %p311, %p312
    %p314 = scmp.le.s32.totalorder 1, %s18
    %p315 = scmp.lt.s32.totalorder %s18, 3
    %p316 = pnand %p314, %p315
    %p317 = pneg %p316
    // Predicated region
    $region9: #{transformer_forward.16} parent=5 // pred_check
      _
    $region10: #{transformer_forward.16} parent=5 // pred_check_branch
      %319 = sbr.rel (%p316) target = $region12
    $region11: #{transformer_forward.16} parent=5 // pred_region
      %s320 = ssub.s32 %s18, 1
      // Predicated region
      $region13: #{transformer_forward.16} parent=11 // pred_check
        %p321 = pneg %p91
      $region14: #{transformer_forward.16} parent=11 // pred_check_branch
        %323 = sbr.rel (%p321) target = $region16
      $region15: #{transformer_forward.16} parent=11 // pred_region
        _
      $region16: #{transformer_forward.16} parent=11 // pred_fallthru
        _
      // Predicated region
      $region17: #{transformer_forward.16} parent=11 // pred_check
        %p324 = pneg %p112
      $region18: #{transformer_forward.16} parent=11 // pred_check_branch
        %326 = sbr.rel (%p324) target = $region20
      $region19: #{transformer_forward.16} parent=11 // pred_region
        _
      $region20: #{transformer_forward.16} parent=11 // pred_fallthru
        _
      // Predicated region
      $region21: #{transformer_forward.16} parent=11 // pred_check
        %p327 = pneg %p133
      $region22: #{transformer_forward.16} parent=11 // pred_check_branch
        %329 = sbr.rel (%p327) target = $region24
      $region23: #{transformer_forward.16} parent=11 // pred_region
        _
      $region24: #{transformer_forward.16} parent=11 // pred_fallthru
        _
      // Predicated region
      $region25: #{transformer_forward.16} parent=11 // pred_check
        %p330 = pneg %p154
      $region26: #{transformer_forward.16} parent=11 // pred_check_branch
        %332 = sbr.rel (%p330) target = $region28
      $region27: #{transformer_forward.16} parent=11 // pred_region
        _
      $region28: #{transformer_forward.16} parent=11 // pred_fallthru
        _
      // Predicated region
      $region29: #{transformer_forward.16} parent=11 // pred_check
        %p333 = pneg %p175
      $region30: #{transformer_forward.16} parent=11 // pred_check_branch
        %335 = sbr.rel (%p333) target = $region32
      $region31: #{transformer_forward.16} parent=11 // pred_region
        _
      $region32: #{transformer_forward.16} parent=11 // pred_fallthru
        _
      // Predicated region
      $region33: #{transformer_forward.16} parent=11 // pred_check
        %p336 = pneg %p196
      $region34: #{transformer_forward.16} parent=11 // pred_check_branch
        %338 = sbr.rel (%p336) target = $region36
      $region35: #{transformer_forward.16} parent=11 // pred_region
        _
      $region36: #{transformer_forward.16} parent=11 // pred_fallthru
        _
      // Predicated region
      $region37: #{transformer_forward.16} parent=11 // pred_check
        %p339 = pneg %p217
      $region38: #{transformer_forward.16} parent=11 // pred_check_branch
        %341 = sbr.rel (%p339) target = $region40
      $region39: #{transformer_forward.16} parent=11 // pred_region
        _
      $region40: #{transformer_forward.16} parent=11 // pred_fallthru
        _
      // Predicated region
      $region41: #{transformer_forward.16} parent=11 // pred_check
        %p342 = pneg %p238
      $region42: #{transformer_forward.16} parent=11 // pred_check_branch
        %344 = sbr.rel (%p342) target = $region44
      $region43: #{transformer_forward.16} parent=11 // pred_region
        _
      $region44: #{transformer_forward.16} parent=11 // pred_fallthru
        _
      // Predicated region
      $region45: #{transformer_forward.16} parent=11 // pred_check
        %p345 = pneg %p259
      $region46: #{transformer_forward.16} parent=11 // pred_check_branch
        %347 = sbr.rel (%p345) target = $region48
      $region47: #{transformer_forward.16} parent=11 // pred_region
        _
      $region48: #{transformer_forward.16} parent=11 // pred_fallthru
        _
      // Predicated region
      $region49: #{transformer_forward.16} parent=11 // pred_check
        %p348 = pneg %p280
      $region50: #{transformer_forward.16} parent=11 // pred_check_branch
        %350 = sbr.rel (%p348) target = $region52
      $region51: #{transformer_forward.16} parent=11 // pred_region
        _
      $region52: #{transformer_forward.16} parent=11 // pred_fallthru
        _
    $region12: #{transformer_forward.16} parent=5 // pred_fallthru
      _
    %p351 = scmp.lt.s32.totalorder %s18, 2
    // Predicated region
    $region53: #{transformer_forward.16} parent=5 // pred_check
      %p352 = pneg %p351
    $region54: #{transformer_forward.16} parent=5 // pred_check_branch
      %354 = sbr.rel (%p352) target = $region56
    $region55: #{transformer_forward.16} parent=5 // pred_region
      // Predicated region
      $region57: #{transformer_forward.16} parent=55 // pred_check
        %p355 = pneg %p38
      $region58: #{transformer_forward.16} parent=55 // pred_check_branch
        %357 = sbr.rel (%p355) target = $region60
      $region59: #{transformer_forward.16} parent=55 // pred_region
        %p358 = scmp.lt.s32.totalorder %s18, 1
        %s359 = scalar_select %p358, %s18, 1
        %s360 = smul.addr %s359, 8
        %s361 = scalar_lea.vmem %s0, %s360
      $region60: #{transformer_forward.16} parent=55 // pred_fallthru
        _
      // Predicated region
      $region61: #{transformer_forward.16} parent=55 // pred_check
        %p362 = pneg %p64
      $region62: #{transformer_forward.16} parent=55 // pred_check_branch
        %364 = sbr.rel (%p362) target = $region64
      $region63: #{transformer_forward.16} parent=55 // pred_region
        %p365 = scmp.lt.s32.totalorder %s18, 1
        %s366 = scalar_select %p365, %s18, 1
        %s367 = smul.addr %s366, 8
        %s368 = scalar_lea.vmem %s1, %s367
      $region64: #{transformer_forward.16} parent=55 // pred_fallthru
        _
    $region56: #{transformer_forward.16} parent=5 // pred_fallthru
      _
    %p369 = scmp.le.s32.totalorder 1, %s18
    %p370 = scmp.lt.s32.totalorder %s18, 3
    %p371 = pnand %p369, %p370
    %p372 = pneg %p371
    // Predicated region
    $region65: #{transformer_forward.16} parent=5 // pred_check
      _
    $region66: #{transformer_forward.16} parent=5 // pred_check_branch
      %374 = sbr.rel (%p371) target = $region68
    $region67: #{transformer_forward.16} parent=5 // pred_region
      %s375 = ssub.s32 %s18, 1
      %p376 = scmp.lt.s32.totalorder %s23, 1
      %s377 = scalar_select %p376, %s23, 1
      %s378 = smul.addr %s377, 8
      %s379 = scalar_lea.vmem %s0, %s378
      %p380 = pneg %p44
      %p381 = pneg %p41
      %p382 = scmp.lt.s32.totalorder %s23, 1
      %s383 = scalar_select %p382, %s23, 1
      %s384 = smul.addr %s383, 8
      %s385 = scalar_lea.vmem %s1, %s384
      %p386 = pneg %p70
      %p387 = pneg %p67
      %p388 = pneg %p91
      %p389 = pneg %p88
      %p390 = pneg %p112
      %p391 = pneg %p109
      %p392 = pneg %p133
      %p393 = pneg %p130
      %p394 = pneg %p154
      %p395 = pneg %p151
      %p396 = pneg %p175
      %p397 = pneg %p172
      %p398 = pneg %p196
      %p399 = pneg %p193
      %p400 = pneg %p217
      %p401 = pneg %p214
      %p402 = pneg %p238
      %p403 = pneg %p235
      %p404 = pneg %p259
      %p405 = pneg %p256
      %p406 = pneg %p280
      %p407 = pneg %p277
      %p408 = pneg %p306
      %p409 = pneg %p303
      %p410 = scmp.lt.s32.totalorder %s23, 1
      %s411 = scalar_select %p410, %s23, 1
      %s412 = smul.addr %s411, 8
      %s413 = scalar_lea.vmem %s12, %s412
      %p414 = scmp.lt.s32.totalorder %s23, 1
      %s415 = scalar_select %p414, %s23, 1
      %s416 = smul.addr %s415, 8
      %s417 = scalar_lea.vmem %s0, %s416
      %p418 = scmp.lt.s32.totalorder %s23, 1
      %s419 = scalar_select %p418, %s23, 1
      %s420 = smul.addr %s419, 8
      %s421 = scalar_lea.vmem %s1, %s420
      %p422 = scmp.lt.s32.totalorder %s23, 1
      %s423 = scalar_select %p422, %s23, 1
      %s424 = smul.addr %s423, 8
      %s425 = scalar_lea.vmem %s12, %s424
      %v427 = vld [vmem:[%s417] sm:$0xff]
      %v428 = vld [vmem:[%s421] sm:$0xff]
      %v429 = vld [vmem:[%s2] sm:$0xf]
      %v430 = vld [vmem:[%s2 + $0x4] sm:$0xf]
      %v431 = vld [vmem:[%s2 + $0x8] sm:$0xf]
      %v432 = vld [vmem:[%s2 + $0xc] sm:$0xf]
      %v433 = vld [vmem:[%s2 + $0x10] sm:$0xf]
      %v434 = vld [vmem:[%s2 + $0x14] sm:$0xf]
      %v435 = vld [vmem:[%s2 + $0x18] sm:$0xf]
      %v436 = vld [vmem:[%s2 + $0x1c] sm:$0xf]
      %v437 = vld [vmem:[%s2 + $0x20] sm:$0xf]
      %v438 = vld [vmem:[%s2 + $0x24] sm:$0xf]
      %v439 = vld [vmem:[%s2 + $0x28] sm:$0xf]
      %v440 = vld [vmem:[%s2 + $0x2c] sm:$0xf]
      %v441 = vld [vmem:[%s2 + $0x30] sm:$0xf]
      %v442 = vld [vmem:[%s2 + $0x34] sm:$0xf]
      %v443 = vld [vmem:[%s2 + $0x38] sm:$0xf]
      %v444 = vld [vmem:[%s2 + $0x3c] sm:$0xf]
      %v445 = vld [vmem:[%s3] sm:$0x1]
      %v446 = vld [vmem:[%s4] sm:$0xf]
      %v447 = vld [vmem:[%s4 + $0x4] sm:$0xf]
      %v448 = vld [vmem:[%s4 + $0x8] sm:$0xf]
      %v449 = vld [vmem:[%s4 + $0xc] sm:$0xf]
      %v450 = vld [vmem:[%s4 + $0x10] sm:$0xf]
      %v451 = vld [vmem:[%s4 + $0x14] sm:$0xf]
      %v452 = vld [vmem:[%s4 + $0x18] sm:$0xf]
      %v453 = vld [vmem:[%s4 + $0x1c] sm:$0xf]
      %v454 = vld [vmem:[%s4 + $0x20] sm:$0xf]
      %v455 = vld [vmem:[%s4 + $0x24] sm:$0xf]
      %v456 = vld [vmem:[%s4 + $0x28] sm:$0xf]
      %v457 = vld [vmem:[%s4 + $0x2c] sm:$0xf]
      %v458 = vld [vmem:[%s4 + $0x30] sm:$0xf]
      %v459 = vld [vmem:[%s4 + $0x34] sm:$0xf]
      %v460 = vld [vmem:[%s4 + $0x38] sm:$0xf]
      %v461 = vld [vmem:[%s4 + $0x3c] sm:$0xf]
      %v462 = vld [vmem:[%s5] sm:$0x1]
      %v463 = vld [vmem:[%s6] sm:$0xf]
      %v464 = vld [vmem:[%s6 + $0x4] sm:$0xf]
      %v465 = vld [vmem:[%s6 + $0x8] sm:$0xf]
      %v466 = vld [vmem:[%s6 + $0xc] sm:$0xf]
      %v467 = vld [vmem:[%s6 + $0x10] sm:$0xf]
      %v468 = vld [vmem:[%s6 + $0x14] sm:$0xf]
      %v469 = vld [vmem:[%s6 + $0x18] sm:$0xf]
      %v470 = vld [vmem:[%s6 + $0x1c] sm:$0xf]
      %v471 = vld [vmem:[%s6 + $0x20] sm:$0xf]
      %v472 = vld [vmem:[%s6 + $0x24] sm:$0xf]
      %v473 = vld [vmem:[%s6 + $0x28] sm:$0xf]
      %v474 = vld [vmem:[%s6 + $0x2c] sm:$0xf]
      %v475 = vld [vmem:[%s6 + $0x30] sm:$0xf]
      %v476 = vld [vmem:[%s6 + $0x34] sm:$0xf]
      %v477 = vld [vmem:[%s6 + $0x38] sm:$0xf]
      %v478 = vld [vmem:[%s6 + $0x3c] sm:$0xf]
      %v479 = vld [vmem:[%s7] sm:$0x1]
      %v480 = vld [vmem:[%s8] sm:$0xf]
      %v481 = vld [vmem:[%s8 + $0x4] sm:$0xf]
      %v482 = vld [vmem:[%s8 + $0x8] sm:$0xf]
      %v483 = vld [vmem:[%s8 + $0xc] sm:$0xf]
      %v484 = vld [vmem:[%s8 + $0x10] sm:$0xf]
      %v485 = vld [vmem:[%s8 + $0x14] sm:$0xf]
      %v486 = vld [vmem:[%s8 + $0x18] sm:$0xf]
      %v487 = vld [vmem:[%s8 + $0x1c] sm:$0xf]
      %v488 = vld [vmem:[%s8 + $0x20] sm:$0xf]
      %v489 = vld [vmem:[%s8 + $0x24] sm:$0xf]
      %v490 = vld [vmem:[%s8 + $0x28] sm:$0xf]
      %v491 = vld [vmem:[%s8 + $0x2c] sm:$0xf]
      %v492 = vld [vmem:[%s8 + $0x30] sm:$0xf]
      %v493 = vld [vmem:[%s8 + $0x34] sm:$0xf]
      %v494 = vld [vmem:[%s8 + $0x38] sm:$0xf]
      %v495 = vld [vmem:[%s8 + $0x3c] sm:$0xf]
      %v496 = vld [vmem:[%s9] sm:$0x1]
      %v497 = vld [vmem:[%s10] sm:$0x1]
      %v498 = vld [vmem:[%s11] sm:$0x1]
      %v499 = vpack.c.bf16 %v427, %v427
      %v500 = vpack.c.bf16 %v428, %v428
      %v502 = vlaneseq
      %v503 = vshrl.u32 %v502, 7
      %v504 = vsub.s32 0, %v503
      %v505 = vrot.slane %v445, %v504
      %v523 = vunpack.c.l.b16 %v429
      %v524 = vunpack.c.l.b16 %v430
      %v525 = vunpack.c.l.b16 %v431
      %v526 = vunpack.c.l.b16 %v432
      %v527 = vunpack.c.l.b16 %v433
      %v528 = vunpack.c.l.b16 %v434
      %v529 = vunpack.c.l.b16 %v435
      %v530 = vunpack.c.l.b16 %v436
      %v531 = vunpack.c.l.b16 %v437
      %v532 = vunpack.c.l.b16 %v438
      %v533 = vunpack.c.l.b16 %v439
      %v534 = vunpack.c.l.b16 %v440
      %v535 = vunpack.c.l.b16 %v441
      %v536 = vunpack.c.l.b16 %v442
      %v537 = vunpack.c.l.b16 %v443
      %v538 = vunpack.c.l.b16 %v444
      %v539 = vpack.c.b16 %v524, %v523
      %v540 = vpack.c.b16 %v526, %v525
      %v541 = vpack.c.b16 %v528, %v527
      %v542 = vpack.c.b16 %v530, %v529
      %v543 = vpack.c.b16 %v532, %v531
      %v544 = vpack.c.b16 %v534, %v533
      %v545 = vpack.c.b16 %v536, %v535
      %v546 = vpack.c.b16 %v538, %v537
      %555 = vmatprep.subr.bf16.mxu0 0
      %556 = vmatpush1.bf16.msra.mxu0 %v539
      %557 = vmatprep.subr.bf16.mxu0 0
      %558 = vmatpush1.bf16.msra.mxu0 %v540
      %559 = vmatprep.subr.bf16.mxu0 0
      %560 = vmatpush1.bf16.msra.mxu0 %v541
      %561 = vmatprep.subr.bf16.mxu0 0
      %562 = vmatpush1.bf16.msra.mxu0 %v542
      %563 = vmatprep.subr.bf16.mxu0 0
      %564 = vmatpush1.bf16.msra.mxu0 %v543
      %565 = vmatprep.subr.bf16.mxu0 0
      %566 = vmatpush1.bf16.msra.mxu0 %v544
      %567 = vmatprep.subr.bf16.mxu0 0
      %568 = vmatpush1.bf16.msra.mxu0 %v545
      %569 = vmatprep.subr.bf16.mxu0 0
      %570 = vmatpush1.bf16.msra.mxu0 %v546
      %571 = vmatprep.subr.bf16.mxu0 0
      %572 = vmatpush1.bf16.msra.mxu0 0
      %573 = vmatprep.subr.bf16.mxu0 0
      %574 = vmatpush1.bf16.msra.mxu0 0
      %575 = vmatprep.subr.bf16.mxu0 0
      %576 = vmatpush1.bf16.msra.mxu0 0
      %577 = vmatprep.subr.bf16.mxu0 0
      %578 = vmatpush1.bf16.msra.mxu0 0
      %579 = vmatprep.subr.bf16.mxu0 0
      %580 = vmatpush1.bf16.msra.mxu0 0
      %581 = vmatprep.subr.bf16.mxu0 0
      %582 = vmatpush1.bf16.msra.mxu0 0
      %583 = vmatprep.subr.bf16.mxu0 0
      %584 = vmatpush1.bf16.msra.mxu0 0
      %585 = vmatprep.subr.bf16.mxu0 0
      %586 = vmatpush1.bf16.msra.mxu0 0
      %587 = vmatprep.mubr.bf16.mxu0 0
      %588 = vmatmul.mubr.bf16.gmra.mrb[0].mxu0 %v499
      %v589 = vpop.f32.mrb[0].mxu0
      %v590 = vadd.f32 %v505, %v589
      %v591 = vpop.f32.mrb[0].mxu0
      %v592 = vpop.f32.mrb[0].mxu0
      %v593 = vpop.f32.mrb[0].mxu0
      %594 = vdwg.mxu0
      %v596 = vlaneseq
      %v597 = vshrl.u32 %v596, 7
      %v598 = vsub.s32 0, %v597
      %v599 = vrot.slane %v462, %v598
      %v617 = vunpack.c.l.b16 %v446
      %v618 = vunpack.c.l.b16 %v447
      %v619 = vunpack.c.l.b16 %v448
      %v620 = vunpack.c.l.b16 %v449
      %v621 = vunpack.c.l.b16 %v450
      %v622 = vunpack.c.l.b16 %v451
      %v623 = vunpack.c.l.b16 %v452
      %v624 = vunpack.c.l.b16 %v453
      %v625 = vunpack.c.l.b16 %v454
      %v626 = vunpack.c.l.b16 %v455
      %v627 = vunpack.c.l.b16 %v456
      %v628 = vunpack.c.l.b16 %v457
      %v629 = vunpack.c.l.b16 %v458
      %v630 = vunpack.c.l.b16 %v459
      %v631 = vunpack.c.l.b16 %v460
      %v632 = vunpack.c.l.b16 %v461
      %v633 = vpack.c.b16 %v618, %v617
      %v634 = vpack.c.b16 %v620, %v619
      %v635 = vpack.c.b16 %v622, %v621
      %v636 = vpack.c.b16 %v624, %v623
      %v637 = vpack.c.b16 %v626, %v625
      %v638 = vpack.c.b16 %v628, %v627
      %v639 = vpack.c.b16 %v630, %v629
      %v640 = vpack.c.b16 %v632, %v631
      %649 = vmatprep.subr.bf16.mxu0 0
      %650 = vmatpush1.bf16.msra.mxu0 %v633
      %651 = vmatprep.subr.bf16.mxu0 0
      %652 = vmatpush1.bf16.msra.mxu0 %v634
      %653 = vmatprep.subr.bf16.mxu0 0
      %654 = vmatpush1.bf16.msra.mxu0 %v635
      %655 = vmatprep.subr.bf16.mxu0 0
      %656 = vmatpush1.bf16.msra.mxu0 %v636
      %657 = vmatprep.subr.bf16.mxu0 0
      %658 = vmatpush1.bf16.msra.mxu0 %v637
      %659 = vmatprep.subr.bf16.mxu0 0
      %660 = vmatpush1.bf16.msra.mxu0 %v638
      %661 = vmatprep.subr.bf16.mxu0 0
      %662 = vmatpush1.bf16.msra.mxu0 %v639
      %663 = vmatprep.subr.bf16.mxu0 0
      %664 = vmatpush1.bf16.msra.mxu0 %v640
      %665 = vmatprep.subr.bf16.mxu0 0
      %666 = vmatpush1.bf16.msra.mxu0 0
      %667 = vmatprep.subr.bf16.mxu0 0
      %668 = vmatpush1.bf16.msra.mxu0 0
      %669 = vmatprep.subr.bf16.mxu0 0
      %670 = vmatpush1.bf16.msra.mxu0 0
      %671 = vmatprep.subr.bf16.mxu0 0
      %672 = vmatpush1.bf16.msra.mxu0 0
      %673 = vmatprep.subr.bf16.mxu0 0
      %674 = vmatpush1.bf16.msra.mxu0 0
      %675 = vmatprep.subr.bf16.mxu0 0
      %676 = vmatpush1.bf16.msra.mxu0 0
      %677 = vmatprep.subr.bf16.mxu0 0
      %678 = vmatpush1.bf16.msra.mxu0 0
      %679 = vmatprep.subr.bf16.mxu0 0
      %680 = vmatpush1.bf16.msra.mxu0 0
      %681 = vmatprep.mubr.bf16.mxu0 0
      %682 = vmatmul.mubr.bf16.gmra.mrb[0].mxu0 %v500
      %v683 = vpop.f32.mrb[0].mxu0
      %v684 = vadd.f32 %v599, %v683
      %v685 = vpop.f32.mrb[0].mxu0
      %v686 = vpop.f32.mrb[0].mxu0
      %v687 = vpop.f32.mrb[0].mxu0
      %688 = vdwg.mxu0
      %v690 = vlaneseq
      %v691 = vshrl.u32 %v690, 7
      %v692 = vsub.s32 0, %v691
      %v693 = vrot.slane %v479, %v692
      %v711 = vunpack.c.l.b16 %v463
      %v712 = vunpack.c.l.b16 %v464
      %v713 = vunpack.c.l.b16 %v465
      %v714 = vunpack.c.l.b16 %v466
      %v715 = vunpack.c.l.b16 %v467
      %v716 = vunpack.c.l.b16 %v468
      %v717 = vunpack.c.l.b16 %v469
      %v718 = vunpack.c.l.b16 %v470
      %v719 = vunpack.c.l.b16 %v471
      %v720 = vunpack.c.l.b16 %v472
      %v721 = vunpack.c.l.b16 %v473
      %v722 = vunpack.c.l.b16 %v474
      %v723 = vunpack.c.l.b16 %v475
      %v724 = vunpack.c.l.b16 %v476
      %v725 = vunpack.c.l.b16 %v477
      %v726 = vunpack.c.l.b16 %v478
      %v727 = vpack.c.b16 %v712, %v711
      %v728 = vpack.c.b16 %v714, %v713
      %v729 = vpack.c.b16 %v716, %v715
      %v730 = vpack.c.b16 %v718, %v717
      %v731 = vpack.c.b16 %v720, %v719
      %v732 = vpack.c.b16 %v722, %v721
      %v733 = vpack.c.b16 %v724, %v723
      %v734 = vpack.c.b16 %v726, %v725
      %743 = vmatprep.subr.bf16.mxu0 0
      %744 = vmatpush1.bf16.msra.mxu0 %v727
      %745 = vmatprep.subr.bf16.mxu0 0
      %746 = vmatpush1.bf16.msra.mxu0 %v728
      %747 = vmatprep.subr.bf16.mxu0 0
      %748 = vmatpush1.bf16.msra.mxu0 %v729
      %749 = vmatprep.subr.bf16.mxu0 0
      %750 = vmatpush1.bf16.msra.mxu0 %v730
      %751 = vmatprep.subr.bf16.mxu0 0
      %752 = vmatpush1.bf16.msra.mxu0 %v731
      %753 = vmatprep.subr.bf16.mxu0 0
      %754 = vmatpush1.bf16.msra.mxu0 %v732
      %755 = vmatprep.subr.bf16.mxu0 0
      %756 = vmatpush1.bf16.msra.mxu0 %v733
      %757 = vmatprep.subr.bf16.mxu0 0
      %758 = vmatpush1.bf16.msra.mxu0 %v734
      %759 = vmatprep.subr.bf16.mxu0 0
      %760 = vmatpush1.bf16.msra.mxu0 0
      %761 = vmatprep.subr.bf16.mxu0 0
      %762 = vmatpush1.bf16.msra.mxu0 0
      %763 = vmatprep.subr.bf16.mxu0 0
      %764 = vmatpush1.bf16.msra.mxu0 0
      %765 = vmatprep.subr.bf16.mxu0 0
      %766 = vmatpush1.bf16.msra.mxu0 0
      %767 = vmatprep.subr.bf16.mxu0 0
      %768 = vmatpush1.bf16.msra.mxu0 0
      %769 = vmatprep.subr.bf16.mxu0 0
      %770 = vmatpush1.bf16.msra.mxu0 0
      %771 = vmatprep.subr.bf16.mxu0 0
      %772 = vmatpush1.bf16.msra.mxu0 0
      %773 = vmatprep.subr.bf16.mxu0 0
      %774 = vmatpush1.bf16.msra.mxu0 0
      %775 = vmatprep.mubr.bf16.mxu0 0
      %776 = vmatmul.mubr.bf16.gmra.mrb[0].mxu0 %v500
      %v777 = vpop.f32.mrb[0].mxu0
      %v778 = vadd.f32 %v693, %v777
      %v779 = vpop.f32.mrb[0].mxu0
      %v780 = vpop.f32.mrb[0].mxu0
      %v781 = vpop.f32.mrb[0].mxu0
      %782 = vdwg.mxu0
      %v783 = vpack.c.bf16 %v590, %v590
      %v784 = vpack.c.bf16 %v684, %v684
      %785 = vmatprep.subr.bf16.mxu0 0
      %786 = vmatpush1.bf16.xpose.msra.mxu0 %v784
      %787 = vmatprep.subr.bf16.mxu0 0
      %788 = vmatpush1.bf16.xpose.msra.mxu0 0
      %789 = vmatprep.subr.bf16.mxu0 0
      %790 = vmatpush1.bf16.xpose.msra.mxu0 0
      %791 = vmatprep.subr.bf16.mxu0 0
      %792 = vmatpush1.bf16.xpose.msra.mxu0 0
      %793 = vmatprep.subr.bf16.mxu0 0
      %794 = vmatpush1.bf16.xpose.msra.mxu0 0
      %795 = vmatprep.subr.bf16.mxu0 0
      %796 = vmatpush1.bf16.xpose.msra.mxu0 0
      %797 = vmatprep.subr.bf16.mxu0 0
      %798 = vmatpush1.bf16.xpose.msra.mxu0 0
      %799 = vmatprep.subr.bf16.mxu0 0
      %800 = vmatpush1.bf16.xpose.msra.mxu0 0
      %801 = vmatprep.subr.bf16.mxu0 0
      %802 = vmatpush1.bf16.xpose.msra.mxu0 0
      %803 = vmatprep.subr.bf16.mxu0 0
      %804 = vmatpush1.bf16.xpose.msra.mxu0 0
      %805 = vmatprep.subr.bf16.mxu0 0
      %806 = vmatpush1.bf16.xpose.msra.mxu0 0
      %807 = vmatprep.subr.bf16.mxu0 0
      %808 = vmatpush1.bf16.xpose.msra.mxu0 0
      %809 = vmatprep.subr.bf16.mxu0 0
      %810 = vmatpush1.bf16.xpose.msra.mxu0 0
      %811 = vmatprep.subr.bf16.mxu0 0
      %812 = vmatpush1.bf16.xpose.msra.mxu0 0
      %813 = vmatprep.subr.bf16.mxu0 0
      %814 = vmatpush1.bf16.xpose.msra.mxu0 0
      %815 = vmatprep.subr.bf16.mxu0 0
      %816 = vmatpush1.bf16.xpose.msra.mxu0 0
      %817 = vmatprep.mubr.bf16.mxu0 0
      %818 = vmatmul.mubr.bf16.gmra.mrb[0].mxu0 %v783
      %v819 = vpop.f32.mrb[0].mxu0
      %v820 = vadd.f32 0.0, %v819
      %v821 = vpop.f32.mrb[0].mxu0
      %v822 = vpop.f32.mrb[0].mxu0
      %v823 = vpop.f32.mrb[0].mxu0
      %824 = vdwg.mxu0
      %vm825 = vcmask 64512
      %v826 = vsel %vm825, %v820, -inf
      %827 = vmax.xlane.f32.xlu0 %v826
      %v828 = vpop.xlane.xlu0 %827
      %v829 = vsub.f32 %v820, %v828
      %v830 = vmul.f32 %v829, 1.442695
      %v831 = vpow.pop %v830
      %v832 = vsel %vm825, %v831, 0.0
      %833 = vadd.xlane.f32.xlu0 %v832
      %v834 = vpop.xlane.xlu0 %833
      %v835 = vpack.c.bf16 %v831, %v831
      %v836 = vpack.c.bf16 %v778, %v778
      %v838 = vsel %vm825, %v835, 0
      %vm840 = vcmask 1043456
      %v842 = vsel %vm840, %v836, 0
      %844 = vmatprep.subr.bf16.mxu0 0
      %845 = vmatpush1.bf16.msra.mxu0 %v842
      %846 = vmatprep.subr.bf16.mxu0 0
      %847 = vmatpush1.bf16.msra.mxu0 0
      %848 = vmatprep.subr.bf16.mxu0 0
      %849 = vmatpush1.bf16.msra.mxu0 0
      %850 = vmatprep.subr.bf16.mxu0 0
      %851 = vmatpush1.bf16.msra.mxu0 0
      %852 = vmatprep.subr.bf16.mxu0 0
      %853 = vmatpush1.bf16.msra.mxu0 0
      %854 = vmatprep.subr.bf16.mxu0 0
      %855 = vmatpush1.bf16.msra.mxu0 0
      %856 = vmatprep.subr.bf16.mxu0 0
      %857 = vmatpush1.bf16.msra.mxu0 0
      %858 = vmatprep.subr.bf16.mxu0 0
      %859 = vmatpush1.bf16.msra.mxu0 0
      %860 = vmatprep.subr.bf16.mxu0 0
      %861 = vmatpush1.bf16.msra.mxu0 0
      %862 = vmatprep.subr.bf16.mxu0 0
      %863 = vmatpush1.bf16.msra.mxu0 0
      %864 = vmatprep.subr.bf16.mxu0 0
      %865 = vmatpush1.bf16.msra.mxu0 0
      %866 = vmatprep.subr.bf16.mxu0 0
      %867 = vmatpush1.bf16.msra.mxu0 0
      %868 = vmatprep.subr.bf16.mxu0 0
      %869 = vmatpush1.bf16.msra.mxu0 0
      %870 = vmatprep.subr.bf16.mxu0 0
      %871 = vmatpush1.bf16.msra.mxu0 0
      %872 = vmatprep.subr.bf16.mxu0 0
      %873 = vmatpush1.bf16.msra.mxu0 0
      %874 = vmatprep.subr.bf16.mxu0 0
      %875 = vmatpush1.bf16.msra.mxu0 0
      %876 = vmatprep.mubr.bf16.mxu0 0
      %877 = vmatmul.mubr.bf16.gmra.mrb[0].mxu0 %v838
      %v878 = vpop.f32.mrb[0].mxu0
      %v879 = vadd.f32 0.0, %v878
      %v880 = vpop.f32.mrb[0].mxu0
      %v881 = vpop.f32.mrb[0].mxu0
      %v882 = vpop.f32.mrb[0].mxu0
      %883 = vdwg.mxu0
      %v884 = vrcp.pop %v834
      %v885 = vmul.f32 %v879, %v884
      %v886 = vpack.c.bf16 %v885, %v885
      %v888 = vlaneseq
      %v889 = vshrl.u32 %v888, 7
      %v890 = vsub.s32 0, %v889
      %v891 = vrot.slane %v496, %v890
      %v909 = vunpack.c.l.b16 %v480
      %v910 = vunpack.c.l.b16 %v481
      %v911 = vunpack.c.l.b16 %v482
      %v912 = vunpack.c.l.b16 %v483
      %v913 = vunpack.c.l.b16 %v484
      %v914 = vunpack.c.l.b16 %v485
      %v915 = vunpack.c.l.b16 %v486
      %v916 = vunpack.c.l.b16 %v487
      %v917 = vunpack.c.l.b16 %v488
      %v918 = vunpack.c.l.b16 %v489
      %v919 = vunpack.c.l.b16 %v490
      %v920 = vunpack.c.l.b16 %v491
      %v921 = vunpack.c.l.b16 %v492
      %v922 = vunpack.c.l.b16 %v493
      %v923 = vunpack.c.l.b16 %v494
      %v924 = vunpack.c.l.b16 %v495
      %v925 = vpack.c.b16 %v910, %v909
      %v926 = vpack.c.b16 %v912, %v911
      %v927 = vpack.c.b16 %v914, %v913
      %v928 = vpack.c.b16 %v916, %v915
      %v929 = vpack.c.b16 %v918, %v917
      %v930 = vpack.c.b16 %v920, %v919
      %v931 = vpack.c.b16 %v922, %v921
      %v932 = vpack.c.b16 %v924, %v923
      %941 = vmatprep.subr.bf16.mxu0 0
      %942 = vmatpush1.bf16.msra.mxu0 %v925
      %943 = vmatprep.subr.bf16.mxu0 0
      %944 = vmatpush1.bf16.msra.mxu0 %v926
      %945 = vmatprep.subr.bf16.mxu0 0
      %946 = vmatpush1.bf16.msra.mxu0 %v927
      %947 = vmatprep.subr.bf16.mxu0 0
      %948 = vmatpush1.bf16.msra.mxu0 %v928
      %949 = vmatprep.subr.bf16.mxu0 0
      %950 = vmatpush1.bf16.msra.mxu0 %v929
      %951 = vmatprep.subr.bf16.mxu0 0
      %952 = vmatpush1.bf16.msra.mxu0 %v930
      %953 = vmatprep.subr.bf16.mxu0 0
      %954 = vmatpush1.bf16.msra.mxu0 %v931
      %955 = vmatprep.subr.bf16.mxu0 0
      %956 = vmatpush1.bf16.msra.mxu0 %v932
      %957 = vmatprep.subr.bf16.mxu0 0
      %958 = vmatpush1.bf16.msra.mxu0 0
      %959 = vmatprep.subr.bf16.mxu0 0
      %960 = vmatpush1.bf16.msra.mxu0 0
      %961 = vmatprep.subr.bf16.mxu0 0
      %962 = vmatpush1.bf16.msra.mxu0 0
      %963 = vmatprep.subr.bf16.mxu0 0
      %964 = vmatpush1.bf16.msra.mxu0 0
      %965 = vmatprep.subr.bf16.mxu0 0
      %966 = vmatpush1.bf16.msra.mxu0 0
      %967 = vmatprep.subr.bf16.mxu0 0
      %968 = vmatpush1.bf16.msra.mxu0 0
      %969 = vmatprep.subr.bf16.mxu0 0
      %970 = vmatpush1.bf16.msra.mxu0 0
      %971 = vmatprep.subr.bf16.mxu0 0
      %972 = vmatpush1.bf16.msra.mxu0 0
      %973 = vmatprep.mubr.bf16.mxu0 0
      %974 = vmatmul.mubr.bf16.gmra.mrb[0].mxu0 %v886
      %v975 = vpop.f32.mrb[0].mxu0
      %v976 = vadd.f32 %v891, %v975
      %v977 = vpop.f32.mrb[0].mxu0
      %v978 = vpop.f32.mrb[0].mxu0
      %v979 = vpop.f32.mrb[0].mxu0
      %980 = vdwg.mxu0
      %v981 = vadd.f32 %v976, %v427
      %982 = vadd.xlane.f32.xlu0 %v981
      %v983 = vpop.xlane.xlu0 %982
      %v984 = vrcp.pop 128.0
      %v985 = vmul.f32 %v983, %v984
      %v986 = vsub.f32 %v981, %v985
      %v987 = vmul.f32 %v986, %v986
      %988 = vadd.xlane.f32.xlu0 %v987
      %v989 = vpop.xlane.xlu0 %988
      %v990 = vmul.f32 %v989, %v984
      %v991 = vadd.f32 %v990, 1e-05
      %v992 = vrsqrt.pop %v991
      %v993 = vmul.f32 %v986, %v992
      %v995 = vlaneseq
      %v996 = vshrl.u32 %v995, 7
      %v997 = vsub.s32 0, %v996
      %v998 = vrot.slane %v497, %v997
      %v1000 = vmul.f32 %v993, %v998
      %v1002 = vlaneseq
      %v1003 = vshrl.u32 %v1002, 7
      %v1004 = vsub.s32 0, %v1003
      %v1005 = vrot.slane %v498, %v1004
      %v1007 = vadd.f32 %v1000, %v1005
      %1008 = vst [vmem:[%s425] sm:$0xff] %v1007
      %p1009 = scmp.lt.s32.totalorder %s23, 1
      %s1010 = scalar_select %p1009, %s23, 1
      %s1011 = smul.addr %s1010, 8
      %s1012 = scalar_lea.vmem %s12, %s1011
      // Predicated region
      $region69: #{transformer_forward.16} parent=67 // pred_check
        %p1013 = pneg %p303
      $region70: #{transformer_forward.16} parent=67 // pred_check_branch
        %1015 = sbr.rel (%p1013) target = $region72
      $region71: #{transformer_forward.16} parent=67 // pred_region
        _
      $region72: #{transformer_forward.16} parent=67 // pred_fallthru
        _
    $region68: #{transformer_forward.16} parent=5 // pred_fallthru
      _
    %p1016 = scmp.le.s32.totalorder 2, %s18
    // Predicated region
    $region73: #{transformer_forward.16} parent=5 // pred_check
      %p1017 = pneg %p1016
    $region74: #{transformer_forward.16} parent=5 // pred_check_branch
      %1019 = sbr.rel (%p1017) target = $region76
    $region75: #{transformer_forward.16} parent=5 // pred_region
      %s1020 = ssub.s32 %s18, 2
      // Predicated region
      $region77: #{transformer_forward.16} parent=75 // pred_check
        %p1021 = pneg %p309
      $region78: #{transformer_forward.16} parent=75 // pred_check_branch
        %1023 = sbr.rel (%p1021) target = $region80
      $region79: #{transformer_forward.16} parent=75 // pred_region
        %p1024 = scmp.lt.s32.totalorder %s24, 1
        %s1025 = scalar_select %p1024, %s24, 1
        %s1026 = smul.addr %s1025, 8
        %s1027 = scalar_lea.vmem %s12, %s1026
      $region80: #{transformer_forward.16} parent=75 // pred_fallthru
        _
    $region76: #{transformer_forward.16} parent=5 // pred_fallthru
      _
  $region6: #{transformer_forward.16} parent=0 // loop_footer
    %s22 = sadd.s32 1, %s18
  $region7: #{transformer_forward.16} parent=0 // loop_footer_branch
    %17 = sbr.rel target = $region3
  $region8: #{transformer_forward.16} parent=0 // loop_exit
    _

</llo_original>
